<compile_context>
chip_gen: v6e
topology: v6e:2x2x1
jax: 0.10.0
libtpu: 0.0.40
codegen_flags: <defaults>
</compile_context>

<pallas_src>
import functools

import jax
import jax.numpy as jnp
from jax.experimental import pallas as pl
from jax.experimental.pallas import tpu as pltpu

# Layer widths of the autoencoder (encoder then decoder).
DIMS = [28 * 28, 128, 64, 12, 3, 12, 64, 128, 28 * 28]
N_LAYERS = len(DIMS) - 1      # 8 linear layers
LATENT = DIMS[4]              # 3
LATENT_PAD = 8                # zero-padded latent width for the encoded output block


def autoencoder_kernel(x_ref, *refs):
    """Full encoder+decoder chain on one batch tile, entirely in VMEM."""
    w = refs[0:N_LAYERS]
    b = refs[N_LAYERS:2 * N_LAYERS]
    enc_ref = refs[2 * N_LAYERS]
    dec_ref = refs[2 * N_LAYERS + 1]

    # Layer 0 (784 -> 128): cast x to bf16 in-kernel (hides under the DMA), MXU dot,
    # f32 accumulation, f32 bias + ReLU.
    h = jnp.dot(x_ref[...].astype(jnp.bfloat16), w[0][...],
                preferred_element_type=jnp.float32)
    h = jnp.maximum(h + b[0][...], 0.0)

    # Encoder layers 1-2 (128 -> 64 -> 12): bf16 operands, f32 accumulation.
    for i in (1, 2):
        h = jnp.dot(h.astype(jnp.bfloat16), w[i][...],
                    preferred_element_type=jnp.float32)
        h = jnp.maximum(h + b[i][...], 0.0)

    # Encoder layer 3 (12 -> LATENT_PAD): only the first 3 output columns are real,
    # the rest are exactly zero (zero-padded weights/bias), so the decoder sees an
    # exact zero-padded latent.
    enc = jnp.dot(h.astype(jnp.bfloat16), w[3][...],
                  preferred_element_type=jnp.float32) + b[3][...]
    enc_ref[...] = enc

    # Decoder layers 4-6 (LATENT_PAD -> 12 -> 64 -> 128).  Rows 3..LATENT_PAD-1 of
    # w[4] are zero, so this equals the original 3-wide matmul exactly.
    h = enc
    for i in (4, 5, 6):
        h = jnp.dot(h.astype(jnp.bfloat16), w[i][...],
                    preferred_element_type=jnp.float32)
        h = jnp.maximum(h + b[i][...], 0.0)

    # Decoder layer 7 (128 -> 784): bf16 MXU dot, f32 bias + sigmoid (EUP) epilogue.
    z = jnp.dot(h.astype(jnp.bfloat16), w[7][...],
                preferred_element_type=jnp.float32) + b[7][...]
    dec_ref[...] = jax.nn.sigmoid(z)


def prepare_params(weights, biases):
    """One-time prep (call OUTSIDE the jitted forward): pad the 3-wide latent to
    LATENT_PAD lanes and cast all weights to bf16 (f32 biases)."""
    w = [jnp.asarray(wi, jnp.float32) for wi in weights]
    b = [jnp.asarray(bi, jnp.float32).reshape(1, -1) for bi in biases]
    # Zero-padded latent: pad output columns of layer 3 and input rows of layer 4.
    w[3] = jnp.pad(w[3], ((0, 0), (0, LATENT_PAD - LATENT)))
    b[3] = jnp.pad(b[3], ((0, 0), (0, LATENT_PAD - LATENT)))
    w[4] = jnp.pad(w[4], ((0, LATENT_PAD - LATENT), (0, 0)))
    # bf16 weights everywhere: MXU-native, halves resident weight bytes; v5e has no
    # native f32 MXU path so this also avoids f32-dot decomposition there.
    w = [wi.astype(jnp.bfloat16) for wi in w]
    return [jax.device_put(wi) for wi in w], [jax.device_put(bi) for bi in b]


@functools.partial(jax.jit, static_argnames=("batch_tile",))
def autoencoder_forward(x, w, b, *, batch_tile=512):
    """Fused forward pass.  `w`, `b` must come from prepare_params().
    Returns (encoded (B, 3) f32, decoded (B, 784) f32)."""
    B, D_in = x.shape
    assert D_in == DIMS[0]

    # Effective tile: never larger than the batch (block == full dim is legal).
    # Ragged last blocks are handled by Pallas (masked writes); no jnp.pad copy of x.
    tile = min(batch_tile, B)
    n_tiles = pl.cdiv(B, tile)

    # x / outputs tiled over batch; weights & biases resident (constant index map).
    x_spec = pl.BlockSpec((tile, D_in), lambda i: (i, 0))
    w_specs = [pl.BlockSpec(wi.shape, lambda i: (0, 0)) for wi in w]
    b_specs = [pl.BlockSpec(bi.shape, lambda i: (0, 0)) for bi in b]
    enc_spec = pl.BlockSpec((tile, LATENT_PAD), lambda i: (i, 0))
    dec_spec = pl.BlockSpec((tile, DIMS[-1]), lambda i: (i, 0))

    out_shape = (
        jax.ShapeDtypeStruct((B, LATENT_PAD), jnp.float32),  # padded encoded
        jax.ShapeDtypeStruct((B, DIMS[-1]), jnp.float32),     # decoded
    )

    flops_per_row = 2 * sum(DIMS[i] * DIMS[i + 1] for i in range(N_LAYERS))
    cost = pl.CostEstimate(
        flops=int(B) * int(flops_per_row),
        transcendentals=int(B) * DIMS[-1],
        bytes_accessed=int(
            B * DIMS[0] * 4 + B * DIMS[-1] * 4 + B * LATENT_PAD * 4
            + sum(int(wi.size) * 2 for wi in w)
            + sum(int(bi.size) * 4 for bi in b)),
    )

    enc_p, dec_p = pl.pallas_call(
        autoencoder_kernel,
        grid=(n_tiles,),
        in_specs=[x_spec] + w_specs + b_specs,
        out_specs=(enc_spec, dec_spec),
        out_shape=out_shape,
        compiler_params=pltpu.CompilerParams(
            dimension_semantics=("parallel",),
            vmem_limit_bytes=48 * 1024 * 1024),
        cost_estimate=cost,
    )(x, *w, *b)

    return enc_p[:, :LATENT], dec_p


def init_params(key):
    """Deterministic PyTorch-style init: U(-1/sqrt(fan_in), 1/sqrt(fan_in))."""
    weights, biases = [], []
    for li in range(N_LAYERS):
        fan_in, fan_out = DIMS[li], DIMS[li + 1]
        key, kw, kb = jax.random.split(key, 3)
        bound = 1.0 / jnp.sqrt(jnp.float32(fan_in))
        weights.append(jax.random.uniform(kw, (fan_in, fan_out), jnp.float32, -bound, bound))
        biases.append(jax.random.uniform(kb, (1, fan_out), jnp.float32, -bound, bound))
    return weights, biases


def reference_forward(x, weights, biases, *, use_bf16=True):
    """Pure-JAX reference.  use_bf16=True matches the kernel's precision choices;
    use_bf16=False is the exact f32 PyTorch spec."""
    cast = (lambda a: a.astype(jnp.bfloat16)) if use_bf16 else (lambda a: a)
    b = [jnp.asarray(bi, jnp.float32).reshape(1, -1) for bi in biases]
    h = x
    for i in (0, 1, 2):
        h = jnp.dot(cast(h), cast(weights[i]), preferred_element_type=jnp.float32)
        h = jnp.maximum(h + b[i], 0.0)
    enc = jnp.dot(cast(h), cast(weights[3]), preferred_element_type=jnp.float32) + b[3]
    h = enc
    for i in (4, 5, 6):
        h = jnp.dot(cast(h), cast(weights[i]), preferred_element_type=jnp.float32)
        h = jnp.maximum(h + b[i], 0.0)
    z = jnp.dot(cast(h), cast(weights[7]), preferred_element_type=jnp.float32) + b[7]
    return enc, jax.nn.sigmoid(z)


if __name__ == "__main__":
    root = jax.random.PRNGKey(0)
    param_key, data_key = jax.random.split(root)
    weights, biases = init_params(param_key)
    w, b = prepare_params(weights, biases)   # hoisted: done once, outside jit

    # (batch, tile): 2-step even grid (pipelining + v7x megacore), a tiny batch
    # (tile shrinks to the full batch), and a ragged last block.
    for B, bt in ((512, 256), (4, 256), (300, 128)):
        x = jax.random.uniform(jax.random.fold_in(data_key, B), (B, DIMS[0]), jnp.float32)

        enc, dec = autoencoder_forward(x, w, b, batch_tile=bt)
        enc = jax.block_until_ready(enc)
        dec = jax.block_until_ready(dec)
        assert enc.shape == (B, LATENT) and dec.shape == (B, DIMS[0])

        # Precision-matched (bf16-dot) reference: tight tolerance.
        enc_ref, dec_ref = reference_forward(x, weights, biases, use_bf16=True)
        assert jnp.allclose(enc, enc_ref, atol=5e-3, rtol=5e-3), "encoded mismatch (bf16 ref)"
        assert jnp.allclose(dec, dec_ref, atol=5e-3, rtol=5e-3), "decoded mismatch (bf16 ref)"

        # Pure-f32 PyTorch spec reference: loose tolerance (bf16 MXU drift).
        enc_f32, dec_f32 = reference_forward(x, weights, biases, use_bf16=False)
        assert jnp.allclose(enc, enc_f32, atol=5e-2, rtol=5e-2), "encoded mismatch (f32 ref)"
        assert jnp.allclose(dec, dec_f32, atol=5e-2, rtol=5e-2), "decoded mismatch (f32 ref)"

    print("KERNEL_OK")
</pallas_src>

<mosaic_0001>
module attributes {stable_mosaic.version = 11 : i64} {
  func.func @autoencoder_kernel(%arg0: i32, %arg1: memref<256x784xf32, #tpu.memory_space<vmem>>, %arg2: memref<784x128xbf16, #tpu.memory_space<vmem>>, %arg3: memref<128x64xbf16, #tpu.memory_space<vmem>>, %arg4: memref<64x12xbf16, #tpu.memory_space<vmem>>, %arg5: memref<12x8xbf16, #tpu.memory_space<vmem>>, %arg6: memref<8x12xbf16, #tpu.memory_space<vmem>>, %arg7: memref<12x64xbf16, #tpu.memory_space<vmem>>, %arg8: memref<64x128xbf16, #tpu.memory_space<vmem>>, %arg9: memref<128x784xbf16, #tpu.memory_space<vmem>>, %arg10: memref<1x128xf32, #tpu.memory_space<vmem>>, %arg11: memref<1x64xf32, #tpu.memory_space<vmem>>, %arg12: memref<1x12xf32, #tpu.memory_space<vmem>>, %arg13: memref<1x8xf32, #tpu.memory_space<vmem>>, %arg14: memref<1x12xf32, #tpu.memory_space<vmem>>, %arg15: memref<1x64xf32, #tpu.memory_space<vmem>>, %arg16: memref<1x128xf32, #tpu.memory_space<vmem>>, %arg17: memref<1x784xf32, #tpu.memory_space<vmem>>, %arg18: memref<256x8xf32, #tpu.memory_space<vmem>>, %arg19: memref<256x784xf32, #tpu.memory_space<vmem>>) attributes {dimension_semantics = [#tpu.dimension_semantics<parallel>], iteration_bounds = array<i64: 2>, scalar_prefetch = 0 : i64, scratch_operands = 0 : i64, tpu.core_type = #tpu.core_type<tc>, window_params = [{transform_indices = @transform_0, window_bounds = array<i64: 256, 784>}, {pipeline_mode = #tpu.pipeline_mode<synchronous>, transform_indices = @transform_1, window_bounds = array<i64: 784, 128>}, {pipeline_mode = #tpu.pipeline_mode<synchronous>, transform_indices = @transform_2, window_bounds = array<i64: 128, 64>}, {pipeline_mode = #tpu.pipeline_mode<synchronous>, transform_indices = @transform_3, window_bounds = array<i64: 64, 12>}, {pipeline_mode = #tpu.pipeline_mode<synchronous>, transform_indices = @transform_4, window_bounds = array<i64: 12, 8>}, {pipeline_mode = #tpu.pipeline_mode<synchronous>, transform_indices = @transform_5, window_bounds = array<i64: 8, 12>}, {pipeline_mode = #tpu.pipeline_mode<synchronous>, transform_indices = @transform_6, window_bounds = array<i64: 12, 64>}, {pipeline_mode = #tpu.pipeline_mode<synchronous>, transform_indices = @transform_7, window_bounds = array<i64: 64, 128>}, {pipeline_mode = #tpu.pipeline_mode<synchronous>, transform_indices = @transform_8, window_bounds = array<i64: 128, 784>}, {pipeline_mode = #tpu.pipeline_mode<synchronous>, transform_indices = @transform_9, window_bounds = array<i64: 1, 128>}, {pipeline_mode = #tpu.pipeline_mode<synchronous>, transform_indices = @transform_10, window_bounds = array<i64: 1, 64>}, {pipeline_mode = #tpu.pipeline_mode<synchronous>, transform_indices = @transform_11, window_bounds = array<i64: 1, 12>}, {pipeline_mode = #tpu.pipeline_mode<synchronous>, transform_indices = @transform_12, window_bounds = array<i64: 1, 8>}, {pipeline_mode = #tpu.pipeline_mode<synchronous>, transform_indices = @transform_13, window_bounds = array<i64: 1, 12>}, {pipeline_mode = #tpu.pipeline_mode<synchronous>, transform_indices = @transform_14, window_bounds = array<i64: 1, 64>}, {pipeline_mode = #tpu.pipeline_mode<synchronous>, transform_indices = @transform_15, window_bounds = array<i64: 1, 128>}, {pipeline_mode = #tpu.pipeline_mode<synchronous>, transform_indices = @transform_16, window_bounds = array<i64: 1, 784>}, {transform_indices = @transform_17, window_bounds = array<i64: 256, 8>}, {transform_indices = @transform_18, window_bounds = array<i64: 256, 784>}]} {
    %c0 = arith.constant 0 : index
    %c0_0 = arith.constant 0 : index
    %0 = vector.load %arg1[%c0, %c0_0] : memref<256x784xf32, #tpu.memory_space<vmem>>, vector<256x784xf32>
    %1 = arith.truncf %0 : vector<256x784xf32> to vector<256x784xbf16>
    %c0_1 = arith.constant 0 : index
    %c0_2 = arith.constant 0 : index
    %2 = vector.load %arg2[%c0_1, %c0_2] : memref<784x128xbf16, #tpu.memory_space<vmem>>, vector<784x128xbf16>
    %cst = arith.constant dense<0.000000e+00> : vector<256x128xf32>
    %3 = tpu.matmul %1, %2, %cst {dimension_numbers = #tpu.dot_dimension_numbers<[1], [0], [0], [1], [0, 0, 1, 1], [], []>} : vector<256x784xbf16>, vector<784x128xbf16>, vector<256x128xf32> -> vector<256x128xf32>
    %c0_3 = arith.constant 0 : index
    %c0_4 = arith.constant 0 : index
    %4 = vector.load %arg10[%c0_3, %c0_4] : memref<1x128xf32, #tpu.memory_space<vmem>>, vector<1x128xf32>
    %5 = vector.broadcast %4 : vector<1x128xf32> to vector<256x128xf32>
    %6 = arith.addf %3, %5 : vector<256x128xf32>
    %cst_5 = arith.constant 0.000000e+00 : f32
    %7 = vector.broadcast %cst_5 : f32 to vector<256x128xf32>
    %8 = arith.maximumf %6, %7 : vector<256x128xf32>
    %9 = arith.truncf %8 : vector<256x128xf32> to vector<256x128xbf16>
    %c0_6 = arith.constant 0 : index
    %c0_7 = arith.constant 0 : index
    %10 = vector.load %arg3[%c0_6, %c0_7] : memref<128x64xbf16, #tpu.memory_space<vmem>>, vector<128x64xbf16>
    %cst_8 = arith.constant dense<0.000000e+00> : vector<256x64xf32>
    %11 = tpu.matmul %9, %10, %cst_8 {dimension_numbers = #tpu.dot_dimension_numbers<[1], [0], [0], [1], [0, 0, 1, 1], [], []>} : vector<256x128xbf16>, vector<128x64xbf16>, vector<256x64xf32> -> vector<256x64xf32>
    %c0_9 = arith.constant 0 : index
    %c0_10 = arith.constant 0 : index
    %12 = vector.load %arg11[%c0_9, %c0_10] : memref<1x64xf32, #tpu.memory_space<vmem>>, vector<1x64xf32>
    %13 = vector.broadcast %12 : vector<1x64xf32> to vector<256x64xf32>
    %14 = arith.addf %11, %13 : vector<256x64xf32>
    %cst_11 = arith.constant 0.000000e+00 : f32
    %15 = vector.broadcast %cst_11 : f32 to vector<256x64xf32>
    %16 = arith.maximumf %14, %15 : vector<256x64xf32>
    %17 = arith.truncf %16 : vector<256x64xf32> to vector<256x64xbf16>
    %c0_12 = arith.constant 0 : index
    %c0_13 = arith.constant 0 : index
    %18 = vector.load %arg4[%c0_12, %c0_13] : memref<64x12xbf16, #tpu.memory_space<vmem>>, vector<64x12xbf16>
    %cst_14 = arith.constant dense<0.000000e+00> : vector<256x12xf32>
    %19 = tpu.matmul %17, %18, %cst_14 {dimension_numbers = #tpu.dot_dimension_numbers<[1], [0], [0], [1], [0, 0, 1, 1], [], []>} : vector<256x64xbf16>, vector<64x12xbf16>, vector<256x12xf32> -> vector<256x12xf32>
    %c0_15 = arith.constant 0 : index
    %c0_16 = arith.constant 0 : index
    %20 = vector.load %arg12[%c0_15, %c0_16] : memref<1x12xf32, #tpu.memory_space<vmem>>, vector<1x12xf32>
    %21 = vector.broadcast %20 : vector<1x12xf32> to vector<256x12xf32>
    %22 = arith.addf %19, %21 : vector<256x12xf32>
    %cst_17 = arith.constant 0.000000e+00 : f32
    %23 = vector.broadcast %cst_17 : f32 to vector<256x12xf32>
    %24 = arith.maximumf %22, %23 : vector<256x12xf32>
    %25 = arith.truncf %24 : vector<256x12xf32> to vector<256x12xbf16>
    %c0_18 = arith.constant 0 : index
    %c0_19 = arith.constant 0 : index
    %26 = vector.load %arg5[%c0_18, %c0_19] : memref<12x8xbf16, #tpu.memory_space<vmem>>, vector<12x8xbf16>
    %cst_20 = arith.constant dense<0.000000e+00> : vector<256x8xf32>
    %27 = tpu.matmul %25, %26, %cst_20 {dimension_numbers = #tpu.dot_dimension_numbers<[1], [0], [0], [1], [0, 0, 1, 1], [], []>} : vector<256x12xbf16>, vector<12x8xbf16>, vector<256x8xf32> -> vector<256x8xf32>
    %c0_21 = arith.constant 0 : index
    %c0_22 = arith.constant 0 : index
    %28 = vector.load %arg13[%c0_21, %c0_22] : memref<1x8xf32, #tpu.memory_space<vmem>>, vector<1x8xf32>
    %29 = vector.broadcast %28 : vector<1x8xf32> to vector<256x8xf32>
    %30 = arith.addf %27, %29 : vector<256x8xf32>
    %c0_23 = arith.constant 0 : index
    %c0_24 = arith.constant 0 : index
    %31 = vector.load %arg18[%c0_23, %c0_24] : memref<256x8xf32, #tpu.memory_space<vmem>>, vector<256x8xf32>
    tpu.vector_store %arg18[%c0_23, %c0_24], %30 {strides = array<i32>} : memref<256x8xf32, #tpu.memory_space<vmem>>, vector<256x8xf32>,
    %32 = arith.truncf %30 : vector<256x8xf32> to vector<256x8xbf16>
    %c0_25 = arith.constant 0 : index
    %c0_26 = arith.constant 0 : index
    %33 = vector.load %arg6[%c0_25, %c0_26] : memref<8x12xbf16, #tpu.memory_space<vmem>>, vector<8x12xbf16>
    %cst_27 = arith.constant dense<0.000000e+00> : vector<256x12xf32>
    %34 = tpu.matmul %32, %33, %cst_27 {dimension_numbers = #tpu.dot_dimension_numbers<[1], [0], [0], [1], [0, 0, 1, 1], [], []>} : vector<256x8xbf16>, vector<8x12xbf16>, vector<256x12xf32> -> vector<256x12xf32>
    %c0_28 = arith.constant 0 : index
    %c0_29 = arith.constant 0 : index
    %35 = vector.load %arg14[%c0_28, %c0_29] : memref<1x12xf32, #tpu.memory_space<vmem>>, vector<1x12xf32>
    %36 = vector.broadcast %35 : vector<1x12xf32> to vector<256x12xf32>
    %37 = arith.addf %34, %36 : vector<256x12xf32>
    %cst_30 = arith.constant 0.000000e+00 : f32
    %38 = vector.broadcast %cst_30 : f32 to vector<256x12xf32>
    %39 = arith.maximumf %37, %38 : vector<256x12xf32>
    %40 = arith.truncf %39 : vector<256x12xf32> to vector<256x12xbf16>
    %c0_31 = arith.constant 0 : index
    %c0_32 = arith.constant 0 : index
    %41 = vector.load %arg7[%c0_31, %c0_32] : memref<12x64xbf16, #tpu.memory_space<vmem>>, vector<12x64xbf16>
    %cst_33 = arith.constant dense<0.000000e+00> : vector<256x64xf32>
    %42 = tpu.matmul %40, %41, %cst_33 {dimension_numbers = #tpu.dot_dimension_numbers<[1], [0], [0], [1], [0, 0, 1, 1], [], []>} : vector<256x12xbf16>, vector<12x64xbf16>, vector<256x64xf32> -> vector<256x64xf32>
    %c0_34 = arith.constant 0 : index
    %c0_35 = arith.constant 0 : index
    %43 = vector.load %arg15[%c0_34, %c0_35] : memref<1x64xf32, #tpu.memory_space<vmem>>, vector<1x64xf32>
    %44 = vector.broadcast %43 : vector<1x64xf32> to vector<256x64xf32>
    %45 = arith.addf %42, %44 : vector<256x64xf32>
    %cst_36 = arith.constant 0.000000e+00 : f32
    %46 = vector.broadcast %cst_36 : f32 to vector<256x64xf32>
    %47 = arith.maximumf %45, %46 : vector<256x64xf32>
    %48 = arith.truncf %47 : vector<256x64xf32> to vector<256x64xbf16>
    %c0_37 = arith.constant 0 : index
    %c0_38 = arith.constant 0 : index
    %49 = vector.load %arg8[%c0_37, %c0_38] : memref<64x128xbf16, #tpu.memory_space<vmem>>, vector<64x128xbf16>
    %cst_39 = arith.constant dense<0.000000e+00> : vector<256x128xf32>
    %50 = tpu.matmul %48, %49, %cst_39 {dimension_numbers = #tpu.dot_dimension_numbers<[1], [0], [0], [1], [0, 0, 1, 1], [], []>} : vector<256x64xbf16>, vector<64x128xbf16>, vector<256x128xf32> -> vector<256x128xf32>
    %c0_40 = arith.constant 0 : index
    %c0_41 = arith.constant 0 : index
    %51 = vector.load %arg16[%c0_40, %c0_41] : memref<1x128xf32, #tpu.memory_space<vmem>>, vector<1x128xf32>
    %52 = vector.broadcast %51 : vector<1x128xf32> to vector<256x128xf32>
    %53 = arith.addf %50, %52 : vector<256x128xf32>
    %cst_42 = arith.constant 0.000000e+00 : f32
    %54 = vector.broadcast %cst_42 : f32 to vector<256x128xf32>
    %55 = arith.maximumf %53, %54 : vector<256x128xf32>
    %56 = arith.truncf %55 : vector<256x128xf32> to vector<256x128xbf16>
    %c0_43 = arith.constant 0 : index
    %c0_44 = arith.constant 0 : index
    %57 = vector.load %arg9[%c0_43, %c0_44] : memref<128x784xbf16, #tpu.memory_space<vmem>>, vector<128x784xbf16>
    %cst_45 = arith.constant dense<0.000000e+00> : vector<256x784xf32>
    %58 = tpu.matmul %56, %57, %cst_45 {dimension_numbers = #tpu.dot_dimension_numbers<[1], [0], [0], [1], [0, 0, 1, 1], [], []>} : vector<256x128xbf16>, vector<128x784xbf16>, vector<256x784xf32> -> vector<256x784xf32>
    %c0_46 = arith.constant 0 : index
    %c0_47 = arith.constant 0 : index
    %59 = vector.load %arg17[%c0_46, %c0_47] : memref<1x784xf32, #tpu.memory_space<vmem>>, vector<1x784xf32>
    %60 = vector.broadcast %59 : vector<1x784xf32> to vector<256x784xf32>
    %61 = arith.addf %58, %60 : vector<256x784xf32>
    %62 = arith.negf %61 : vector<256x784xf32>
    %63 = math.exp %62 : vector<256x784xf32>
    %cst_48 = arith.constant 1.000000e+00 : f32
    %64 = vector.broadcast %cst_48 : f32 to vector<256x784xf32>
    %65 = arith.addf %64, %63 : vector<256x784xf32>
    %66 = arith.divf %64, %65 : vector<256x784xf32>
    %c0_49 = arith.constant 0 : index
    %c0_50 = arith.constant 0 : index
    %67 = vector.load %arg19[%c0_49, %c0_50] : memref<256x784xf32, #tpu.memory_space<vmem>>, vector<256x784xf32>
    tpu.vector_store %arg19[%c0_49, %c0_50], %66 {strides = array<i32>} : memref<256x784xf32, #tpu.memory_space<vmem>>, vector<256x784xf32>,
    return
  }
  func.func @transform_0(%arg0: i32) -> (i32, i32) {
    %c0_i32 = arith.constant 0 : i32
    %c0_i32_0 = arith.constant 0 : i32
    return %arg0, %c0_i32 : i32, i32
  }
  func.func @transform_1(%arg0: i32) -> (i32, i32) {
    %c0_i32 = arith.constant 0 : i32
    %c0_i32_0 = arith.constant 0 : i32
    %c0_i32_1 = arith.constant 0 : i32
    return %c0_i32, %c0_i32_0 : i32, i32
  }
  func.func @transform_2(%arg0: i32) -> (i32, i32) {
    %c0_i32 = arith.constant 0 : i32
    %c0_i32_0 = arith.constant 0 : i32
    %c0_i32_1 = arith.constant 0 : i32
    return %c0_i32, %c0_i32_0 : i32, i32
  }
  func.func @transform_3(%arg0: i32) -> (i32, i32) {
    %c0_i32 = arith.constant 0 : i32
    %c0_i32_0 = arith.constant 0 : i32
    %c0_i32_1 = arith.constant 0 : i32
    return %c0_i32, %c0_i32_0 : i32, i32
  }
  func.func @transform_4(%arg0: i32) -> (i32, i32) {
    %c0_i32 = arith.constant 0 : i32
    %c0_i32_0 = arith.constant 0 : i32
    %c0_i32_1 = arith.constant 0 : i32
    return %c0_i32, %c0_i32_0 : i32, i32
  }
  func.func @transform_5(%arg0: i32) -> (i32, i32) {
    %c0_i32 = arith.constant 0 : i32
    %c0_i32_0 = arith.constant 0 : i32
    %c0_i32_1 = arith.constant 0 : i32
    return %c0_i32, %c0_i32_0 : i32, i32
  }
  func.func @transform_6(%arg0: i32) -> (i32, i32) {
    %c0_i32 = arith.constant 0 : i32
    %c0_i32_0 = arith.constant 0 : i32
    %c0_i32_1 = arith.constant 0 : i32
    return %c0_i32, %c0_i32_0 : i32, i32
  }
  func.func @transform_7(%arg0: i32) -> (i32, i32) {
    %c0_i32 = arith.constant 0 : i32
    %c0_i32_0 = arith.constant 0 : i32
    %c0_i32_1 = arith.constant 0 : i32
    return %c0_i32, %c0_i32_0 : i32, i32
  }
  func.func @transform_8(%arg0: i32) -> (i32, i32) {
    %c0_i32 = arith.constant 0 : i32
    %c0_i32_0 = arith.constant 0 : i32
    %c0_i32_1 = arith.constant 0 : i32
    return %c0_i32, %c0_i32_0 : i32, i32
  }
  func.func @transform_9(%arg0: i32) -> (i32, i32) {
    %c0_i32 = arith.constant 0 : i32
    %c0_i32_0 = arith.constant 0 : i32
    %c0_i32_1 = arith.constant 0 : i32
    return %c0_i32, %c0_i32_0 : i32, i32
  }
  func.func @transform_10(%arg0: i32) -> (i32, i32) {
    %c0_i32 = arith.constant 0 : i32
    %c0_i32_0 = arith.constant 0 : i32
    %c0_i32_1 = arith.constant 0 : i32
    return %c0_i32, %c0_i32_0 : i32, i32
  }
  func.func @transform_11(%arg0: i32) -> (i32, i32) {
    %c0_i32 = arith.constant 0 : i32
    %c0_i32_0 = arith.constant 0 : i32
    %c0_i32_1 = arith.constant 0 : i32
    return %c0_i32, %c0_i32_0 : i32, i32
  }
  func.func @transform_12(%arg0: i32) -> (i32, i32) {
    %c0_i32 = arith.constant 0 : i32
    %c0_i32_0 = arith.constant 0 : i32
    %c0_i32_1 = arith.constant 0 : i32
    return %c0_i32, %c0_i32_0 : i32, i32
  }
  func.func @transform_13(%arg0: i32) -> (i32, i32) {
    %c0_i32 = arith.constant 0 : i32
    %c0_i32_0 = arith.constant 0 : i32
    %c0_i32_1 = arith.constant 0 : i32
    return %c0_i32, %c0_i32_0 : i32, i32
  }
  func.func @transform_14(%arg0: i32) -> (i32, i32) {
    %c0_i32 = arith.constant 0 : i32
    %c0_i32_0 = arith.constant 0 : i32
    %c0_i32_1 = arith.constant 0 : i32
    return %c0_i32, %c0_i32_0 : i32, i32
  }
  func.func @transform_15(%arg0: i32) -> (i32, i32) {
    %c0_i32 = arith.constant 0 : i32
    %c0_i32_0 = arith.constant 0 : i32
    %c0_i32_1 = arith.constant 0 : i32
    return %c0_i32, %c0_i32_0 : i32, i32
  }
  func.func @transform_16(%arg0: i32) -> (i32, i32) {
    %c0_i32 = arith.constant 0 : i32
    %c0_i32_0 = arith.constant 0 : i32
    %c0_i32_1 = arith.constant 0 : i32
    return %c0_i32, %c0_i32_0 : i32, i32
  }
  func.func @transform_17(%arg0: i32) -> (i32, i32) {
    %c0_i32 = arith.constant 0 : i32
    %c0_i32_0 = arith.constant 0 : i32
    return %arg0, %c0_i32 : i32, i32
  }
  func.func @transform_18(%arg0: i32) -> (i32, i32) {
    %c0_i32 = arith.constant 0 : i32
    %c0_i32_0 = arith.constant 0 : i32
    return %arg0, %c0_i32 : i32, i32
  }
}

</mosaic_0001>

<llo_original>
// kernel: autoencoder_forward.1
$region0: #{autoencoder_forward.1}
  #allocation0 [shape = 'u32[]', space=smem, size = 0x4, offset = 0x4, fixed_abs, tag = 'smem constant byte address 0x4 - core index']
  #allocation1 [shape = 'u32[144,128]{1,0:T(1,128)}', space=vmem, size = 0x12000, scoped, tag = 'internal scratch']
  %s0 = inlined_call_operand.vmem [shape: f32[512,784], index: 0, kind: input, shape index: {}]
  %s1 = inlined_call_operand.vmem [shape: bf16[784,128], index: 1, kind: input, shape index: {}]
  %s2 = inlined_call_operand.vmem [shape: bf16[128,64], index: 2, kind: input, shape index: {}]
  %s3 = inlined_call_operand.vmem [shape: bf16[64,12], index: 3, kind: input, shape index: {}]
  %s4 = inlined_call_operand.vmem [shape: bf16[12,8], index: 4, kind: input, shape index: {}]
  %s5 = inlined_call_operand.vmem [shape: bf16[8,12], index: 5, kind: input, shape index: {}]
  %s6 = inlined_call_operand.vmem [shape: bf16[12,64], index: 6, kind: input, shape index: {}]
  %s7 = inlined_call_operand.vmem [shape: bf16[64,128], index: 7, kind: input, shape index: {}]
  %s8 = inlined_call_operand.vmem [shape: bf16[128,784], index: 8, kind: input, shape index: {}]
  %s9 = inlined_call_operand.vmem [shape: f32[1,128], index: 9, kind: input, shape index: {}]
  %s10 = inlined_call_operand.vmem [shape: f32[1,64], index: 10, kind: input, shape index: {}]
  %s11 = inlined_call_operand.vmem [shape: f32[1,12], index: 11, kind: input, shape index: {}]
  %s12 = inlined_call_operand.vmem [shape: f32[1,8], index: 12, kind: input, shape index: {}]
  %s13 = inlined_call_operand.vmem [shape: f32[1,12], index: 13, kind: input, shape index: {}]
  %s14 = inlined_call_operand.vmem [shape: f32[1,64], index: 14, kind: input, shape index: {}]
  %s15 = inlined_call_operand.vmem [shape: f32[1,128], index: 15, kind: input, shape index: {}]
  %s16 = inlined_call_operand.vmem [shape: f32[1,784], index: 16, kind: input, shape index: {}]
  %s17 = inlined_call_operand.vmem [shape: f32[512,8], index: 17, kind: output, shape index: {0}]
  %s18 = inlined_call_operand.vmem [shape: f32[512,784], index: 18, kind: output, shape index: {1}]
  %19 = xla_tuple %s17, %s18
  %s20 = sld [smem:[#allocation0]]
  $region109: #{autoencoder_forward.1} parent=0
    _
  %s22 = ssub.s32 1, %s20
  %s23 = scalar_select 0, %s22, %s20
  loop: start=0, step=1, limit=4
  $region2: #{autoencoder_forward.1} parent=0 // loop_pre_header
    _
  $region3: #{autoencoder_forward.1} parent=0 // loop_header
    %s25 = sphi 0, %s29
    %p26 = scmp.ge.s32.totalorder %s25, 4
    %s35 = sphi 0, %s37
    %s38 = sphi 0, %s35
    %s39 = sphi 0, %s38
    %s55 = sphi 0, %s39
    %s59 = sphi 0, %s59
    %s61 = sphi 0, %s59
    %s62 = sphi 0, %s61
    %s76 = sphi 0, %s62
    %s80 = sphi 0, %s80
    %s82 = sphi 0, %s80
    %s83 = sphi 0, %s82
    %s97 = sphi 0, %s83
    %s101 = sphi 0, %s101
    %s103 = sphi 0, %s101
    %s104 = sphi 0, %s103
    %s118 = sphi 0, %s104
    %s122 = sphi 0, %s122
    %s124 = sphi 0, %s122
    %s125 = sphi 0, %s124
    %s139 = sphi 0, %s125
    %s143 = sphi 0, %s143
    %s145 = sphi 0, %s143
    %s146 = sphi 0, %s145
    %s160 = sphi 0, %s146
    %s164 = sphi 0, %s164
    %s166 = sphi 0, %s164
    %s167 = sphi 0, %s166
    %s181 = sphi 0, %s167
    %s185 = sphi 0, %s185
    %s187 = sphi 0, %s185
    %s188 = sphi 0, %s187
    %s202 = sphi 0, %s188
    %s206 = sphi 0, %s206
    %s208 = sphi 0, %s206
    %s209 = sphi 0, %s208
    %s223 = sphi 0, %s209
    %s227 = sphi 0, %s227
    %s229 = sphi 0, %s227
    %s230 = sphi 0, %s229
    %s244 = sphi 0, %s230
    %s248 = sphi 0, %s248
    %s250 = sphi 0, %s248
    %s251 = sphi 0, %s250
    %s265 = sphi 0, %s251
    %s269 = sphi 0, %s269
    %s271 = sphi 0, %s269
    %s272 = sphi 0, %s271
    %s286 = sphi 0, %s272
    %s290 = sphi 0, %s290
    %s292 = sphi 0, %s290
    %s293 = sphi 0, %s292
    %s307 = sphi 0, %s293
    %s311 = sphi 0, %s311
    %s313 = sphi 0, %s311
    %s314 = sphi 0, %s313
    %s328 = sphi 0, %s314
    %s332 = sphi 0, %s332
    %s334 = sphi 0, %s332
    %s335 = sphi 0, %s334
    %s349 = sphi 0, %s335
    %s353 = sphi 0, %s353
    %s355 = sphi 0, %s353
    %s356 = sphi 0, %s355
    %s370 = sphi 0, %s356
    %s374 = sphi 0, %s374
    %s376 = sphi 0, %s374
    %s377 = sphi 0, %s376
    %s391 = sphi 0, %s377
    %s397 = sphi 0, %s399
    %s400 = sphi 0, %s397
    %s401 = sphi 0, %s400
    %s417 = sphi 0, %s401
    %s423 = sphi 0, %s425
    %s426 = sphi 0, %s423
    %s427 = sphi 0, %s426
    %s443 = sphi 0, %s427
  $region4: #{autoencoder_forward.1} parent=0 // loop_header_branch
    %28 = sbr.rel (%p26) target = $region8
  $region5: #{autoencoder_forward.1} parent=0 // loop_body
    %s30 = ssub.s32 %s25, 1
    %s31 = ssub.s32 %s25, 2
    %s32 = sadd.s32 %s25, 1
    %s33 = ssub.s32 %s25, %s32
    %p34 = scmp.eq.s32.totalorder %s33, 0
    %s36 = sadd.s32 %s35, 1
    %s37 = scalar_select %p34, %s35, %s36
    %p40 = pneg %p34
    %p41 = scmp.eq.s32.totalorder %s25, 1
    %p42 = por %p40, %p41
    %p43 = scmp.ne.s32.totalorder %s35, %s38
    %p44 = scmp.eq.s32.totalorder %s25, 0
    %p45 = por %p43, %p44
    %p46 = scmp.ne.s32.totalorder %s35, %s38
    %p47 = scmp.eq.s32.totalorder %s30, 1
    %p48 = por %p46, %p47
    %p49 = scmp.ne.s32.totalorder %s38, %s39
    %p50 = scmp.eq.s32.totalorder %s30, 0
    %p51 = por %p49, %p50
    %p52 = scmp.ne.s32.totalorder %s38, %s39
    %p53 = scmp.eq.s32.totalorder %s31, 1
    %p54 = por %p52, %p53
    %p56 = scmp.ne.s32.totalorder %s39, %s55
    %p57 = scmp.eq.s32.totalorder %s31, 0
    %p58 = por %p56, %p57
    %s60 = sadd.s32 %s59, 1
    %p63 = scmp.eq.s32.totalorder %s25, 1
    %p64 = scmp.ne.s32.totalorder %s59, %s61
    %p65 = scmp.eq.s32.totalorder %s25, 0
    %p66 = por %p64, %p65
    %p67 = scmp.ne.s32.totalorder %s59, %s61
    %p68 = scmp.eq.s32.totalorder %s30, 1
    %p69 = por %p67, %p68
    %p70 = scmp.ne.s32.totalorder %s61, %s62
    %p71 = scmp.eq.s32.totalorder %s30, 0
    %p72 = por %p70, %p71
    %p73 = scmp.ne.s32.totalorder %s61, %s62
    %p74 = scmp.eq.s32.totalorder %s31, 1
    %p75 = por %p73, %p74
    %p77 = scmp.ne.s32.totalorder %s62, %s76
    %p78 = scmp.eq.s32.totalorder %s31, 0
    %p79 = por %p77, %p78
    %s81 = sadd.s32 %s80, 1
    %p84 = scmp.eq.s32.totalorder %s25, 1
    %p85 = scmp.ne.s32.totalorder %s80, %s82
    %p86 = scmp.eq.s32.totalorder %s25, 0
    %p87 = por %p85, %p86
    %p88 = scmp.ne.s32.totalorder %s80, %s82
    %p89 = scmp.eq.s32.totalorder %s30, 1
    %p90 = por %p88, %p89
    %p91 = scmp.ne.s32.totalorder %s82, %s83
    %p92 = scmp.eq.s32.totalorder %s30, 0
    %p93 = por %p91, %p92
    %p94 = scmp.ne.s32.totalorder %s82, %s83
    %p95 = scmp.eq.s32.totalorder %s31, 1
    %p96 = por %p94, %p95
    %p98 = scmp.ne.s32.totalorder %s83, %s97
    %p99 = scmp.eq.s32.totalorder %s31, 0
    %p100 = por %p98, %p99
    %s102 = sadd.s32 %s101, 1
    %p105 = scmp.eq.s32.totalorder %s25, 1
    %p106 = scmp.ne.s32.totalorder %s101, %s103
    %p107 = scmp.eq.s32.totalorder %s25, 0
    %p108 = por %p106, %p107
    %p109 = scmp.ne.s32.totalorder %s101, %s103
    %p110 = scmp.eq.s32.totalorder %s30, 1
    %p111 = por %p109, %p110
    %p112 = scmp.ne.s32.totalorder %s103, %s104
    %p113 = scmp.eq.s32.totalorder %s30, 0
    %p114 = por %p112, %p113
    %p115 = scmp.ne.s32.totalorder %s103, %s104
    %p116 = scmp.eq.s32.totalorder %s31, 1
    %p117 = por %p115, %p116
    %p119 = scmp.ne.s32.totalorder %s104, %s118
    %p120 = scmp.eq.s32.totalorder %s31, 0
    %p121 = por %p119, %p120
    %s123 = sadd.s32 %s122, 1
    %p126 = scmp.eq.s32.totalorder %s25, 1
    %p127 = scmp.ne.s32.totalorder %s122, %s124
    %p128 = scmp.eq.s32.totalorder %s25, 0
    %p129 = por %p127, %p128
    %p130 = scmp.ne.s32.totalorder %s122, %s124
    %p131 = scmp.eq.s32.totalorder %s30, 1
    %p132 = por %p130, %p131
    %p133 = scmp.ne.s32.totalorder %s124, %s125
    %p134 = scmp.eq.s32.totalorder %s30, 0
    %p135 = por %p133, %p134
    %p136 = scmp.ne.s32.totalorder %s124, %s125
    %p137 = scmp.eq.s32.totalorder %s31, 1
    %p138 = por %p136, %p137
    %p140 = scmp.ne.s32.totalorder %s125, %s139
    %p141 = scmp.eq.s32.totalorder %s31, 0
    %p142 = por %p140, %p141
    %s144 = sadd.s32 %s143, 1
    %p147 = scmp.eq.s32.totalorder %s25, 1
    %p148 = scmp.ne.s32.totalorder %s143, %s145
    %p149 = scmp.eq.s32.totalorder %s25, 0
    %p150 = por %p148, %p149
    %p151 = scmp.ne.s32.totalorder %s143, %s145
    %p152 = scmp.eq.s32.totalorder %s30, 1
    %p153 = por %p151, %p152
    %p154 = scmp.ne.s32.totalorder %s145, %s146
    %p155 = scmp.eq.s32.totalorder %s30, 0
    %p156 = por %p154, %p155
    %p157 = scmp.ne.s32.totalorder %s145, %s146
    %p158 = scmp.eq.s32.totalorder %s31, 1
    %p159 = por %p157, %p158
    %p161 = scmp.ne.s32.totalorder %s146, %s160
    %p162 = scmp.eq.s32.totalorder %s31, 0
    %p163 = por %p161, %p162
    %s165 = sadd.s32 %s164, 1
    %p168 = scmp.eq.s32.totalorder %s25, 1
    %p169 = scmp.ne.s32.totalorder %s164, %s166
    %p170 = scmp.eq.s32.totalorder %s25, 0
    %p171 = por %p169, %p170
    %p172 = scmp.ne.s32.totalorder %s164, %s166
    %p173 = scmp.eq.s32.totalorder %s30, 1
    %p174 = por %p172, %p173
    %p175 = scmp.ne.s32.totalorder %s166, %s167
    %p176 = scmp.eq.s32.totalorder %s30, 0
    %p177 = por %p175, %p176
    %p178 = scmp.ne.s32.totalorder %s166, %s167
    %p179 = scmp.eq.s32.totalorder %s31, 1
    %p180 = por %p178, %p179
    %p182 = scmp.ne.s32.totalorder %s167, %s181
    %p183 = scmp.eq.s32.totalorder %s31, 0
    %p184 = por %p182, %p183
    %s186 = sadd.s32 %s185, 1
    %p189 = scmp.eq.s32.totalorder %s25, 1
    %p190 = scmp.ne.s32.totalorder %s185, %s187
    %p191 = scmp.eq.s32.totalorder %s25, 0
    %p192 = por %p190, %p191
    %p193 = scmp.ne.s32.totalorder %s185, %s187
    %p194 = scmp.eq.s32.totalorder %s30, 1
    %p195 = por %p193, %p194
    %p196 = scmp.ne.s32.totalorder %s187, %s188
    %p197 = scmp.eq.s32.totalorder %s30, 0
    %p198 = por %p196, %p197
    %p199 = scmp.ne.s32.totalorder %s187, %s188
    %p200 = scmp.eq.s32.totalorder %s31, 1
    %p201 = por %p199, %p200
    %p203 = scmp.ne.s32.totalorder %s188, %s202
    %p204 = scmp.eq.s32.totalorder %s31, 0
    %p205 = por %p203, %p204
    %s207 = sadd.s32 %s206, 1
    %p210 = scmp.eq.s32.totalorder %s25, 1
    %p211 = scmp.ne.s32.totalorder %s206, %s208
    %p212 = scmp.eq.s32.totalorder %s25, 0
    %p213 = por %p211, %p212
    %p214 = scmp.ne.s32.totalorder %s206, %s208
    %p215 = scmp.eq.s32.totalorder %s30, 1
    %p216 = por %p214, %p215
    %p217 = scmp.ne.s32.totalorder %s208, %s209
    %p218 = scmp.eq.s32.totalorder %s30, 0
    %p219 = por %p217, %p218
    %p220 = scmp.ne.s32.totalorder %s208, %s209
    %p221 = scmp.eq.s32.totalorder %s31, 1
    %p222 = por %p220, %p221
    %p224 = scmp.ne.s32.totalorder %s209, %s223
    %p225 = scmp.eq.s32.totalorder %s31, 0
    %p226 = por %p224, %p225
    %s228 = sadd.s32 %s227, 1
    %p231 = scmp.eq.s32.totalorder %s25, 1
    %p232 = scmp.ne.s32.totalorder %s227, %s229
    %p233 = scmp.eq.s32.totalorder %s25, 0
    %p234 = por %p232, %p233
    %p235 = scmp.ne.s32.totalorder %s227, %s229
    %p236 = scmp.eq.s32.totalorder %s30, 1
    %p237 = por %p235, %p236
    %p238 = scmp.ne.s32.totalorder %s229, %s230
    %p239 = scmp.eq.s32.totalorder %s30, 0
    %p240 = por %p238, %p239
    %p241 = scmp.ne.s32.totalorder %s229, %s230
    %p242 = scmp.eq.s32.totalorder %s31, 1
    %p243 = por %p241, %p242
    %p245 = scmp.ne.s32.totalorder %s230, %s244
    %p246 = scmp.eq.s32.totalorder %s31, 0
    %p247 = por %p245, %p246
    %s249 = sadd.s32 %s248, 1
    %p252 = scmp.eq.s32.totalorder %s25, 1
    %p253 = scmp.ne.s32.totalorder %s248, %s250
    %p254 = scmp.eq.s32.totalorder %s25, 0
    %p255 = por %p253, %p254
    %p256 = scmp.ne.s32.totalorder %s248, %s250
    %p257 = scmp.eq.s32.totalorder %s30, 1
    %p258 = por %p256, %p257
    %p259 = scmp.ne.s32.totalorder %s250, %s251
    %p260 = scmp.eq.s32.totalorder %s30, 0
    %p261 = por %p259, %p260
    %p262 = scmp.ne.s32.totalorder %s250, %s251
    %p263 = scmp.eq.s32.totalorder %s31, 1
    %p264 = por %p262, %p263
    %p266 = scmp.ne.s32.totalorder %s251, %s265
    %p267 = scmp.eq.s32.totalorder %s31, 0
    %p268 = por %p266, %p267
    %s270 = sadd.s32 %s269, 1
    %p273 = scmp.eq.s32.totalorder %s25, 1
    %p274 = scmp.ne.s32.totalorder %s269, %s271
    %p275 = scmp.eq.s32.totalorder %s25, 0
    %p276 = por %p274, %p275
    %p277 = scmp.ne.s32.totalorder %s269, %s271
    %p278 = scmp.eq.s32.totalorder %s30, 1
    %p279 = por %p277, %p278
    %p280 = scmp.ne.s32.totalorder %s271, %s272
    %p281 = scmp.eq.s32.totalorder %s30, 0
    %p282 = por %p280, %p281
    %p283 = scmp.ne.s32.totalorder %s271, %s272
    %p284 = scmp.eq.s32.totalorder %s31, 1
    %p285 = por %p283, %p284
    %p287 = scmp.ne.s32.totalorder %s272, %s286
    %p288 = scmp.eq.s32.totalorder %s31, 0
    %p289 = por %p287, %p288
    %s291 = sadd.s32 %s290, 1
    %p294 = scmp.eq.s32.totalorder %s25, 1
    %p295 = scmp.ne.s32.totalorder %s290, %s292
    %p296 = scmp.eq.s32.totalorder %s25, 0
    %p297 = por %p295, %p296
    %p298 = scmp.ne.s32.totalorder %s290, %s292
    %p299 = scmp.eq.s32.totalorder %s30, 1
    %p300 = por %p298, %p299
    %p301 = scmp.ne.s32.totalorder %s292, %s293
    %p302 = scmp.eq.s32.totalorder %s30, 0
    %p303 = por %p301, %p302
    %p304 = scmp.ne.s32.totalorder %s292, %s293
    %p305 = scmp.eq.s32.totalorder %s31, 1
    %p306 = por %p304, %p305
    %p308 = scmp.ne.s32.totalorder %s293, %s307
    %p309 = scmp.eq.s32.totalorder %s31, 0
    %p310 = por %p308, %p309
    %s312 = sadd.s32 %s311, 1
    %p315 = scmp.eq.s32.totalorder %s25, 1
    %p316 = scmp.ne.s32.totalorder %s311, %s313
    %p317 = scmp.eq.s32.totalorder %s25, 0
    %p318 = por %p316, %p317
    %p319 = scmp.ne.s32.totalorder %s311, %s313
    %p320 = scmp.eq.s32.totalorder %s30, 1
    %p321 = por %p319, %p320
    %p322 = scmp.ne.s32.totalorder %s313, %s314
    %p323 = scmp.eq.s32.totalorder %s30, 0
    %p324 = por %p322, %p323
    %p325 = scmp.ne.s32.totalorder %s313, %s314
    %p326 = scmp.eq.s32.totalorder %s31, 1
    %p327 = por %p325, %p326
    %p329 = scmp.ne.s32.totalorder %s314, %s328
    %p330 = scmp.eq.s32.totalorder %s31, 0
    %p331 = por %p329, %p330
    %s333 = sadd.s32 %s332, 1
    %p336 = scmp.eq.s32.totalorder %s25, 1
    %p337 = scmp.ne.s32.totalorder %s332, %s334
    %p338 = scmp.eq.s32.totalorder %s25, 0
    %p339 = por %p337, %p338
    %p340 = scmp.ne.s32.totalorder %s332, %s334
    %p341 = scmp.eq.s32.totalorder %s30, 1
    %p342 = por %p340, %p341
    %p343 = scmp.ne.s32.totalorder %s334, %s335
    %p344 = scmp.eq.s32.totalorder %s30, 0
    %p345 = por %p343, %p344
    %p346 = scmp.ne.s32.totalorder %s334, %s335
    %p347 = scmp.eq.s32.totalorder %s31, 1
    %p348 = por %p346, %p347
    %p350 = scmp.ne.s32.totalorder %s335, %s349
    %p351 = scmp.eq.s32.totalorder %s31, 0
    %p352 = por %p350, %p351
    %s354 = sadd.s32 %s353, 1
    %p357 = scmp.eq.s32.totalorder %s25, 1
    %p358 = scmp.ne.s32.totalorder %s353, %s355
    %p359 = scmp.eq.s32.totalorder %s25, 0
    %p360 = por %p358, %p359
    %p361 = scmp.ne.s32.totalorder %s353, %s355
    %p362 = scmp.eq.s32.totalorder %s30, 1
    %p363 = por %p361, %p362
    %p364 = scmp.ne.s32.totalorder %s355, %s356
    %p365 = scmp.eq.s32.totalorder %s30, 0
    %p366 = por %p364, %p365
    %p367 = scmp.ne.s32.totalorder %s355, %s356
    %p368 = scmp.eq.s32.totalorder %s31, 1
    %p369 = por %p367, %p368
    %p371 = scmp.ne.s32.totalorder %s356, %s370
    %p372 = scmp.eq.s32.totalorder %s31, 0
    %p373 = por %p371, %p372
    %s375 = sadd.s32 %s374, 1
    %p378 = scmp.eq.s32.totalorder %s25, 1
    %p379 = scmp.ne.s32.totalorder %s374, %s376
    %p380 = scmp.eq.s32.totalorder %s25, 0
    %p381 = por %p379, %p380
    %p382 = scmp.ne.s32.totalorder %s374, %s376
    %p383 = scmp.eq.s32.totalorder %s30, 1
    %p384 = por %p382, %p383
    %p385 = scmp.ne.s32.totalorder %s376, %s377
    %p386 = scmp.eq.s32.totalorder %s30, 0
    %p387 = por %p385, %p386
    %p388 = scmp.ne.s32.totalorder %s376, %s377
    %p389 = scmp.eq.s32.totalorder %s31, 1
    %p390 = por %p388, %p389
    %p392 = scmp.ne.s32.totalorder %s377, %s391
    %p393 = scmp.eq.s32.totalorder %s31, 0
    %p394 = por %p392, %p393
    %s395 = ssub.s32 %s25, %s32
    %p396 = scmp.eq.s32.totalorder %s395, 0
    %s398 = sadd.s32 %s397, 1
    %s399 = scalar_select %p396, %s397, %s398
    %p402 = pneg %p396
    %p403 = scmp.eq.s32.totalorder %s25, 1
    %p404 = por %p402, %p403
    %p405 = scmp.ne.s32.totalorder %s397, %s400
    %p406 = scmp.eq.s32.totalorder %s25, 0
    %p407 = por %p405, %p406
    %p408 = scmp.ne.s32.totalorder %s397, %s400
    %p409 = scmp.eq.s32.totalorder %s30, 1
    %p410 = por %p408, %p409
    %p411 = scmp.ne.s32.totalorder %s400, %s401
    %p412 = scmp.eq.s32.totalorder %s30, 0
    %p413 = por %p411, %p412
    %p414 = scmp.ne.s32.totalorder %s400, %s401
    %p415 = scmp.eq.s32.totalorder %s31, 1
    %p416 = por %p414, %p415
    %p418 = scmp.ne.s32.totalorder %s401, %s417
    %p419 = scmp.eq.s32.totalorder %s31, 0
    %p420 = por %p418, %p419
    %s421 = ssub.s32 %s25, %s32
    %p422 = scmp.eq.s32.totalorder %s421, 0
    %s424 = sadd.s32 %s423, 1
    %s425 = scalar_select %p422, %s423, %s424
    %p428 = pneg %p422
    %p429 = scmp.eq.s32.totalorder %s25, 1
    %p430 = por %p428, %p429
    %p431 = scmp.ne.s32.totalorder %s423, %s426
    %p432 = scmp.eq.s32.totalorder %s25, 0
    %p433 = por %p431, %p432
    %p434 = scmp.ne.s32.totalorder %s423, %s426
    %p435 = scmp.eq.s32.totalorder %s30, 1
    %p436 = por %p434, %p435
    %p437 = scmp.ne.s32.totalorder %s426, %s427
    %p438 = scmp.eq.s32.totalorder %s30, 0
    %p439 = por %p437, %p438
    %p440 = scmp.ne.s32.totalorder %s426, %s427
    %p441 = scmp.eq.s32.totalorder %s31, 1
    %p442 = por %p440, %p441
    %p444 = scmp.ne.s32.totalorder %s427, %s443
    %p445 = scmp.eq.s32.totalorder %s31, 0
    %p446 = por %p444, %p445
    %p447 = scmp.le.s32.totalorder 1, %s25
    %p448 = scmp.lt.s32.totalorder %s25, 3
    %p449 = pnand %p447, %p448
    %p450 = pneg %p449
    // Predicated region
    $region9: #{autoencoder_forward.1} parent=5 // pred_check
      _
    $region10: #{autoencoder_forward.1} parent=5 // pred_check_branch
      %452 = sbr.rel (%p449) target = $region12
    $region11: #{autoencoder_forward.1} parent=5 // pred_region
      %s453 = ssub.s32 %s25, 1
      // Predicated region
      $region13: #{autoencoder_forward.1} parent=11 // pred_check
        %p454 = pneg %p72
      $region14: #{autoencoder_forward.1} parent=11 // pred_check_branch
        %456 = sbr.rel (%p454) target = $region16
      $region15: #{autoencoder_forward.1} parent=11 // pred_region
        _
      $region16: #{autoencoder_forward.1} parent=11 // pred_fallthru
        _
      // Predicated region
      $region17: #{autoencoder_forward.1} parent=11 // pred_check
        %p457 = pneg %p93
      $region18: #{autoencoder_forward.1} parent=11 // pred_check_branch
        %459 = sbr.rel (%p457) target = $region20
      $region19: #{autoencoder_forward.1} parent=11 // pred_region
        _
      $region20: #{autoencoder_forward.1} parent=11 // pred_fallthru
        _
      // Predicated region
      $region21: #{autoencoder_forward.1} parent=11 // pred_check
        %p460 = pneg %p114
      $region22: #{autoencoder_forward.1} parent=11 // pred_check_branch
        %462 = sbr.rel (%p460) target = $region24
      $region23: #{autoencoder_forward.1} parent=11 // pred_region
        _
      $region24: #{autoencoder_forward.1} parent=11 // pred_fallthru
        _
      // Predicated region
      $region25: #{autoencoder_forward.1} parent=11 // pred_check
        %p463 = pneg %p135
      $region26: #{autoencoder_forward.1} parent=11 // pred_check_branch
        %465 = sbr.rel (%p463) target = $region28
      $region27: #{autoencoder_forward.1} parent=11 // pred_region
        _
      $region28: #{autoencoder_forward.1} parent=11 // pred_fallthru
        _
      // Predicated region
      $region29: #{autoencoder_forward.1} parent=11 // pred_check
        %p466 = pneg %p156
      $region30: #{autoencoder_forward.1} parent=11 // pred_check_branch
        %468 = sbr.rel (%p466) target = $region32
      $region31: #{autoencoder_forward.1} parent=11 // pred_region
        _
      $region32: #{autoencoder_forward.1} parent=11 // pred_fallthru
        _
      // Predicated region
      $region33: #{autoencoder_forward.1} parent=11 // pred_check
        %p469 = pneg %p177
      $region34: #{autoencoder_forward.1} parent=11 // pred_check_branch
        %471 = sbr.rel (%p469) target = $region36
      $region35: #{autoencoder_forward.1} parent=11 // pred_region
        _
      $region36: #{autoencoder_forward.1} parent=11 // pred_fallthru
        _
      // Predicated region
      $region37: #{autoencoder_forward.1} parent=11 // pred_check
        %p472 = pneg %p198
      $region38: #{autoencoder_forward.1} parent=11 // pred_check_branch
        %474 = sbr.rel (%p472) target = $region40
      $region39: #{autoencoder_forward.1} parent=11 // pred_region
        _
      $region40: #{autoencoder_forward.1} parent=11 // pred_fallthru
        _
      // Predicated region
      $region41: #{autoencoder_forward.1} parent=11 // pred_check
        %p475 = pneg %p219
      $region42: #{autoencoder_forward.1} parent=11 // pred_check_branch
        %477 = sbr.rel (%p475) target = $region44
      $region43: #{autoencoder_forward.1} parent=11 // pred_region
        _
      $region44: #{autoencoder_forward.1} parent=11 // pred_fallthru
        _
      // Predicated region
      $region45: #{autoencoder_forward.1} parent=11 // pred_check
        %p478 = pneg %p240
      $region46: #{autoencoder_forward.1} parent=11 // pred_check_branch
        %480 = sbr.rel (%p478) target = $region48
      $region47: #{autoencoder_forward.1} parent=11 // pred_region
        _
      $region48: #{autoencoder_forward.1} parent=11 // pred_fallthru
        _
      // Predicated region
      $region49: #{autoencoder_forward.1} parent=11 // pred_check
        %p481 = pneg %p261
      $region50: #{autoencoder_forward.1} parent=11 // pred_check_branch
        %483 = sbr.rel (%p481) target = $region52
      $region51: #{autoencoder_forward.1} parent=11 // pred_region
        _
      $region52: #{autoencoder_forward.1} parent=11 // pred_fallthru
        _
      // Predicated region
      $region53: #{autoencoder_forward.1} parent=11 // pred_check
        %p484 = pneg %p282
      $region54: #{autoencoder_forward.1} parent=11 // pred_check_branch
        %486 = sbr.rel (%p484) target = $region56
      $region55: #{autoencoder_forward.1} parent=11 // pred_region
        _
      $region56: #{autoencoder_forward.1} parent=11 // pred_fallthru
        _
      // Predicated region
      $region57: #{autoencoder_forward.1} parent=11 // pred_check
        %p487 = pneg %p303
      $region58: #{autoencoder_forward.1} parent=11 // pred_check_branch
        %489 = sbr.rel (%p487) target = $region60
      $region59: #{autoencoder_forward.1} parent=11 // pred_region
        _
      $region60: #{autoencoder_forward.1} parent=11 // pred_fallthru
        _
      // Predicated region
      $region61: #{autoencoder_forward.1} parent=11 // pred_check
        %p490 = pneg %p324
      $region62: #{autoencoder_forward.1} parent=11 // pred_check_branch
        %492 = sbr.rel (%p490) target = $region64
      $region63: #{autoencoder_forward.1} parent=11 // pred_region
        _
      $region64: #{autoencoder_forward.1} parent=11 // pred_fallthru
        _
      // Predicated region
      $region65: #{autoencoder_forward.1} parent=11 // pred_check
        %p493 = pneg %p345
      $region66: #{autoencoder_forward.1} parent=11 // pred_check_branch
        %495 = sbr.rel (%p493) target = $region68
      $region67: #{autoencoder_forward.1} parent=11 // pred_region
        _
      $region68: #{autoencoder_forward.1} parent=11 // pred_fallthru
        _
      // Predicated region
      $region69: #{autoencoder_forward.1} parent=11 // pred_check
        %p496 = pneg %p366
      $region70: #{autoencoder_forward.1} parent=11 // pred_check_branch
        %498 = sbr.rel (%p496) target = $region72
      $region71: #{autoencoder_forward.1} parent=11 // pred_region
        _
      $region72: #{autoencoder_forward.1} parent=11 // pred_fallthru
        _
      // Predicated region
      $region73: #{autoencoder_forward.1} parent=11 // pred_check
        %p499 = pneg %p387
      $region74: #{autoencoder_forward.1} parent=11 // pred_check_branch
        %501 = sbr.rel (%p499) target = $region76
      $region75: #{autoencoder_forward.1} parent=11 // pred_region
        _
      $region76: #{autoencoder_forward.1} parent=11 // pred_fallthru
        _
    $region12: #{autoencoder_forward.1} parent=5 // pred_fallthru
      _
    %p502 = scmp.lt.s32.totalorder %s25, 2
    // Predicated region
    $region77: #{autoencoder_forward.1} parent=5 // pred_check
      %p503 = pneg %p502
    $region78: #{autoencoder_forward.1} parent=5 // pred_check_branch
      %505 = sbr.rel (%p503) target = $region80
    $region79: #{autoencoder_forward.1} parent=5 // pred_region
      // Predicated region
      $region81: #{autoencoder_forward.1} parent=79 // pred_check
        %p506 = pneg %p45
      $region82: #{autoencoder_forward.1} parent=79 // pred_check_branch
        %508 = sbr.rel (%p506) target = $region84
      $region83: #{autoencoder_forward.1} parent=79 // pred_region
        %s509 = smul.u32 32, %s25
        %p510 = scmp.lt.s32.totalorder %s509, 63
        %s511 = scalar_select %p510, %s509, 63
        %s512 = smul.addr %s511, 7
        %s513 = smul.addr %s512, 8
        %s514 = scalar_lea.vmem %s0, %s513
        %s515 = smul.u32 32, %s25
      $region84: #{autoencoder_forward.1} parent=79 // pred_fallthru
        _
    $region80: #{autoencoder_forward.1} parent=5 // pred_fallthru
      _
    %p516 = scmp.le.s32.totalorder 1, %s25
    %p517 = scmp.lt.s32.totalorder %s25, 3
    %p518 = pnand %p516, %p517
    %p519 = pneg %p518
    // Predicated region
    $region85: #{autoencoder_forward.1} parent=5 // pred_check
      _
    $region86: #{autoencoder_forward.1} parent=5 // pred_check_branch
      %521 = sbr.rel (%p518) target = $region88
    $region87: #{autoencoder_forward.1} parent=5 // pred_region
      %s522 = ssub.s32 %s25, 1
      %s523 = smul.u32 32, %s30
      %p524 = scmp.lt.s32.totalorder %s523, 63
      %s525 = scalar_select %p524, %s523, 63
      %s526 = smul.addr %s525, 7
      %s527 = smul.addr %s526, 8
      %s528 = scalar_lea.vmem %s0, %s527
      %p529 = pneg %p51
      %p530 = pneg %p48
      %p531 = pneg %p72
      %p532 = pneg %p69
      %p533 = pneg %p93
      %p534 = pneg %p90
      %p535 = pneg %p114
      %p536 = pneg %p111
      %p537 = pneg %p135
      %p538 = pneg %p132
      %p539 = pneg %p156
      %p540 = pneg %p153
      %p541 = pneg %p177
      %p542 = pneg %p174
      %p543 = pneg %p198
      %p544 = pneg %p195
      %p545 = pneg %p219
      %p546 = pneg %p216
      %p547 = pneg %p240
      %p548 = pneg %p237
      %p549 = pneg %p261
      %p550 = pneg %p258
      %p551 = pneg %p282
      %p552 = pneg %p279
      %p553 = pneg %p303
      %p554 = pneg %p300
      %p555 = pneg %p324
      %p556 = pneg %p321
      %p557 = pneg %p345
      %p558 = pneg %p342
      %p559 = pneg %p366
      %p560 = pneg %p363
      %p561 = pneg %p387
      %p562 = pneg %p384
      %p563 = pneg %p413
      %p564 = pneg %p410
      %s565 = smul.u32 32, %s30
      %p566 = scmp.lt.s32.totalorder %s565, 63
      %s567 = scalar_select %p566, %s565, 63
      %s568 = smul.addr %s567, 8
      %s569 = scalar_lea.vmem %s17, %s568
      %p570 = pneg %p439
      %p571 = pneg %p436
      %s572 = smul.u32 32, %s30
      %p573 = scmp.lt.s32.totalorder %s572, 63
      %s574 = scalar_select %p573, %s572, 63
      %s575 = smul.addr %s574, 7
      %s576 = smul.addr %s575, 8
      %s577 = scalar_lea.vmem %s18, %s576
      %s578 = smul.u32 32, %s30
      %p579 = scmp.lt.s32.totalorder %s578, 63
      %s580 = scalar_select %p579, %s578, 63
      %s581 = smul.addr %s580, 7
      %s582 = smul.addr %s581, 8
      %s583 = scalar_lea.vmem %s0, %s582
      %s584 = smul.u32 32, %s30
      %s585 = smul.u32 32, %s30
      %p586 = scmp.lt.s32.totalorder %s585, 63
      %s587 = scalar_select %p586, %s585, 63
      %s588 = smul.addr %s587, 8
      %s589 = scalar_lea.vmem %s17, %s588
      %s590 = smul.u32 32, %s30
      %s591 = smul.u32 32, %s30
      %p592 = scmp.lt.s32.totalorder %s591, 63
      %s593 = scalar_select %p592, %s591, 63
      %s594 = smul.addr %s593, 7
      %s595 = smul.addr %s594, 8
      %s596 = scalar_lea.vmem %s18, %s595
      %s597 = smul.u32 32, %s30
      %v599 = vld [vmem:[%s583] sm:$0xff]
      %v600 = vld [vmem:[%s583 + $0x8] sm:$0xff]
      %v601 = vld [vmem:[%s583 + $0x10] sm:$0xff]
      %v602 = vld [vmem:[%s583 + $0x18] sm:$0xff]
      %v603 = vld [vmem:[%s583 + $0x20] sm:$0xff]
      %v604 = vld [vmem:[%s583 + $0x28] sm:$0xff]
      %v605 = vld [vmem:[%s583 + $0x30] sm:$0xff]
      %v606 = vld [vmem:[%s583 + $0x38] sm:$0xff]
      %v607 = vld [vmem:[%s583 + $0x40] sm:$0xff]
      %v608 = vld [vmem:[%s583 + $0x48] sm:$0xff]
      %v609 = vld [vmem:[%s583 + $0x50] sm:$0xff]
      %v610 = vld [vmem:[%s583 + $0x58] sm:$0xff]
      %v611 = vld [vmem:[%s583 + $0x60] sm:$0xff]
      %v612 = vld [vmem:[%s583 + $0x68] sm:$0xff]
      %v613 = vld [vmem:[%s583 + $0x70] sm:$0xff]
      %v614 = vld [vmem:[%s583 + $0x78] sm:$0xff]
      %v615 = vld [vmem:[%s583 + $0x80] sm:$0xff]
      %v616 = vld [vmem:[%s583 + $0x88] sm:$0xff]
      %v617 = vld [vmem:[%s583 + $0x90] sm:$0xff]
      %v618 = vld [vmem:[%s583 + $0x98] sm:$0xff]
      %v619 = vld [vmem:[%s583 + $0xa0] sm:$0xff]
      %v620 = vld [vmem:[%s583 + $0xa8] sm:$0xff]
      %v621 = vld [vmem:[%s583 + $0xb0] sm:$0xff]
      %v622 = vld [vmem:[%s583 + $0xb8] sm:$0xff]
      %v623 = vld [vmem:[%s583 + $0xc0] sm:$0xff]
      %v624 = vld [vmem:[%s583 + $0xc8] sm:$0xff]
      %v625 = vld [vmem:[%s583 + $0xd0] sm:$0xff]
      %v626 = vld [vmem:[%s583 + $0xd8] sm:$0xff]
      %v627 = vld [vmem:[%s583 + $0xe0] sm:$0xff]
      %v628 = vld [vmem:[%s583 + $0xe8] sm:$0xff]
      %v629 = vld [vmem:[%s583 + $0xf0] sm:$0xff]
      %v630 = vld [vmem:[%s583 + $0xf8] sm:$0xff]
      %v631 = vld [vmem:[%s583 + $0x100] sm:$0xff]
      %v632 = vld [vmem:[%s583 + $0x108] sm:$0xff]
      %v633 = vld [vmem:[%s583 + $0x110] sm:$0xff]
      %v634 = vld [vmem:[%s583 + $0x118] sm:$0xff]
      %v635 = vld [vmem:[%s583 + $0x120] sm:$0xff]
      %v636 = vld [vmem:[%s583 + $0x128] sm:$0xff]
      %v637 = vld [vmem:[%s583 + $0x130] sm:$0xff]
      %v638 = vld [vmem:[%s583 + $0x138] sm:$0xff]
      %v639 = vld [vmem:[%s583 + $0x140] sm:$0xff]
      %v640 = vld [vmem:[%s583 + $0x148] sm:$0xff]
      %v641 = vld [vmem:[%s583 + $0x150] sm:$0xff]
      %v642 = vld [vmem:[%s583 + $0x158] sm:$0xff]
      %v643 = vld [vmem:[%s583 + $0x160] sm:$0xff]
      %v644 = vld [vmem:[%s583 + $0x168] sm:$0xff]
      %v645 = vld [vmem:[%s583 + $0x170] sm:$0xff]
      %v646 = vld [vmem:[%s583 + $0x178] sm:$0xff]
      %v647 = vld [vmem:[%s583 + $0x180] sm:$0xff]
      %v648 = vld [vmem:[%s583 + $0x188] sm:$0xff]
      %v649 = vld [vmem:[%s583 + $0x190] sm:$0xff]
      %v650 = vld [vmem:[%s583 + $0x198] sm:$0xff]
      %v651 = vld [vmem:[%s583 + $0x1a0] sm:$0xff]
      %v652 = vld [vmem:[%s583 + $0x1a8] sm:$0xff]
      %v653 = vld [vmem:[%s583 + $0x1b0] sm:$0xff]
      %v654 = vld [vmem:[%s583 + $0x1b8] sm:$0xff]
      %v655 = vld [vmem:[%s583 + $0x1c0] sm:$0xff]
      %v656 = vld [vmem:[%s583 + $0x1c8] sm:$0xff]
      %v657 = vld [vmem:[%s583 + $0x1d0] sm:$0xff]
      %v658 = vld [vmem:[%s583 + $0x1d8] sm:$0xff]
      %v659 = vld [vmem:[%s583 + $0x1e0] sm:$0xff]
      %v660 = vld [vmem:[%s583 + $0x1e8] sm:$0xff]
      %v661 = vld [vmem:[%s583 + $0x1f0] sm:$0xff]
      %v662 = vld [vmem:[%s583 + $0x1f8] sm:$0xff]
      %v663 = vld [vmem:[%s583 + $0x200] sm:$0xff]
      %v664 = vld [vmem:[%s583 + $0x208] sm:$0xff]
      %v665 = vld [vmem:[%s583 + $0x210] sm:$0xff]
      %v666 = vld [vmem:[%s583 + $0x218] sm:$0xff]
      %v667 = vld [vmem:[%s583 + $0x220] sm:$0xff]
      %v668 = vld [vmem:[%s583 + $0x228] sm:$0xff]
      %v669 = vld [vmem:[%s583 + $0x230] sm:$0xff]
      %v670 = vld [vmem:[%s583 + $0x238] sm:$0xff]
      %v671 = vld [vmem:[%s583 + $0x240] sm:$0xff]
      %v672 = vld [vmem:[%s583 + $0x248] sm:$0xff]
      %v673 = vld [vmem:[%s583 + $0x250] sm:$0xff]
      %v674 = vld [vmem:[%s583 + $0x258] sm:$0xff]
      %v675 = vld [vmem:[%s583 + $0x260] sm:$0xff]
      %v676 = vld [vmem:[%s583 + $0x268] sm:$0xff]
      %v677 = vld [vmem:[%s583 + $0x270] sm:$0xff]
      %v678 = vld [vmem:[%s583 + $0x278] sm:$0xff]
      %v679 = vld [vmem:[%s583 + $0x280] sm:$0xff]
      %v680 = vld [vmem:[%s583 + $0x288] sm:$0xff]
      %v681 = vld [vmem:[%s583 + $0x290] sm:$0xff]
      %v682 = vld [vmem:[%s583 + $0x298] sm:$0xff]
      %v683 = vld [vmem:[%s583 + $0x2a0] sm:$0xff]
      %v684 = vld [vmem:[%s583 + $0x2a8] sm:$0xff]
      %v685 = vld [vmem:[%s583 + $0x2b0] sm:$0xff]
      %v686 = vld [vmem:[%s583 + $0x2b8] sm:$0xff]
      %v687 = vld [vmem:[%s583 + $0x2c0] sm:$0xff]
      %v688 = vld [vmem:[%s583 + $0x2c8] sm:$0xff]
      %v689 = vld [vmem:[%s583 + $0x2d0] sm:$0xff]
      %v690 = vld [vmem:[%s583 + $0x2d8] sm:$0xff]
      %v691 = vld [vmem:[%s583 + $0x2e0] sm:$0xff]
      %v692 = vld [vmem:[%s583 + $0x2e8] sm:$0xff]
      %v693 = vld [vmem:[%s583 + $0x2f0] sm:$0xff]
      %v694 = vld [vmem:[%s583 + $0x2f8] sm:$0xff]
      %v695 = vld [vmem:[%s583 + $0x300] sm:$0xff]
      %v696 = vld [vmem:[%s583 + $0x308] sm:$0xff]
      %v697 = vld [vmem:[%s583 + $0x310] sm:$0xff]
      %v698 = vld [vmem:[%s583 + $0x318] sm:$0xff]
      %v699 = vld [vmem:[%s583 + $0x320] sm:$0xff]
      %v700 = vld [vmem:[%s583 + $0x328] sm:$0xff]
      %v701 = vld [vmem:[%s583 + $0x330] sm:$0xff]
      %v702 = vld [vmem:[%s583 + $0x338] sm:$0xff]
      %v703 = vld [vmem:[%s583 + $0x340] sm:$0xff]
      %v704 = vld [vmem:[%s583 + $0x348] sm:$0xff]
      %v705 = vld [vmem:[%s583 + $0x350] sm:$0xff]
      %v706 = vld [vmem:[%s583 + $0x358] sm:$0xff]
      %v707 = vld [vmem:[%s583 + $0x360] sm:$0xff]
      %v708 = vld [vmem:[%s583 + $0x368] sm:$0xff]
      %v709 = vld [vmem:[%s583 + $0x370] sm:$0xff]
      %v710 = vld [vmem:[%s583 + $0x378] sm:$0xff]
      %v711 = vld [vmem:[%s583 + $0x380] sm:$0xff]
      %v712 = vld [vmem:[%s583 + $0x388] sm:$0xff]
      %v713 = vld [vmem:[%s583 + $0x390] sm:$0xff]
      %v714 = vld [vmem:[%s583 + $0x398] sm:$0xff]
      %v715 = vld [vmem:[%s583 + $0x3a0] sm:$0xff]
      %v716 = vld [vmem:[%s583 + $0x3a8] sm:$0xff]
      %v717 = vld [vmem:[%s583 + $0x3b0] sm:$0xff]
      %v718 = vld [vmem:[%s583 + $0x3b8] sm:$0xff]
      %v719 = vld [vmem:[%s583 + $0x3c0] sm:$0xff]
      %v720 = vld [vmem:[%s583 + $0x3c8] sm:$0xff]
      %v721 = vld [vmem:[%s583 + $0x3d0] sm:$0xff]
      %v722 = vld [vmem:[%s583 + $0x3d8] sm:$0xff]
      %v723 = vld [vmem:[%s583 + $0x3e0] sm:$0xff]
      %v724 = vld [vmem:[%s583 + $0x3e8] sm:$0xff]
      %v725 = vld [vmem:[%s583 + $0x3f0] sm:$0xff]
      %v726 = vld [vmem:[%s583 + $0x3f8] sm:$0xff]
      %v727 = vld [vmem:[%s583 + $0x400] sm:$0xff]
      %v728 = vld [vmem:[%s583 + $0x408] sm:$0xff]
      %v729 = vld [vmem:[%s583 + $0x410] sm:$0xff]
      %v730 = vld [vmem:[%s583 + $0x418] sm:$0xff]
      %v731 = vld [vmem:[%s583 + $0x420] sm:$0xff]
      %v732 = vld [vmem:[%s583 + $0x428] sm:$0xff]
      %v733 = vld [vmem:[%s583 + $0x430] sm:$0xff]
      %v734 = vld [vmem:[%s583 + $0x438] sm:$0xff]
      %v735 = vld [vmem:[%s583 + $0x440] sm:$0xff]
      %v736 = vld [vmem:[%s583 + $0x448] sm:$0xff]
      %v737 = vld [vmem:[%s583 + $0x450] sm:$0xff]
      %v738 = vld [vmem:[%s583 + $0x458] sm:$0xff]
      %v739 = vld [vmem:[%s583 + $0x460] sm:$0xff]
      %v740 = vld [vmem:[%s583 + $0x468] sm:$0xff]
      %v741 = vld [vmem:[%s583 + $0x470] sm:$0xff]
      %v742 = vld [vmem:[%s583 + $0x478] sm:$0xff]
      %v743 = vld [vmem:[%s583 + $0x480] sm:$0xff]
      %v744 = vld [vmem:[%s583 + $0x488] sm:$0xff]
      %v745 = vld [vmem:[%s583 + $0x490] sm:$0xff]
      %v746 = vld [vmem:[%s583 + $0x498] sm:$0xff]
      %v747 = vld [vmem:[%s583 + $0x4a0] sm:$0xff]
      %v748 = vld [vmem:[%s583 + $0x4a8] sm:$0xff]
      %v749 = vld [vmem:[%s583 + $0x4b0] sm:$0xff]
      %v750 = vld [vmem:[%s583 + $0x4b8] sm:$0xff]
      %v751 = vld [vmem:[%s583 + $0x4c0] sm:$0xff]
      %v752 = vld [vmem:[%s583 + $0x4c8] sm:$0xff]
      %v753 = vld [vmem:[%s583 + $0x4d0] sm:$0xff]
      %v754 = vld [vmem:[%s583 + $0x4d8] sm:$0xff]
      %v755 = vld [vmem:[%s583 + $0x4e0] sm:$0xff]
      %v756 = vld [vmem:[%s583 + $0x4e8] sm:$0xff]
      %v757 = vld [vmem:[%s583 + $0x4f0] sm:$0xff]
      %v758 = vld [vmem:[%s583 + $0x4f8] sm:$0xff]
      %v759 = vld [vmem:[%s583 + $0x500] sm:$0xff]
      %v760 = vld [vmem:[%s583 + $0x508] sm:$0xff]
      %v761 = vld [vmem:[%s583 + $0x510] sm:$0xff]
      %v762 = vld [vmem:[%s583 + $0x518] sm:$0xff]
      %v763 = vld [vmem:[%s583 + $0x520] sm:$0xff]
      %v764 = vld [vmem:[%s583 + $0x528] sm:$0xff]
      %v765 = vld [vmem:[%s583 + $0x530] sm:$0xff]
      %v766 = vld [vmem:[%s583 + $0x538] sm:$0xff]
      %v767 = vld [vmem:[%s583 + $0x540] sm:$0xff]
      %v768 = vld [vmem:[%s583 + $0x548] sm:$0xff]
      %v769 = vld [vmem:[%s583 + $0x550] sm:$0xff]
      %v770 = vld [vmem:[%s583 + $0x558] sm:$0xff]
      %v771 = vld [vmem:[%s583 + $0x560] sm:$0xff]
      %v772 = vld [vmem:[%s583 + $0x568] sm:$0xff]
      %v773 = vld [vmem:[%s583 + $0x570] sm:$0xff]
      %v774 = vld [vmem:[%s583 + $0x578] sm:$0xff]
      %v775 = vld [vmem:[%s583 + $0x580] sm:$0xff]
      %v776 = vld [vmem:[%s583 + $0x588] sm:$0xff]
      %v777 = vld [vmem:[%s583 + $0x590] sm:$0xff]
      %v778 = vld [vmem:[%s583 + $0x598] sm:$0xff]
      %v779 = vld [vmem:[%s583 + $0x5a0] sm:$0xff]
      %v780 = vld [vmem:[%s583 + $0x5a8] sm:$0xff]
      %v781 = vld [vmem:[%s583 + $0x5b0] sm:$0xff]
      %v782 = vld [vmem:[%s583 + $0x5b8] sm:$0xff]
      %v783 = vld [vmem:[%s583 + $0x5c0] sm:$0xff]
      %v784 = vld [vmem:[%s583 + $0x5c8] sm:$0xff]
      %v785 = vld [vmem:[%s583 + $0x5d0] sm:$0xff]
      %v786 = vld [vmem:[%s583 + $0x5d8] sm:$0xff]
      %v787 = vld [vmem:[%s583 + $0x5e0] sm:$0xff]
      %v788 = vld [vmem:[%s583 + $0x5e8] sm:$0xff]
      %v789 = vld [vmem:[%s583 + $0x5f0] sm:$0xff]
      %v790 = vld [vmem:[%s583 + $0x5f8] sm:$0xff]
      %v791 = vld [vmem:[%s583 + $0x600] sm:$0xff]
      %v792 = vld [vmem:[%s583 + $0x608] sm:$0xff]
      %v793 = vld [vmem:[%s583 + $0x610] sm:$0xff]
      %v794 = vld [vmem:[%s583 + $0x618] sm:$0xff]
      %v795 = vld [vmem:[%s583 + $0x620] sm:$0xff]
      %v796 = vld [vmem:[%s583 + $0x628] sm:$0xff]
      %v797 = vld [vmem:[%s583 + $0x630] sm:$0xff]
      %v798 = vld [vmem:[%s583 + $0x638] sm:$0xff]
      %v799 = vld [vmem:[%s583 + $0x640] sm:$0xff]
      %v800 = vld [vmem:[%s583 + $0x648] sm:$0xff]
      %v801 = vld [vmem:[%s583 + $0x650] sm:$0xff]
      %v802 = vld [vmem:[%s583 + $0x658] sm:$0xff]
      %v803 = vld [vmem:[%s583 + $0x660] sm:$0xff]
      %v804 = vld [vmem:[%s583 + $0x668] sm:$0xff]
      %v805 = vld [vmem:[%s583 + $0x670] sm:$0xff]
      %v806 = vld [vmem:[%s583 + $0x678] sm:$0xff]
      %v807 = vld [vmem:[%s583 + $0x680] sm:$0xff]
      %v808 = vld [vmem:[%s583 + $0x688] sm:$0xff]
      %v809 = vld [vmem:[%s583 + $0x690] sm:$0xff]
      %v810 = vld [vmem:[%s583 + $0x698] sm:$0xff]
      %v811 = vld [vmem:[%s583 + $0x6a0] sm:$0xff]
      %v812 = vld [vmem:[%s583 + $0x6a8] sm:$0xff]
      %v813 = vld [vmem:[%s583 + $0x6b0] sm:$0xff]
      %v814 = vld [vmem:[%s583 + $0x6b8] sm:$0xff]
      %v815 = vld [vmem:[%s583 + $0x6c0] sm:$0xff]
      %v816 = vld [vmem:[%s583 + $0x6c8] sm:$0xff]
      %v817 = vld [vmem:[%s583 + $0x6d0] sm:$0xff]
      %v818 = vld [vmem:[%s583 + $0x6d8] sm:$0xff]
      %v819 = vld [vmem:[%s583 + $0x6e0] sm:$0xff]
      %v820 = vld [vmem:[%s583 + $0x6e8] sm:$0xff]
      %v821 = vld [vmem:[%s583 + $0x6f0] sm:$0xff]
      %v822 = vld [vmem:[%s583 + $0x6f8] sm:$0xff]
      %v823 = vpack.c.bf16 %v606, %v599
      %v824 = vpack.c.bf16 %v607, %v600
      %v825 = vpack.c.bf16 %v608, %v601
      %v826 = vpack.c.bf16 %v609, %v602
      %v827 = vpack.c.bf16 %v610, %v603
      %v828 = vpack.c.bf16 %v611, %v604
      %v829 = vpack.c.bf16 %v612, %v605
      %v830 = vpack.c.bf16 %v620, %v613
      %v831 = vpack.c.bf16 %v621, %v614
      %v832 = vpack.c.bf16 %v622, %v615
      %v833 = vpack.c.bf16 %v623, %v616
      %v834 = vpack.c.bf16 %v624, %v617
      %v835 = vpack.c.bf16 %v625, %v618
      %v836 = vpack.c.bf16 %v626, %v619
      %v837 = vpack.c.bf16 %v634, %v627
      %v838 = vpack.c.bf16 %v635, %v628
      %v839 = vpack.c.bf16 %v636, %v629
      %v840 = vpack.c.bf16 %v637, %v630
      %v841 = vpack.c.bf16 %v638, %v631
      %v842 = vpack.c.bf16 %v639, %v632
      %v843 = vpack.c.bf16 %v640, %v633
      %v844 = vpack.c.bf16 %v648, %v641
      %v845 = vpack.c.bf16 %v649, %v642
      %v846 = vpack.c.bf16 %v650, %v643
      %v847 = vpack.c.bf16 %v651, %v644
      %v848 = vpack.c.bf16 %v652, %v645
      %v849 = vpack.c.bf16 %v653, %v646
      %v850 = vpack.c.bf16 %v654, %v647
      %v851 = vpack.c.bf16 %v662, %v655
      %v852 = vpack.c.bf16 %v663, %v656
      %v853 = vpack.c.bf16 %v664, %v657
      %v854 = vpack.c.bf16 %v665, %v658
      %v855 = vpack.c.bf16 %v666, %v659
      %v856 = vpack.c.bf16 %v667, %v660
      %v857 = vpack.c.bf16 %v668, %v661
      %v858 = vpack.c.bf16 %v676, %v669
      %v859 = vpack.c.bf16 %v677, %v670
      %v860 = vpack.c.bf16 %v678, %v671
      %v861 = vpack.c.bf16 %v679, %v672
      %v862 = vpack.c.bf16 %v680, %v673
      %v863 = vpack.c.bf16 %v681, %v674
      %v864 = vpack.c.bf16 %v682, %v675
      %v865 = vpack.c.bf16 %v690, %v683
      %v866 = vpack.c.bf16 %v691, %v684
      %v867 = vpack.c.bf16 %v692, %v685
      %v868 = vpack.c.bf16 %v693, %v686
      %v869 = vpack.c.bf16 %v694, %v687
      %v870 = vpack.c.bf16 %v695, %v688
      %v871 = vpack.c.bf16 %v696, %v689
      %v872 = vpack.c.bf16 %v704, %v697
      %v873 = vpack.c.bf16 %v705, %v698
      %v874 = vpack.c.bf16 %v706, %v699
      %v875 = vpack.c.bf16 %v707, %v700
      %v876 = vpack.c.bf16 %v708, %v701
      %v877 = vpack.c.bf16 %v709, %v702
      %v878 = vpack.c.bf16 %v710, %v703
      %v879 = vpack.c.bf16 %v718, %v711
      %v880 = vpack.c.bf16 %v719, %v712
      %v881 = vpack.c.bf16 %v720, %v713
      %v882 = vpack.c.bf16 %v721, %v714
      %v883 = vpack.c.bf16 %v722, %v715
      %v884 = vpack.c.bf16 %v723, %v716
      %v885 = vpack.c.bf16 %v724, %v717
      %v886 = vpack.c.bf16 %v732, %v725
      %v887 = vpack.c.bf16 %v733, %v726
      %v888 = vpack.c.bf16 %v734, %v727
      %v889 = vpack.c.bf16 %v735, %v728
      %v890 = vpack.c.bf16 %v736, %v729
      %v891 = vpack.c.bf16 %v737, %v730
      %v892 = vpack.c.bf16 %v738, %v731
      %v893 = vpack.c.bf16 %v746, %v739
      %v894 = vpack.c.bf16 %v747, %v740
      %v895 = vpack.c.bf16 %v748, %v741
      %v896 = vpack.c.bf16 %v749, %v742
      %v897 = vpack.c.bf16 %v750, %v743
      %v898 = vpack.c.bf16 %v751, %v744
      %v899 = vpack.c.bf16 %v752, %v745
      %v900 = vpack.c.bf16 %v760, %v753
      %v901 = vpack.c.bf16 %v761, %v754
      %v902 = vpack.c.bf16 %v762, %v755
      %v903 = vpack.c.bf16 %v763, %v756
      %v904 = vpack.c.bf16 %v764, %v757
      %v905 = vpack.c.bf16 %v765, %v758
      %v906 = vpack.c.bf16 %v766, %v759
      %v907 = vpack.c.bf16 %v774, %v767
      %v908 = vpack.c.bf16 %v775, %v768
      %v909 = vpack.c.bf16 %v776, %v769
      %v910 = vpack.c.bf16 %v777, %v770
      %v911 = vpack.c.bf16 %v778, %v771
      %v912 = vpack.c.bf16 %v779, %v772
      %v913 = vpack.c.bf16 %v780, %v773
      %v914 = vpack.c.bf16 %v788, %v781
      %v915 = vpack.c.bf16 %v789, %v782
      %v916 = vpack.c.bf16 %v790, %v783
      %v917 = vpack.c.bf16 %v791, %v784
      %v918 = vpack.c.bf16 %v792, %v785
      %v919 = vpack.c.bf16 %v793, %v786
      %v920 = vpack.c.bf16 %v794, %v787
      %v921 = vpack.c.bf16 %v802, %v795
      %v922 = vpack.c.bf16 %v803, %v796
      %v923 = vpack.c.bf16 %v804, %v797
      %v924 = vpack.c.bf16 %v805, %v798
      %v925 = vpack.c.bf16 %v806, %v799
      %v926 = vpack.c.bf16 %v807, %v800
      %v927 = vpack.c.bf16 %v808, %v801
      %v928 = vpack.c.bf16 %v816, %v809
      %v929 = vpack.c.bf16 %v817, %v810
      %v930 = vpack.c.bf16 %v818, %v811
      %v931 = vpack.c.bf16 %v819, %v812
      %v932 = vpack.c.bf16 %v820, %v813
      %v933 = vpack.c.bf16 %v821, %v814
      %v934 = vpack.c.bf16 %v822, %v815
      %v935 = vld [vmem:[%s1] sm:$0xf]
      %v936 = vld [vmem:[%s1 + $0x4] sm:$0xf]
      %v937 = vld [vmem:[%s1 + $0x8] sm:$0xf]
      %v938 = vld [vmem:[%s1 + $0xc] sm:$0xf]
      %v939 = vld [vmem:[%s1 + $0x10] sm:$0xf]
      %v940 = vld [vmem:[%s1 + $0x14] sm:$0xf]
      %v941 = vld [vmem:[%s1 + $0x18] sm:$0xf]
      %v942 = vld [vmem:[%s1 + $0x1c] sm:$0xf]
      %v943 = vld [vmem:[%s1 + $0x20] sm:$0xf]
      %v944 = vld [vmem:[%s1 + $0x24] sm:$0xf]
      %v945 = vld [vmem:[%s1 + $0x28] sm:$0xf]
      %v946 = vld [vmem:[%s1 + $0x2c] sm:$0xf]
      %v947 = vld [vmem:[%s1 + $0x30] sm:$0xf]
      %v948 = vld [vmem:[%s1 + $0x34] sm:$0xf]
      %v949 = vld [vmem:[%s1 + $0x38] sm:$0xf]
      %v950 = vld [vmem:[%s1 + $0x3c] sm:$0xf]
      %v951 = vld [vmem:[%s1 + $0x40] sm:$0xf]
      %v952 = vld [vmem:[%s1 + $0x44] sm:$0xf]
      %v953 = vld [vmem:[%s1 + $0x48] sm:$0xf]
      %v954 = vld [vmem:[%s1 + $0x4c] sm:$0xf]
      %v955 = vld [vmem:[%s1 + $0x50] sm:$0xf]
      %v956 = vld [vmem:[%s1 + $0x54] sm:$0xf]
      %v957 = vld [vmem:[%s1 + $0x58] sm:$0xf]
      %v958 = vld [vmem:[%s1 + $0x5c] sm:$0xf]
      %v959 = vld [vmem:[%s1 + $0x60] sm:$0xf]
      %v960 = vld [vmem:[%s1 + $0x64] sm:$0xf]
      %v961 = vld [vmem:[%s1 + $0x68] sm:$0xf]
      %v962 = vld [vmem:[%s1 + $0x6c] sm:$0xf]
      %v963 = vld [vmem:[%s1 + $0x70] sm:$0xf]
      %v964 = vld [vmem:[%s1 + $0x74] sm:$0xf]
      %v965 = vld [vmem:[%s1 + $0x78] sm:$0xf]
      %v966 = vld [vmem:[%s1 + $0x7c] sm:$0xf]
      %v967 = vld [vmem:[%s1 + $0x80] sm:$0xf]
      %v968 = vld [vmem:[%s1 + $0x84] sm:$0xf]
      %v969 = vld [vmem:[%s1 + $0x88] sm:$0xf]
      %v970 = vld [vmem:[%s1 + $0x8c] sm:$0xf]
      %v971 = vld [vmem:[%s1 + $0x90] sm:$0xf]
      %v972 = vld [vmem:[%s1 + $0x94] sm:$0xf]
      %v973 = vld [vmem:[%s1 + $0x98] sm:$0xf]
      %v974 = vld [vmem:[%s1 + $0x9c] sm:$0xf]
      %v975 = vld [vmem:[%s1 + $0xa0] sm:$0xf]
      %v976 = vld [vmem:[%s1 + $0xa4] sm:$0xf]
      %v977 = vld [vmem:[%s1 + $0xa8] sm:$0xf]
      %v978 = vld [vmem:[%s1 + $0xac] sm:$0xf]
      %v979 = vld [vmem:[%s1 + $0xb0] sm:$0xf]
      %v980 = vld [vmem:[%s1 + $0xb4] sm:$0xf]
      %v981 = vld [vmem:[%s1 + $0xb8] sm:$0xf]
      %v982 = vld [vmem:[%s1 + $0xbc] sm:$0xf]
      %v983 = vld [vmem:[%s1 + $0xc0] sm:$0xf]
      %v984 = vld [vmem:[%s1 + $0xc4] sm:$0xf]
      %v985 = vld [vmem:[%s1 + $0xc8] sm:$0xf]
      %v986 = vld [vmem:[%s1 + $0xcc] sm:$0xf]
      %v987 = vld [vmem:[%s1 + $0xd0] sm:$0xf]
      %v988 = vld [vmem:[%s1 + $0xd4] sm:$0xf]
      %v989 = vld [vmem:[%s1 + $0xd8] sm:$0xf]
      %v990 = vld [vmem:[%s1 + $0xdc] sm:$0xf]
      %v991 = vld [vmem:[%s1 + $0xe0] sm:$0xf]
      %v992 = vld [vmem:[%s1 + $0xe4] sm:$0xf]
      %v993 = vld [vmem:[%s1 + $0xe8] sm:$0xf]
      %v994 = vld [vmem:[%s1 + $0xec] sm:$0xf]
      %v995 = vld [vmem:[%s1 + $0xf0] sm:$0xf]
      %v996 = vld [vmem:[%s1 + $0xf4] sm:$0xf]
      %v997 = vld [vmem:[%s1 + $0xf8] sm:$0xf]
      %v998 = vld [vmem:[%s1 + $0xfc] sm:$0xf]
      %v999 = vld [vmem:[%s1 + $0x100] sm:$0xf]
      %v1000 = vld [vmem:[%s1 + $0x104] sm:$0xf]
      %v1001 = vld [vmem:[%s1 + $0x108] sm:$0xf]
      %v1002 = vld [vmem:[%s1 + $0x10c] sm:$0xf]
      %v1003 = vld [vmem:[%s1 + $0x110] sm:$0xf]
      %v1004 = vld [vmem:[%s1 + $0x114] sm:$0xf]
      %v1005 = vld [vmem:[%s1 + $0x118] sm:$0xf]
      %v1006 = vld [vmem:[%s1 + $0x11c] sm:$0xf]
      %v1007 = vld [vmem:[%s1 + $0x120] sm:$0xf]
      %v1008 = vld [vmem:[%s1 + $0x124] sm:$0xf]
      %v1009 = vld [vmem:[%s1 + $0x128] sm:$0xf]
      %v1010 = vld [vmem:[%s1 + $0x12c] sm:$0xf]
      %v1011 = vld [vmem:[%s1 + $0x130] sm:$0xf]
      %v1012 = vld [vmem:[%s1 + $0x134] sm:$0xf]
      %v1013 = vld [vmem:[%s1 + $0x138] sm:$0xf]
      %v1014 = vld [vmem:[%s1 + $0x13c] sm:$0xf]
      %v1015 = vld [vmem:[%s1 + $0x140] sm:$0xf]
      %v1016 = vld [vmem:[%s1 + $0x144] sm:$0xf]
      %v1017 = vld [vmem:[%s1 + $0x148] sm:$0xf]
      %v1018 = vld [vmem:[%s1 + $0x14c] sm:$0xf]
      %v1019 = vld [vmem:[%s1 + $0x150] sm:$0xf]
      %v1020 = vld [vmem:[%s1 + $0x154] sm:$0xf]
      %v1021 = vld [vmem:[%s1 + $0x158] sm:$0xf]
      %v1022 = vld [vmem:[%s1 + $0x15c] sm:$0xf]
      %v1023 = vld [vmem:[%s1 + $0x160] sm:$0xf]
      %v1024 = vld [vmem:[%s1 + $0x164] sm:$0xf]
      %v1025 = vld [vmem:[%s1 + $0x168] sm:$0xf]
      %v1026 = vld [vmem:[%s1 + $0x16c] sm:$0xf]
      %v1027 = vld [vmem:[%s1 + $0x170] sm:$0xf]
      %v1028 = vld [vmem:[%s1 + $0x174] sm:$0xf]
      %v1029 = vld [vmem:[%s1 + $0x178] sm:$0xf]
      %v1030 = vld [vmem:[%s1 + $0x17c] sm:$0xf]
      %v1031 = vld [vmem:[%s1 + $0x180] sm:$0xf]
      %v1032 = vld [vmem:[%s1 + $0x184] sm:$0xf]
      %v1033 = vld [vmem:[%s9] sm:$0x1]
      %v1035 = vlaneseq
      %v1036 = vshrl.u32 %v1035, 7
      %v1037 = vsub.s32 0, %v1036
      %v1038 = vrot.slane %v1033, %v1037
      %v1138 = vunpack.c.l.b16 %v935
      %v1139 = vunpack.c.l.b16 %v936
      %v1140 = vunpack.c.l.b16 %v937
      %v1141 = vunpack.c.l.b16 %v938
      %v1142 = vunpack.c.l.b16 %v939
      %v1143 = vunpack.c.l.b16 %v940
      %v1144 = vunpack.c.l.b16 %v941
      %v1145 = vunpack.c.l.b16 %v942
      %v1146 = vunpack.c.l.b16 %v943
      %v1147 = vunpack.c.l.b16 %v944
      %v1148 = vunpack.c.l.b16 %v945
      %v1149 = vunpack.c.l.b16 %v946
      %v1150 = vunpack.c.l.b16 %v947
      %v1151 = vunpack.c.l.b16 %v948
      %v1152 = vunpack.c.l.b16 %v949
      %v1153 = vunpack.c.l.b16 %v950
      %v1154 = vunpack.c.l.b16 %v951
      %v1155 = vunpack.c.l.b16 %v952
      %v1156 = vunpack.c.l.b16 %v953
      %v1157 = vunpack.c.l.b16 %v954
      %v1158 = vunpack.c.l.b16 %v955
      %v1159 = vunpack.c.l.b16 %v956
      %v1160 = vunpack.c.l.b16 %v957
      %v1161 = vunpack.c.l.b16 %v958
      %v1162 = vunpack.c.l.b16 %v959
      %v1163 = vunpack.c.l.b16 %v960
      %v1164 = vunpack.c.l.b16 %v961
      %v1165 = vunpack.c.l.b16 %v962
      %v1166 = vunpack.c.l.b16 %v963
      %v1167 = vunpack.c.l.b16 %v964
      %v1168 = vunpack.c.l.b16 %v965
      %v1169 = vunpack.c.l.b16 %v966
      %v1170 = vunpack.c.l.b16 %v967
      %v1171 = vunpack.c.l.b16 %v968
      %v1172 = vunpack.c.l.b16 %v969
      %v1173 = vunpack.c.l.b16 %v970
      %v1174 = vunpack.c.l.b16 %v971
      %v1175 = vunpack.c.l.b16 %v972
      %v1176 = vunpack.c.l.b16 %v973
      %v1177 = vunpack.c.l.b16 %v974
      %v1178 = vunpack.c.l.b16 %v975
      %v1179 = vunpack.c.l.b16 %v976
      %v1180 = vunpack.c.l.b16 %v977
      %v1181 = vunpack.c.l.b16 %v978
      %v1182 = vunpack.c.l.b16 %v979
      %v1183 = vunpack.c.l.b16 %v980
      %v1184 = vunpack.c.l.b16 %v981
      %v1185 = vunpack.c.l.b16 %v982
      %v1186 = vunpack.c.l.b16 %v983
      %v1187 = vunpack.c.l.b16 %v984
      %v1188 = vunpack.c.l.b16 %v985
      %v1189 = vunpack.c.l.b16 %v986
      %v1190 = vunpack.c.l.b16 %v987
      %v1191 = vunpack.c.l.b16 %v988
      %v1192 = vunpack.c.l.b16 %v989
      %v1193 = vunpack.c.l.b16 %v990
      %v1194 = vunpack.c.l.b16 %v991
      %v1195 = vunpack.c.l.b16 %v992
      %v1196 = vunpack.c.l.b16 %v993
      %v1197 = vunpack.c.l.b16 %v994
      %v1198 = vunpack.c.l.b16 %v995
      %v1199 = vunpack.c.l.b16 %v996
      %v1200 = vunpack.c.l.b16 %v997
      %v1201 = vunpack.c.l.b16 %v998
      %v1202 = vunpack.c.l.b16 %v999
      %v1203 = vunpack.c.l.b16 %v1000
      %v1204 = vunpack.c.l.b16 %v1001
      %v1205 = vunpack.c.l.b16 %v1002
      %v1206 = vunpack.c.l.b16 %v1003
      %v1207 = vunpack.c.l.b16 %v1004
      %v1208 = vunpack.c.l.b16 %v1005
      %v1209 = vunpack.c.l.b16 %v1006
      %v1210 = vunpack.c.l.b16 %v1007
      %v1211 = vunpack.c.l.b16 %v1008
      %v1212 = vunpack.c.l.b16 %v1009
      %v1213 = vunpack.c.l.b16 %v1010
      %v1214 = vunpack.c.l.b16 %v1011
      %v1215 = vunpack.c.l.b16 %v1012
      %v1216 = vunpack.c.l.b16 %v1013
      %v1217 = vunpack.c.l.b16 %v1014
      %v1218 = vunpack.c.l.b16 %v1015
      %v1219 = vunpack.c.l.b16 %v1016
      %v1220 = vunpack.c.l.b16 %v1017
      %v1221 = vunpack.c.l.b16 %v1018
      %v1222 = vunpack.c.l.b16 %v1019
      %v1223 = vunpack.c.l.b16 %v1020
      %v1224 = vunpack.c.l.b16 %v1021
      %v1225 = vunpack.c.l.b16 %v1022
      %v1226 = vunpack.c.l.b16 %v1023
      %v1227 = vunpack.c.l.b16 %v1024
      %v1228 = vunpack.c.l.b16 %v1025
      %v1229 = vunpack.c.l.b16 %v1026
      %v1230 = vunpack.c.l.b16 %v1027
      %v1231 = vunpack.c.l.b16 %v1028
      %v1232 = vunpack.c.l.b16 %v1029
      %v1233 = vunpack.c.l.b16 %v1030
      %v1234 = vunpack.c.l.b16 %v1031
      %v1235 = vunpack.c.l.b16 %v1032
      %v1236 = vpack.c.b16 %v1139, %v1138
      %v1237 = vpack.c.b16 %v1141, %v1140
      %v1238 = vpack.c.b16 %v1143, %v1142
      %v1239 = vpack.c.b16 %v1145, %v1144
      %v1240 = vpack.c.b16 %v1147, %v1146
      %v1241 = vpack.c.b16 %v1149, %v1148
      %v1242 = vpack.c.b16 %v1151, %v1150
      %v1243 = vpack.c.b16 %v1153, %v1152
      %v1244 = vpack.c.b16 %v1155, %v1154
      %v1245 = vpack.c.b16 %v1157, %v1156
      %v1246 = vpack.c.b16 %v1159, %v1158
      %v1247 = vpack.c.b16 %v1161, %v1160
      %v1248 = vpack.c.b16 %v1163, %v1162
      %v1249 = vpack.c.b16 %v1165, %v1164
      %v1250 = vpack.c.b16 %v1167, %v1166
      %v1251 = vpack.c.b16 %v1169, %v1168
      %v1252 = vpack.c.b16 %v1171, %v1170
      %v1253 = vpack.c.b16 %v1173, %v1172
      %v1254 = vpack.c.b16 %v1175, %v1174
      %v1255 = vpack.c.b16 %v1177, %v1176
      %v1256 = vpack.c.b16 %v1179, %v1178
      %v1257 = vpack.c.b16 %v1181, %v1180
      %v1258 = vpack.c.b16 %v1183, %v1182
      %v1259 = vpack.c.b16 %v1185, %v1184
      %v1260 = vpack.c.b16 %v1187, %v1186
      %v1261 = vpack.c.b16 %v1189, %v1188
      %v1262 = vpack.c.b16 %v1191, %v1190
      %v1263 = vpack.c.b16 %v1193, %v1192
      %v1264 = vpack.c.b16 %v1195, %v1194
      %v1265 = vpack.c.b16 %v1197, %v1196
      %v1266 = vpack.c.b16 %v1199, %v1198
      %v1267 = vpack.c.b16 %v1201, %v1200
      %v1268 = vpack.c.b16 %v1203, %v1202
      %v1269 = vpack.c.b16 %v1205, %v1204
      %v1270 = vpack.c.b16 %v1207, %v1206
      %v1271 = vpack.c.b16 %v1209, %v1208
      %v1272 = vpack.c.b16 %v1211, %v1210
      %v1273 = vpack.c.b16 %v1213, %v1212
      %v1274 = vpack.c.b16 %v1215, %v1214
      %v1275 = vpack.c.b16 %v1217, %v1216
      %v1276 = vpack.c.b16 %v1219, %v1218
      %v1277 = vpack.c.b16 %v1221, %v1220
      %v1278 = vpack.c.b16 %v1223, %v1222
      %v1279 = vpack.c.b16 %v1225, %v1224
      %v1280 = vpack.c.b16 %v1227, %v1226
      %v1281 = vpack.c.b16 %v1229, %v1228
      %v1282 = vpack.c.b16 %v1231, %v1230
      %v1283 = vpack.c.b16 %v1233, %v1232
      %v1284 = vpack.c.b16 %v1235, %v1234
      %vm1334 = vcmask 130048
      %v1336 = vsel %vm1334, %v829, 0
      %v1339 = vsel %vm1334, %v836, 0
      %v1342 = vsel %vm1334, %v843, 0
      %v1345 = vsel %vm1334, %v850, 0
      %v1348 = vsel %vm1334, %v857, 0
      %v1351 = vsel %vm1334, %v864, 0
      %v1354 = vsel %vm1334, %v871, 0
      %v1357 = vsel %vm1334, %v878, 0
      %v1360 = vsel %vm1334, %v885, 0
      %v1363 = vsel %vm1334, %v892, 0
      %v1366 = vsel %vm1334, %v899, 0
      %v1369 = vsel %vm1334, %v906, 0
      %v1372 = vsel %vm1334, %v913, 0
      %v1375 = vsel %vm1334, %v920, 0
      %v1378 = vsel %vm1334, %v927, 0
      %v1381 = vsel %vm1334, %v934, 0
      %1383 = vmatprep.subr.bf16.mxu0 0
      %1384 = vmatpush1.bf16.msra.mxu0 %v1243
      %1385 = vmatprep.subr.bf16.mxu0 0
      %1386 = vmatpush1.bf16.msra.mxu0 %v1242
      %1387 = vmatprep.subr.bf16.mxu0 0
      %1388 = vmatpush1.bf16.msra.mxu0 %v1241
      %1389 = vmatprep.subr.bf16.mxu0 0
      %1390 = vmatpush1.bf16.msra.mxu0 %v1240
      %1391 = vmatprep.subr.bf16.mxu0 0
      %1392 = vmatpush1.bf16.msra.mxu0 %v1239
      %1393 = vmatprep.subr.bf16.mxu0 0
      %1394 = vmatpush1.bf16.msra.mxu0 %v1238
      %1395 = vmatprep.subr.bf16.mxu0 0
      %1396 = vmatpush1.bf16.msra.mxu0 %v1237
      %1397 = vmatprep.subr.bf16.mxu0 0
      %1398 = vmatpush1.bf16.msra.mxu0 %v1236
      %1399 = vmatprep.subr.bf16.mxu0 0
      %1400 = vmatpush2.bf16.msra.mxu0 %v1251
      %1401 = vmatprep.subr.bf16.mxu0 0
      %1402 = vmatpush2.bf16.msra.mxu0 %v1250
      %1403 = vmatprep.subr.bf16.mxu0 0
      %1404 = vmatpush2.bf16.msra.mxu0 %v1249
      %1405 = vmatprep.subr.bf16.mxu0 0
      %1406 = vmatpush2.bf16.msra.mxu0 %v1248
      %1407 = vmatprep.subr.bf16.mxu0 0
      %1408 = vmatpush2.bf16.msra.mxu0 %v1247
      %1409 = vmatprep.subr.bf16.mxu0 0
      %1410 = vmatpush2.bf16.msra.mxu0 %v1246
      %1411 = vmatprep.subr.bf16.mxu0 0
      %1412 = vmatpush2.bf16.msra.mxu0 %v1245
      %1413 = vmatprep.subr.bf16.mxu0 0
      %1414 = vmatpush2.bf16.msra.mxu0 %v1244
      %1415 = vmatprep.mubr.bf16.mxu0 %v824
      %1416 = vmatmul.mubr.bf16.gmra.mxu0 %v823
      %v1417 = vpop.f32.mrf.mxu0
      %v1418 = vadd.f32 %v1038, %v1417
      %v1419 = vpop.f32.mrf.mxu0
      %v1420 = vpop.f32.mrf.mxu0
      %v1421 = vadd.f32 %v1038, %v1420
      %v1422 = vpop.f32.mrf.mxu0
      %1423 = vmatprep.mubr.bf16.mxu0 %v831
      %1424 = vmatmul.mubr.bf16.gmra.mxu0 %v830
      %v1425 = vpop.f32.mrf.mxu0
      %v1426 = vadd.f32 %v1038, %v1425
      %v1427 = vpop.f32.mrf.mxu0
      %v1428 = vpop.f32.mrf.mxu0
      %v1429 = vadd.f32 %v1038, %v1428
      %v1430 = vpop.f32.mrf.mxu0
      %1431 = vmatprep.mubr.bf16.mxu0 %v838
      %1432 = vmatmul.mubr.bf16.gmra.mxu0 %v837
      %v1433 = vpop.f32.mrf.mxu0
      %v1434 = vadd.f32 %v1038, %v1433
      %v1435 = vpop.f32.mrf.mxu0
      %v1436 = vpop.f32.mrf.mxu0
      %v1437 = vadd.f32 %v1038, %v1436
      %v1438 = vpop.f32.mrf.mxu0
      %1439 = vmatprep.mubr.bf16.mxu0 %v845
      %1440 = vmatmul.mubr.bf16.gmra.mxu0 %v844
      %v1441 = vpop.f32.mrf.mxu0
      %v1442 = vadd.f32 %v1038, %v1441
      %v1443 = vpop.f32.mrf.mxu0
      %v1444 = vpop.f32.mrf.mxu0
      %v1445 = vadd.f32 %v1038, %v1444
      %v1446 = vpop.f32.mrf.mxu0
      %1447 = vmatprep.mubr.bf16.mxu0 %v852
      %1448 = vmatmul.mubr.bf16.gmra.mxu0 %v851
      %v1449 = vpop.f32.mrf.mxu0
      %v1450 = vadd.f32 %v1038, %v1449
      %v1451 = vpop.f32.mrf.mxu0
      %v1452 = vpop.f32.mrf.mxu0
      %v1453 = vadd.f32 %v1038, %v1452
      %v1454 = vpop.f32.mrf.mxu0
      %1455 = vmatprep.mubr.bf16.mxu0 %v859
      %1456 = vmatmul.mubr.bf16.gmra.mxu0 %v858
      %v1457 = vpop.f32.mrf.mxu0
      %v1458 = vadd.f32 %v1038, %v1457
      %v1459 = vpop.f32.mrf.mxu0
      %v1460 = vpop.f32.mrf.mxu0
      %v1461 = vadd.f32 %v1038, %v1460
      %v1462 = vpop.f32.mrf.mxu0
      %1463 = vmatprep.mubr.bf16.mxu0 %v866
      %1464 = vmatmul.mubr.bf16.gmra.mxu0 %v865
      %v1465 = vpop.f32.mrf.mxu0
      %v1466 = vadd.f32 %v1038, %v1465
      %v1467 = vpop.f32.mrf.mxu0
      %v1468 = vpop.f32.mrf.mxu0
      %v1469 = vadd.f32 %v1038, %v1468
      %v1470 = vpop.f32.mrf.mxu0
      %1471 = vmatprep.mubr.bf16.mxu0 %v873
      %1472 = vmatmul.mubr.bf16.gmra.mxu0 %v872
      %v1473 = vpop.f32.mrf.mxu0
      %v1474 = vadd.f32 %v1038, %v1473
      %v1475 = vpop.f32.mrf.mxu0
      %v1476 = vpop.f32.mrf.mxu0
      %v1477 = vadd.f32 %v1038, %v1476
      %v1478 = vpop.f32.mrf.mxu0
      %1479 = vmatprep.mubr.bf16.mxu0 %v880
      %1480 = vmatmul.mubr.bf16.gmra.mxu0 %v879
      %v1481 = vpop.f32.mrf.mxu0
      %v1482 = vadd.f32 %v1038, %v1481
      %v1483 = vpop.f32.mrf.mxu0
      %v1484 = vpop.f32.mrf.mxu0
      %v1485 = vadd.f32 %v1038, %v1484
      %v1486 = vpop.f32.mrf.mxu0
      %1487 = vmatprep.mubr.bf16.mxu0 %v887
      %1488 = vmatmul.mubr.bf16.gmra.mxu0 %v886
      %v1489 = vpop.f32.mrf.mxu0
      %v1490 = vadd.f32 %v1038, %v1489
      %v1491 = vpop.f32.mrf.mxu0
      %v1492 = vpop.f32.mrf.mxu0
      %v1493 = vadd.f32 %v1038, %v1492
      %v1494 = vpop.f32.mrf.mxu0
      %1495 = vmatprep.mubr.bf16.mxu0 %v894
      %1496 = vmatmul.mubr.bf16.gmra.mxu0 %v893
      %v1497 = vpop.f32.mrf.mxu0
      %v1498 = vadd.f32 %v1038, %v1497
      %v1499 = vpop.f32.mrf.mxu0
      %v1500 = vpop.f32.mrf.mxu0
      %v1501 = vadd.f32 %v1038, %v1500
      %v1502 = vpop.f32.mrf.mxu0
      %1503 = vmatprep.mubr.bf16.mxu0 %v901
      %1504 = vmatmul.mubr.bf16.gmra.mxu0 %v900
      %v1505 = vpop.f32.mrf.mxu0
      %v1506 = vadd.f32 %v1038, %v1505
      %v1507 = vpop.f32.mrf.mxu0
      %v1508 = vpop.f32.mrf.mxu0
      %v1509 = vadd.f32 %v1038, %v1508
      %v1510 = vpop.f32.mrf.mxu0
      %1511 = vmatprep.mubr.bf16.mxu0 %v908
      %1512 = vmatmul.mubr.bf16.gmra.mxu0 %v907
      %v1513 = vpop.f32.mrf.mxu0
      %v1514 = vadd.f32 %v1038, %v1513
      %v1515 = vpop.f32.mrf.mxu0
      %v1516 = vpop.f32.mrf.mxu0
      %v1517 = vadd.f32 %v1038, %v1516
      %v1518 = vpop.f32.mrf.mxu0
      %1519 = vmatprep.mubr.bf16.mxu0 %v915
      %1520 = vmatmul.mubr.bf16.gmra.mxu0 %v914
      %v1521 = vpop.f32.mrf.mxu0
      %v1522 = vadd.f32 %v1038, %v1521
      %v1523 = vpop.f32.mrf.mxu0
      %v1524 = vpop.f32.mrf.mxu0
      %v1525 = vadd.f32 %v1038, %v1524
      %v1526 = vpop.f32.mrf.mxu0
      %1527 = vmatprep.mubr.bf16.mxu0 %v922
      %1528 = vmatmul.mubr.bf16.gmra.mxu0 %v921
      %v1529 = vpop.f32.mrf.mxu0
      %v1530 = vadd.f32 %v1038, %v1529
      %v1531 = vpop.f32.mrf.mxu0
      %v1532 = vpop.f32.mrf.mxu0
      %v1533 = vadd.f32 %v1038, %v1532
      %v1534 = vpop.f32.mrf.mxu0
      %1535 = vmatprep.mubr.bf16.mxu0 %v929
      %1536 = vmatmul.mubr.bf16.gmra.mxu0 %v928
      %v1537 = vpop.f32.mrf.mxu0
      %v1538 = vadd.f32 %v1038, %v1537
      %v1539 = vpop.f32.mrf.mxu0
      %v1540 = vpop.f32.mrf.mxu0
      %v1541 = vadd.f32 %v1038, %v1540
      %v1542 = vpop.f32.mrf.mxu0
      %1543 = vdwg.mxu0
      %1544 = vmatprep.subr.bf16.mxu0 0
      %1545 = vmatpush1.bf16.msra.mxu0 %v1259
      %1546 = vmatprep.subr.bf16.mxu0 0
      %1547 = vmatpush1.bf16.msra.mxu0 %v1258
      %1548 = vmatprep.subr.bf16.mxu0 0
      %1549 = vmatpush1.bf16.msra.mxu0 %v1257
      %1550 = vmatprep.subr.bf16.mxu0 0
      %1551 = vmatpush1.bf16.msra.mxu0 %v1256
      %1552 = vmatprep.subr.bf16.mxu0 0
      %1553 = vmatpush1.bf16.msra.mxu0 %v1255
      %1554 = vmatprep.subr.bf16.mxu0 0
      %1555 = vmatpush1.bf16.msra.mxu0 %v1254
      %1556 = vmatprep.subr.bf16.mxu0 0
      %1557 = vmatpush1.bf16.msra.mxu0 %v1253
      %1558 = vmatprep.subr.bf16.mxu0 0
      %1559 = vmatpush1.bf16.msra.mxu0 %v1252
      %1560 = vmatprep.subr.bf16.mxu0 0
      %1561 = vmatpush2.bf16.msra.mxu0 %v1267
      %1562 = vmatprep.subr.bf16.mxu0 0
      %1563 = vmatpush2.bf16.msra.mxu0 %v1266
      %1564 = vmatprep.subr.bf16.mxu0 0
      %1565 = vmatpush2.bf16.msra.mxu0 %v1265
      %1566 = vmatprep.subr.bf16.mxu0 0
      %1567 = vmatpush2.bf16.msra.mxu0 %v1264
      %1568 = vmatprep.subr.bf16.mxu0 0
      %1569 = vmatpush2.bf16.msra.mxu0 %v1263
      %1570 = vmatprep.subr.bf16.mxu0 0
      %1571 = vmatpush2.bf16.msra.mxu0 %v1262
      %1572 = vmatprep.subr.bf16.mxu0 0
      %1573 = vmatpush2.bf16.msra.mxu0 %v1261
      %1574 = vmatprep.subr.bf16.mxu0 0
      %1575 = vmatpush2.bf16.msra.mxu0 %v1260
      %1576 = vmatprep.mubr.bf16.mxu0 %v826
      %1577 = vmatmul.mubr.bf16.gmra.mxu0 %v825
      %v1578 = vpop.f32.mrf.mxu0
      %v1579 = vadd.f32 %v1418, %v1578
      %v1580 = vpop.f32.mrf.mxu0
      %v1581 = vpop.f32.mrf.mxu0
      %v1582 = vadd.f32 %v1421, %v1581
      %v1583 = vpop.f32.mrf.mxu0
      %1584 = vmatprep.mubr.bf16.mxu0 %v833
      %1585 = vmatmul.mubr.bf16.gmra.mxu0 %v832
      %v1586 = vpop.f32.mrf.mxu0
      %v1587 = vadd.f32 %v1426, %v1586
      %v1588 = vpop.f32.mrf.mxu0
      %v1589 = vpop.f32.mrf.mxu0
      %v1590 = vadd.f32 %v1429, %v1589
      %v1591 = vpop.f32.mrf.mxu0
      %1592 = vmatprep.mubr.bf16.mxu0 %v840
      %1593 = vmatmul.mubr.bf16.gmra.mxu0 %v839
      %v1594 = vpop.f32.mrf.mxu0
      %v1595 = vadd.f32 %v1434, %v1594
      %v1596 = vpop.f32.mrf.mxu0
      %v1597 = vpop.f32.mrf.mxu0
      %v1598 = vadd.f32 %v1437, %v1597
      %v1599 = vpop.f32.mrf.mxu0
      %1600 = vmatprep.mubr.bf16.mxu0 %v847
      %1601 = vmatmul.mubr.bf16.gmra.mxu0 %v846
      %v1602 = vpop.f32.mrf.mxu0
      %v1603 = vadd.f32 %v1442, %v1602
      %v1604 = vpop.f32.mrf.mxu0
      %v1605 = vpop.f32.mrf.mxu0
      %v1606 = vadd.f32 %v1445, %v1605
      %v1607 = vpop.f32.mrf.mxu0
      %1608 = vmatprep.mubr.bf16.mxu0 %v854
      %1609 = vmatmul.mubr.bf16.gmra.mxu0 %v853
      %v1610 = vpop.f32.mrf.mxu0
      %v1611 = vadd.f32 %v1450, %v1610
      %v1612 = vpop.f32.mrf.mxu0
      %v1613 = vpop.f32.mrf.mxu0
      %v1614 = vadd.f32 %v1453, %v1613
      %v1615 = vpop.f32.mrf.mxu0
      %1616 = vmatprep.mubr.bf16.mxu0 %v861
      %1617 = vmatmul.mubr.bf16.gmra.mxu0 %v860
      %v1618 = vpop.f32.mrf.mxu0
      %v1619 = vadd.f32 %v1458, %v1618
      %v1620 = vpop.f32.mrf.mxu0
      %v1621 = vpop.f32.mrf.mxu0
      %v1622 = vadd.f32 %v1461, %v1621
      %v1623 = vpop.f32.mrf.mxu0
      %1624 = vmatprep.mubr.bf16.mxu0 %v868
      %1625 = vmatmul.mubr.bf16.gmra.mxu0 %v867
      %v1626 = vpop.f32.mrf.mxu0
      %v1627 = vadd.f32 %v1466, %v1626
      %v1628 = vpop.f32.mrf.mxu0
      %v1629 = vpop.f32.mrf.mxu0
      %v1630 = vadd.f32 %v1469, %v1629
      %v1631 = vpop.f32.mrf.mxu0
      %1632 = vmatprep.mubr.bf16.mxu0 %v875
      %1633 = vmatmul.mubr.bf16.gmra.mxu0 %v874
      %v1634 = vpop.f32.mrf.mxu0
      %v1635 = vadd.f32 %v1474, %v1634
      %v1636 = vpop.f32.mrf.mxu0
      %v1637 = vpop.f32.mrf.mxu0
      %v1638 = vadd.f32 %v1477, %v1637
      %v1639 = vpop.f32.mrf.mxu0
      %1640 = vmatprep.mubr.bf16.mxu0 %v882
      %1641 = vmatmul.mubr.bf16.gmra.mxu0 %v881
      %v1642 = vpop.f32.mrf.mxu0
      %v1643 = vadd.f32 %v1482, %v1642
      %v1644 = vpop.f32.mrf.mxu0
      %v1645 = vpop.f32.mrf.mxu0
      %v1646 = vadd.f32 %v1485, %v1645
      %v1647 = vpop.f32.mrf.mxu0
      %1648 = vmatprep.mubr.bf16.mxu0 %v889
      %1649 = vmatmul.mubr.bf16.gmra.mxu0 %v888
      %v1650 = vpop.f32.mrf.mxu0
      %v1651 = vadd.f32 %v1490, %v1650
      %v1652 = vpop.f32.mrf.mxu0
      %v1653 = vpop.f32.mrf.mxu0
      %v1654 = vadd.f32 %v1493, %v1653
      %v1655 = vpop.f32.mrf.mxu0
      %1656 = vmatprep.mubr.bf16.mxu0 %v896
      %1657 = vmatmul.mubr.bf16.gmra.mxu0 %v895
      %v1658 = vpop.f32.mrf.mxu0
      %v1659 = vadd.f32 %v1498, %v1658
      %v1660 = vpop.f32.mrf.mxu0
      %v1661 = vpop.f32.mrf.mxu0
      %v1662 = vadd.f32 %v1501, %v1661
      %v1663 = vpop.f32.mrf.mxu0
      %1664 = vmatprep.mubr.bf16.mxu0 %v903
      %1665 = vmatmul.mubr.bf16.gmra.mxu0 %v902
      %v1666 = vpop.f32.mrf.mxu0
      %v1667 = vadd.f32 %v1506, %v1666
      %v1668 = vpop.f32.mrf.mxu0
      %v1669 = vpop.f32.mrf.mxu0
      %v1670 = vadd.f32 %v1509, %v1669
      %v1671 = vpop.f32.mrf.mxu0
      %1672 = vmatprep.mubr.bf16.mxu0 %v910
      %1673 = vmatmul.mubr.bf16.gmra.mxu0 %v909
      %v1674 = vpop.f32.mrf.mxu0
      %v1675 = vadd.f32 %v1514, %v1674
      %v1676 = vpop.f32.mrf.mxu0
      %v1677 = vpop.f32.mrf.mxu0
      %v1678 = vadd.f32 %v1517, %v1677
      %v1679 = vpop.f32.mrf.mxu0
      %1680 = vmatprep.mubr.bf16.mxu0 %v917
      %1681 = vmatmul.mubr.bf16.gmra.mxu0 %v916
      %v1682 = vpop.f32.mrf.mxu0
      %v1683 = vadd.f32 %v1522, %v1682
      %v1684 = vpop.f32.mrf.mxu0
      %v1685 = vpop.f32.mrf.mxu0
      %v1686 = vadd.f32 %v1525, %v1685
      %v1687 = vpop.f32.mrf.mxu0
      %1688 = vmatprep.mubr.bf16.mxu0 %v924
      %1689 = vmatmul.mubr.bf16.gmra.mxu0 %v923
      %v1690 = vpop.f32.mrf.mxu0
      %v1691 = vadd.f32 %v1530, %v1690
      %v1692 = vpop.f32.mrf.mxu0
      %v1693 = vpop.f32.mrf.mxu0
      %v1694 = vadd.f32 %v1533, %v1693
      %v1695 = vpop.f32.mrf.mxu0
      %1696 = vmatprep.mubr.bf16.mxu0 %v931
      %1697 = vmatmul.mubr.bf16.gmra.mxu0 %v930
      %v1698 = vpop.f32.mrf.mxu0
      %v1699 = vadd.f32 %v1538, %v1698
      %v1700 = vpop.f32.mrf.mxu0
      %v1701 = vpop.f32.mrf.mxu0
      %v1702 = vadd.f32 %v1541, %v1701
      %v1703 = vpop.f32.mrf.mxu0
      %1704 = vdwg.mxu0
      %1705 = vmatprep.subr.bf16.mxu0 0
      %1706 = vmatpush1.bf16.msra.mxu0 %v1275
      %1707 = vmatprep.subr.bf16.mxu0 0
      %1708 = vmatpush1.bf16.msra.mxu0 %v1274
      %1709 = vmatprep.subr.bf16.mxu0 0
      %1710 = vmatpush1.bf16.msra.mxu0 %v1273
      %1711 = vmatprep.subr.bf16.mxu0 0
      %1712 = vmatpush1.bf16.msra.mxu0 %v1272
      %1713 = vmatprep.subr.bf16.mxu0 0
      %1714 = vmatpush1.bf16.msra.mxu0 %v1271
      %1715 = vmatprep.subr.bf16.mxu0 0
      %1716 = vmatpush1.bf16.msra.mxu0 %v1270
      %1717 = vmatprep.subr.bf16.mxu0 0
      %1718 = vmatpush1.bf16.msra.mxu0 %v1269
      %1719 = vmatprep.subr.bf16.mxu0 0
      %1720 = vmatpush1.bf16.msra.mxu0 %v1268
      %1721 = vmatprep.subr.bf16.mxu0 0
      %1722 = vmatpush2.bf16.msra.mxu0 %v1283
      %1723 = vmatprep.subr.bf16.mxu0 0
      %1724 = vmatpush2.bf16.msra.mxu0 %v1282
      %1725 = vmatprep.subr.bf16.mxu0 0
      %1726 = vmatpush2.bf16.msra.mxu0 %v1281
      %1727 = vmatprep.subr.bf16.mxu0 0
      %1728 = vmatpush2.bf16.msra.mxu0 %v1280
      %1729 = vmatprep.subr.bf16.mxu0 0
      %1730 = vmatpush2.bf16.msra.mxu0 %v1279
      %1731 = vmatprep.subr.bf16.mxu0 0
      %1732 = vmatpush2.bf16.msra.mxu0 %v1278
      %1733 = vmatprep.subr.bf16.mxu0 0
      %1734 = vmatpush2.bf16.msra.mxu0 %v1277
      %1735 = vmatprep.subr.bf16.mxu0 0
      %1736 = vmatpush2.bf16.msra.mxu0 %v1276
      %1737 = vmatprep.mubr.bf16.mxu0 %v828
      %1738 = vmatmul.mubr.bf16.gmra.mxu0 %v827
      %v1739 = vpop.f32.mrf.mxu0
      %v1740 = vadd.f32 %v1579, %v1739
      %v1741 = vpop.f32.mrf.mxu0
      %v1742 = vpop.f32.mrf.mxu0
      %v1743 = vadd.f32 %v1582, %v1742
      %v1744 = vpop.f32.mrf.mxu0
      %1745 = vmatprep.mubr.bf16.mxu0 %v835
      %1746 = vmatmul.mubr.bf16.gmra.mxu0 %v834
      %v1747 = vpop.f32.mrf.mxu0
      %v1748 = vadd.f32 %v1587, %v1747
      %v1749 = vpop.f32.mrf.mxu0
      %v1750 = vpop.f32.mrf.mxu0
      %v1751 = vadd.f32 %v1590, %v1750
      %v1752 = vpop.f32.mrf.mxu0
      %1753 = vmatprep.mubr.bf16.mxu0 %v842
      %1754 = vmatmul.mubr.bf16.gmra.mxu0 %v841
      %v1755 = vpop.f32.mrf.mxu0
      %v1756 = vadd.f32 %v1595, %v1755
      %v1757 = vpop.f32.mrf.mxu0
      %v1758 = vpop.f32.mrf.mxu0
      %v1759 = vadd.f32 %v1598, %v1758
      %v1760 = vpop.f32.mrf.mxu0
      %1761 = vmatprep.mubr.bf16.mxu0 %v849
      %1762 = vmatmul.mubr.bf16.gmra.mxu0 %v848
      %v1763 = vpop.f32.mrf.mxu0
      %v1764 = vadd.f32 %v1603, %v1763
      %v1765 = vpop.f32.mrf.mxu0
      %v1766 = vpop.f32.mrf.mxu0
      %v1767 = vadd.f32 %v1606, %v1766
      %v1768 = vpop.f32.mrf.mxu0
      %1769 = vmatprep.mubr.bf16.mxu0 %v856
      %1770 = vmatmul.mubr.bf16.gmra.mxu0 %v855
      %v1771 = vpop.f32.mrf.mxu0
      %v1772 = vadd.f32 %v1611, %v1771
      %v1773 = vpop.f32.mrf.mxu0
      %v1774 = vpop.f32.mrf.mxu0
      %v1775 = vadd.f32 %v1614, %v1774
      %v1776 = vpop.f32.mrf.mxu0
      %1777 = vmatprep.mubr.bf16.mxu0 %v863
      %1778 = vmatmul.mubr.bf16.gmra.mxu0 %v862
      %v1779 = vpop.f32.mrf.mxu0
      %v1780 = vadd.f32 %v1619, %v1779
      %v1781 = vpop.f32.mrf.mxu0
      %v1782 = vpop.f32.mrf.mxu0
      %v1783 = vadd.f32 %v1622, %v1782
      %v1784 = vpop.f32.mrf.mxu0
      %1785 = vmatprep.mubr.bf16.mxu0 %v870
      %1786 = vmatmul.mubr.bf16.gmra.mxu0 %v869
      %v1787 = vpop.f32.mrf.mxu0
      %v1788 = vadd.f32 %v1627, %v1787
      %v1789 = vpop.f32.mrf.mxu0
      %v1790 = vpop.f32.mrf.mxu0
      %v1791 = vadd.f32 %v1630, %v1790
      %v1792 = vpop.f32.mrf.mxu0
      %1793 = vmatprep.mubr.bf16.mxu0 %v877
      %1794 = vmatmul.mubr.bf16.gmra.mxu0 %v876
      %v1795 = vpop.f32.mrf.mxu0
      %v1796 = vadd.f32 %v1635, %v1795
      %v1797 = vpop.f32.mrf.mxu0
      %v1798 = vpop.f32.mrf.mxu0
      %v1799 = vadd.f32 %v1638, %v1798
      %v1800 = vpop.f32.mrf.mxu0
      %1801 = vmatprep.mubr.bf16.mxu0 %v884
      %1802 = vmatmul.mubr.bf16.gmra.mxu0 %v883
      %v1803 = vpop.f32.mrf.mxu0
      %v1804 = vadd.f32 %v1643, %v1803
      %v1805 = vpop.f32.mrf.mxu0
      %v1806 = vpop.f32.mrf.mxu0
      %v1807 = vadd.f32 %v1646, %v1806
      %v1808 = vpop.f32.mrf.mxu0
      %1809 = vmatprep.mubr.bf16.mxu0 %v891
      %1810 = vmatmul.mubr.bf16.gmra.mxu0 %v890
      %v1811 = vpop.f32.mrf.mxu0
      %v1812 = vadd.f32 %v1651, %v1811
      %v1813 = vpop.f32.mrf.mxu0
      %v1814 = vpop.f32.mrf.mxu0
      %v1815 = vadd.f32 %v1654, %v1814
      %v1816 = vpop.f32.mrf.mxu0
      %1817 = vmatprep.mubr.bf16.mxu0 %v898
      %1818 = vmatmul.mubr.bf16.gmra.mxu0 %v897
      %v1819 = vpop.f32.mrf.mxu0
      %v1820 = vadd.f32 %v1659, %v1819
      %v1821 = vpop.f32.mrf.mxu0
      %v1822 = vpop.f32.mrf.mxu0
      %v1823 = vadd.f32 %v1662, %v1822
      %v1824 = vpop.f32.mrf.mxu0
      %1825 = vmatprep.mubr.bf16.mxu0 %v905
      %1826 = vmatmul.mubr.bf16.gmra.mxu0 %v904
      %v1827 = vpop.f32.mrf.mxu0
      %v1828 = vadd.f32 %v1667, %v1827
      %v1829 = vpop.f32.mrf.mxu0
      %v1830 = vpop.f32.mrf.mxu0
      %v1831 = vadd.f32 %v1670, %v1830
      %v1832 = vpop.f32.mrf.mxu0
      %1833 = vmatprep.mubr.bf16.mxu0 %v912
      %1834 = vmatmul.mubr.bf16.gmra.mxu0 %v911
      %v1835 = vpop.f32.mrf.mxu0
      %v1836 = vadd.f32 %v1675, %v1835
      %v1837 = vpop.f32.mrf.mxu0
      %v1838 = vpop.f32.mrf.mxu0
      %v1839 = vadd.f32 %v1678, %v1838
      %v1840 = vpop.f32.mrf.mxu0
      %1841 = vmatprep.mubr.bf16.mxu0 %v919
      %1842 = vmatmul.mubr.bf16.gmra.mxu0 %v918
      %v1843 = vpop.f32.mrf.mxu0
      %v1844 = vadd.f32 %v1683, %v1843
      %v1845 = vpop.f32.mrf.mxu0
      %v1846 = vpop.f32.mrf.mxu0
      %v1847 = vadd.f32 %v1686, %v1846
      %v1848 = vpop.f32.mrf.mxu0
      %1849 = vmatprep.mubr.bf16.mxu0 %v926
      %1850 = vmatmul.mubr.bf16.gmra.mxu0 %v925
      %v1851 = vpop.f32.mrf.mxu0
      %v1852 = vadd.f32 %v1691, %v1851
      %v1853 = vpop.f32.mrf.mxu0
      %v1854 = vpop.f32.mrf.mxu0
      %v1855 = vadd.f32 %v1694, %v1854
      %v1856 = vpop.f32.mrf.mxu0
      %1857 = vmatprep.mubr.bf16.mxu0 %v933
      %1858 = vmatmul.mubr.bf16.gmra.mxu0 %v932
      %v1859 = vpop.f32.mrf.mxu0
      %v1860 = vadd.f32 %v1699, %v1859
      %v1861 = vpop.f32.mrf.mxu0
      %v1862 = vpop.f32.mrf.mxu0
      %v1863 = vadd.f32 %v1702, %v1862
      %v1864 = vpop.f32.mrf.mxu0
      %1865 = vdwg.mxu0
      %1866 = vmatprep.subr.bf16.mxu0 0
      %1867 = vmatpush1.bf16.msra.mxu0 0
      %1868 = vmatprep.subr.bf16.mxu0 0
      %1869 = vmatpush1.bf16.msra.mxu0 0
      %1870 = vmatprep.subr.bf16.mxu0 0
      %1871 = vmatpush1.bf16.msra.mxu0 0
      %1872 = vmatprep.subr.bf16.mxu0 0
      %1873 = vmatpush1.bf16.msra.mxu0 0
      %1874 = vmatprep.subr.bf16.mxu0 0
      %1875 = vmatpush1.bf16.msra.mxu0 0
      %1876 = vmatprep.subr.bf16.mxu0 0
      %1877 = vmatpush1.bf16.msra.mxu0 0
      %1878 = vmatprep.subr.bf16.mxu0 0
      %1879 = vmatpush1.bf16.msra.mxu0 0
      %1880 = vmatprep.subr.bf16.mxu0 0
      %1881 = vmatpush1.bf16.msra.mxu0 %v1284
      %1882 = vmatprep.subr.bf16.mxu0 0
      %1883 = vmatpush2.bf16.msra.mxu0 0
      %1884 = vmatprep.subr.bf16.mxu0 0
      %1885 = vmatpush2.bf16.msra.mxu0 0
      %1886 = vmatprep.subr.bf16.mxu0 0
      %1887 = vmatpush2.bf16.msra.mxu0 0
      %1888 = vmatprep.subr.bf16.mxu0 0
      %1889 = vmatpush2.bf16.msra.mxu0 0
      %1890 = vmatprep.subr.bf16.mxu0 0
      %1891 = vmatpush2.bf16.msra.mxu0 0
      %1892 = vmatprep.subr.bf16.mxu0 0
      %1893 = vmatpush2.bf16.msra.mxu0 0
      %1894 = vmatprep.subr.bf16.mxu0 0
      %1895 = vmatpush2.bf16.msra.mxu0 0
      %1896 = vmatprep.subr.bf16.mxu0 0
      %1897 = vmatpush2.bf16.msra.mxu0 0
      %1898 = vmatprep.mubr.bf16.mxu0 0
      %1899 = vmatmul.mubr.bf16.gmra.mxu0 %v1336
      %v1900 = vpop.f32.mrf.mxu0
      %v1901 = vadd.f32 %v1740, %v1900
      %v1902 = vpop.f32.mrf.mxu0
      %v1903 = vpop.f32.mrf.mxu0
      %v1904 = vadd.f32 %v1743, %v1903
      %v1905 = vpop.f32.mrf.mxu0
      %1906 = vmatprep.mubr.bf16.mxu0 0
      %1907 = vmatmul.mubr.bf16.gmra.mxu0 %v1339
      %v1908 = vpop.f32.mrf.mxu0
      %v1909 = vadd.f32 %v1748, %v1908
      %v1910 = vpop.f32.mrf.mxu0
      %v1911 = vpop.f32.mrf.mxu0
      %v1912 = vadd.f32 %v1751, %v1911
      %v1913 = vpop.f32.mrf.mxu0
      %1914 = vmatprep.mubr.bf16.mxu0 0
      %1915 = vmatmul.mubr.bf16.gmra.mxu0 %v1342
      %v1916 = vpop.f32.mrf.mxu0
      %v1917 = vadd.f32 %v1756, %v1916
      %v1918 = vpop.f32.mrf.mxu0
      %v1919 = vpop.f32.mrf.mxu0
      %v1920 = vadd.f32 %v1759, %v1919
      %v1921 = vpop.f32.mrf.mxu0
      %1922 = vmatprep.mubr.bf16.mxu0 0
      %1923 = vmatmul.mubr.bf16.gmra.mxu0 %v1345
      %v1924 = vpop.f32.mrf.mxu0
      %v1925 = vadd.f32 %v1764, %v1924
      %v1926 = vpop.f32.mrf.mxu0
      %v1927 = vpop.f32.mrf.mxu0
      %v1928 = vadd.f32 %v1767, %v1927
      %v1929 = vpop.f32.mrf.mxu0
      %1930 = vmatprep.mubr.bf16.mxu0 0
      %1931 = vmatmul.mubr.bf16.gmra.mxu0 %v1348
      %v1932 = vpop.f32.mrf.mxu0
      %v1933 = vadd.f32 %v1772, %v1932
      %v1934 = vpop.f32.mrf.mxu0
      %v1935 = vpop.f32.mrf.mxu0
      %v1936 = vadd.f32 %v1775, %v1935
      %v1937 = vpop.f32.mrf.mxu0
      %1938 = vmatprep.mubr.bf16.mxu0 0
      %1939 = vmatmul.mubr.bf16.gmra.mxu0 %v1351
      %v1940 = vpop.f32.mrf.mxu0
      %v1941 = vadd.f32 %v1780, %v1940
      %v1942 = vpop.f32.mrf.mxu0
      %v1943 = vpop.f32.mrf.mxu0
      %v1944 = vadd.f32 %v1783, %v1943
      %v1945 = vpop.f32.mrf.mxu0
      %1946 = vmatprep.mubr.bf16.mxu0 0
      %1947 = vmatmul.mubr.bf16.gmra.mxu0 %v1354
      %v1948 = vpop.f32.mrf.mxu0
      %v1949 = vadd.f32 %v1788, %v1948
      %v1950 = vpop.f32.mrf.mxu0
      %v1951 = vpop.f32.mrf.mxu0
      %v1952 = vadd.f32 %v1791, %v1951
      %v1953 = vpop.f32.mrf.mxu0
      %1954 = vmatprep.mubr.bf16.mxu0 0
      %1955 = vmatmul.mubr.bf16.gmra.mxu0 %v1357
      %v1956 = vpop.f32.mrf.mxu0
      %v1957 = vadd.f32 %v1796, %v1956
      %v1958 = vpop.f32.mrf.mxu0
      %v1959 = vpop.f32.mrf.mxu0
      %v1960 = vadd.f32 %v1799, %v1959
      %v1961 = vpop.f32.mrf.mxu0
      %1962 = vmatprep.mubr.bf16.mxu0 0
      %1963 = vmatmul.mubr.bf16.gmra.mxu0 %v1360
      %v1964 = vpop.f32.mrf.mxu0
      %v1965 = vadd.f32 %v1804, %v1964
      %v1966 = vpop.f32.mrf.mxu0
      %v1967 = vpop.f32.mrf.mxu0
      %v1968 = vadd.f32 %v1807, %v1967
      %v1969 = vpop.f32.mrf.mxu0
      %1970 = vmatprep.mubr.bf16.mxu0 0
      %1971 = vmatmul.mubr.bf16.gmra.mxu0 %v1363
      %v1972 = vpop.f32.mrf.mxu0
      %v1973 = vadd.f32 %v1812, %v1972
      %v1974 = vpop.f32.mrf.mxu0
      %v1975 = vpop.f32.mrf.mxu0
      %v1976 = vadd.f32 %v1815, %v1975
      %v1977 = vpop.f32.mrf.mxu0
      %1978 = vmatprep.mubr.bf16.mxu0 0
      %1979 = vmatmul.mubr.bf16.gmra.mxu0 %v1366
      %v1980 = vpop.f32.mrf.mxu0
      %v1981 = vadd.f32 %v1820, %v1980
      %v1982 = vpop.f32.mrf.mxu0
      %v1983 = vpop.f32.mrf.mxu0
      %v1984 = vadd.f32 %v1823, %v1983
      %v1985 = vpop.f32.mrf.mxu0
      %1986 = vmatprep.mubr.bf16.mxu0 0
      %1987 = vmatmul.mubr.bf16.gmra.mxu0 %v1369
      %v1988 = vpop.f32.mrf.mxu0
      %v1989 = vadd.f32 %v1828, %v1988
      %v1990 = vpop.f32.mrf.mxu0
      %v1991 = vpop.f32.mrf.mxu0
      %v1992 = vadd.f32 %v1831, %v1991
      %v1993 = vpop.f32.mrf.mxu0
      %1994 = vmatprep.mubr.bf16.mxu0 0
      %1995 = vmatmul.mubr.bf16.gmra.mxu0 %v1372
      %v1996 = vpop.f32.mrf.mxu0
      %v1997 = vadd.f32 %v1836, %v1996
      %v1998 = vpop.f32.mrf.mxu0
      %v1999 = vpop.f32.mrf.mxu0
      %v2000 = vadd.f32 %v1839, %v1999
      %v2001 = vpop.f32.mrf.mxu0
      %2002 = vmatprep.mubr.bf16.mxu0 0
      %2003 = vmatmul.mubr.bf16.gmra.mxu0 %v1375
      %v2004 = vpop.f32.mrf.mxu0
      %v2005 = vadd.f32 %v1844, %v2004
      %v2006 = vpop.f32.mrf.mxu0
      %v2007 = vpop.f32.mrf.mxu0
      %v2008 = vadd.f32 %v1847, %v2007
      %v2009 = vpop.f32.mrf.mxu0
      %2010 = vmatprep.mubr.bf16.mxu0 0
      %2011 = vmatmul.mubr.bf16.gmra.mxu0 %v1378
      %v2012 = vpop.f32.mrf.mxu0
      %v2013 = vadd.f32 %v1852, %v2012
      %v2014 = vpop.f32.mrf.mxu0
      %v2015 = vpop.f32.mrf.mxu0
      %v2016 = vadd.f32 %v1855, %v2015
      %v2017 = vpop.f32.mrf.mxu0
      %2018 = vmatprep.mubr.bf16.mxu0 0
      %2019 = vmatmul.mubr.bf16.gmra.mxu0 %v1381
      %v2020 = vpop.f32.mrf.mxu0
      %v2021 = vadd.f32 %v1860, %v2020
      %v2022 = vpop.f32.mrf.mxu0
      %v2023 = vpop.f32.mrf.mxu0
      %v2024 = vadd.f32 %v1863, %v2023
      %v2025 = vpop.f32.mrf.mxu0
      %2026 = vdwg.mxu0
      %v2027 = vmax.f32 %v1901, 0.0
      %v2028 = vmax.f32 %v1904, 0.0
      %v2029 = vmax.f32 %v1909, 0.0
      %v2030 = vmax.f32 %v1912, 0.0
      %v2031 = vmax.f32 %v1917, 0.0
      %v2032 = vmax.f32 %v1920, 0.0
      %v2033 = vmax.f32 %v1925, 0.0
      %v2034 = vmax.f32 %v1928, 0.0
      %v2035 = vmax.f32 %v1933, 0.0
      %v2036 = vmax.f32 %v1936, 0.0
      %v2037 = vmax.f32 %v1941, 0.0
      %v2038 = vmax.f32 %v1944, 0.0
      %v2039 = vmax.f32 %v1949, 0.0
      %v2040 = vmax.f32 %v1952, 0.0
      %v2041 = vmax.f32 %v1957, 0.0
      %v2042 = vmax.f32 %v1960, 0.0
      %v2043 = vmax.f32 %v1965, 0.0
      %v2044 = vmax.f32 %v1968, 0.0
      %v2045 = vmax.f32 %v1973, 0.0
      %v2046 = vmax.f32 %v1976, 0.0
      %v2047 = vmax.f32 %v1981, 0.0
      %v2048 = vmax.f32 %v1984, 0.0
      %v2049 = vmax.f32 %v1989, 0.0
      %v2050 = vmax.f32 %v1992, 0.0
      %v2051 = vmax.f32 %v1997, 0.0
      %v2052 = vmax.f32 %v2000, 0.0
      %v2053 = vmax.f32 %v2005, 0.0
      %v2054 = vmax.f32 %v2008, 0.0
      %v2055 = vmax.f32 %v2013, 0.0
      %v2056 = vmax.f32 %v2016, 0.0
      %v2057 = vmax.f32 %v2021, 0.0
      %v2058 = vmax.f32 %v2024, 0.0
      %v2059 = vpack.c.bf16 %v2028, %v2027
      %v2060 = vpack.c.bf16 %v2030, %v2029
      %v2061 = vpack.c.bf16 %v2032, %v2031
      %v2062 = vpack.c.bf16 %v2034, %v2033
      %v2063 = vpack.c.bf16 %v2036, %v2035
      %v2064 = vpack.c.bf16 %v2038, %v2037
      %v2065 = vpack.c.bf16 %v2040, %v2039
      %v2066 = vpack.c.bf16 %v2042, %v2041
      %v2067 = vpack.c.bf16 %v2044, %v2043
      %v2068 = vpack.c.bf16 %v2046, %v2045
      %v2069 = vpack.c.bf16 %v2048, %v2047
      %v2070 = vpack.c.bf16 %v2050, %v2049
      %v2071 = vpack.c.bf16 %v2052, %v2051
      %v2072 = vpack.c.bf16 %v2054, %v2053
      %v2073 = vpack.c.bf16 %v2056, %v2055
      %v2074 = vpack.c.bf16 %v2058, %v2057
      %v2075 = vld [vmem:[%s2] sm:$0xf]
      %v2076 = vld [vmem:[%s2 + $0x4] sm:$0xf]
      %v2077 = vld [vmem:[%s2 + $0x8] sm:$0xf]
      %v2078 = vld [vmem:[%s2 + $0xc] sm:$0xf]
      %v2079 = vld [vmem:[%s2 + $0x10] sm:$0xf]
      %v2080 = vld [vmem:[%s2 + $0x14] sm:$0xf]
      %v2081 = vld [vmem:[%s2 + $0x18] sm:$0xf]
      %v2082 = vld [vmem:[%s2 + $0x1c] sm:$0xf]
      %v2083 = vld [vmem:[%s2 + $0x20] sm:$0xf]
      %v2084 = vld [vmem:[%s2 + $0x24] sm:$0xf]
      %v2085 = vld [vmem:[%s2 + $0x28] sm:$0xf]
      %v2086 = vld [vmem:[%s2 + $0x2c] sm:$0xf]
      %v2087 = vld [vmem:[%s2 + $0x30] sm:$0xf]
      %v2088 = vld [vmem:[%s2 + $0x34] sm:$0xf]
      %v2089 = vld [vmem:[%s2 + $0x38] sm:$0xf]
      %v2090 = vld [vmem:[%s2 + $0x3c] sm:$0xf]
      %v2091 = vld [vmem:[%s10] sm:$0x1]
      %v2093 = vlaneseq
      %v2094 = vshrl.u32 %v2093, 7
      %v2095 = vsub.s32 0, %v2094
      %v2096 = vrot.slane %v2091, %v2095
      %v2114 = vunpack.c.l.b16 %v2075
      %v2115 = vunpack.c.l.b16 %v2076
      %v2116 = vunpack.c.l.b16 %v2077
      %v2117 = vunpack.c.l.b16 %v2078
      %v2118 = vunpack.c.l.b16 %v2079
      %v2119 = vunpack.c.l.b16 %v2080
      %v2120 = vunpack.c.l.b16 %v2081
      %v2121 = vunpack.c.l.b16 %v2082
      %v2122 = vunpack.c.l.b16 %v2083
      %v2123 = vunpack.c.l.b16 %v2084
      %v2124 = vunpack.c.l.b16 %v2085
      %v2125 = vunpack.c.l.b16 %v2086
      %v2126 = vunpack.c.l.b16 %v2087
      %v2127 = vunpack.c.l.b16 %v2088
      %v2128 = vunpack.c.l.b16 %v2089
      %v2129 = vunpack.c.l.b16 %v2090
      %v2130 = vpack.c.b16 %v2115, %v2114
      %v2131 = vpack.c.b16 %v2117, %v2116
      %v2132 = vpack.c.b16 %v2119, %v2118
      %v2133 = vpack.c.b16 %v2121, %v2120
      %v2134 = vpack.c.b16 %v2123, %v2122
      %v2135 = vpack.c.b16 %v2125, %v2124
      %v2136 = vpack.c.b16 %v2127, %v2126
      %v2137 = vpack.c.b16 %v2129, %v2128
      %2146 = vmatprep.subr.bf16.mxu0 0
      %2147 = vmatpush1.bf16.msra.mxu0 %v2137
      %2148 = vmatprep.subr.bf16.mxu0 0
      %2149 = vmatpush1.bf16.msra.mxu0 %v2136
      %2150 = vmatprep.subr.bf16.mxu0 0
      %2151 = vmatpush1.bf16.msra.mxu0 %v2135
      %2152 = vmatprep.subr.bf16.mxu0 0
      %2153 = vmatpush1.bf16.msra.mxu0 %v2134
      %2154 = vmatprep.subr.bf16.mxu0 0
      %2155 = vmatpush1.bf16.msra.mxu0 %v2133
      %2156 = vmatprep.subr.bf16.mxu0 0
      %2157 = vmatpush1.bf16.msra.mxu0 %v2132
      %2158 = vmatprep.subr.bf16.mxu0 0
      %2159 = vmatpush1.bf16.msra.mxu0 %v2131
      %2160 = vmatprep.subr.bf16.mxu0 0
      %2161 = vmatpush1.bf16.msra.mxu0 %v2130
      %2162 = vmatprep.subr.bf16.mxu0 0
      %2163 = vmatpush2.bf16.msra.mxu0 0
      %2164 = vmatprep.subr.bf16.mxu0 0
      %2165 = vmatpush2.bf16.msra.mxu0 0
      %2166 = vmatprep.subr.bf16.mxu0 0
      %2167 = vmatpush2.bf16.msra.mxu0 0
      %2168 = vmatprep.subr.bf16.mxu0 0
      %2169 = vmatpush2.bf16.msra.mxu0 0
      %2170 = vmatprep.subr.bf16.mxu0 0
      %2171 = vmatpush2.bf16.msra.mxu0 0
      %2172 = vmatprep.subr.bf16.mxu0 0
      %2173 = vmatpush2.bf16.msra.mxu0 0
      %2174 = vmatprep.subr.bf16.mxu0 0
      %2175 = vmatpush2.bf16.msra.mxu0 0
      %2176 = vmatprep.subr.bf16.mxu0 0
      %2177 = vmatpush2.bf16.msra.mxu0 0
      %2178 = vmatprep.mubr.bf16.mxu0 0
      %2179 = vmatmul.mubr.bf16.gmra.mxu0 %v2059
      %v2180 = vpop.f32.mrf.mxu0
      %v2181 = vadd.f32 %v2096, %v2180
      %v2182 = vpop.f32.mrf.mxu0
      %v2183 = vpop.f32.mrf.mxu0
      %v2184 = vadd.f32 %v2096, %v2183
      %v2185 = vpop.f32.mrf.mxu0
      %2186 = vmatprep.mubr.bf16.mxu0 0
      %2187 = vmatmul.mubr.bf16.gmra.mxu0 %v2060
      %v2188 = vpop.f32.mrf.mxu0
      %v2189 = vadd.f32 %v2096, %v2188
      %v2190 = vpop.f32.mrf.mxu0
      %v2191 = vpop.f32.mrf.mxu0
      %v2192 = vadd.f32 %v2096, %v2191
      %v2193 = vpop.f32.mrf.mxu0
      %2194 = vmatprep.mubr.bf16.mxu0 0
      %2195 = vmatmul.mubr.bf16.gmra.mxu0 %v2061
      %v2196 = vpop.f32.mrf.mxu0
      %v2197 = vadd.f32 %v2096, %v2196
      %v2198 = vpop.f32.mrf.mxu0
      %v2199 = vpop.f32.mrf.mxu0
      %v2200 = vadd.f32 %v2096, %v2199
      %v2201 = vpop.f32.mrf.mxu0
      %2202 = vmatprep.mubr.bf16.mxu0 0
      %2203 = vmatmul.mubr.bf16.gmra.mxu0 %v2062
      %v2204 = vpop.f32.mrf.mxu0
      %v2205 = vadd.f32 %v2096, %v2204
      %v2206 = vpop.f32.mrf.mxu0
      %v2207 = vpop.f32.mrf.mxu0
      %v2208 = vadd.f32 %v2096, %v2207
      %v2209 = vpop.f32.mrf.mxu0
      %2210 = vmatprep.mubr.bf16.mxu0 0
      %2211 = vmatmul.mubr.bf16.gmra.mxu0 %v2063
      %v2212 = vpop.f32.mrf.mxu0
      %v2213 = vadd.f32 %v2096, %v2212
      %v2214 = vpop.f32.mrf.mxu0
      %v2215 = vpop.f32.mrf.mxu0
      %v2216 = vadd.f32 %v2096, %v2215
      %v2217 = vpop.f32.mrf.mxu0
      %2218 = vmatprep.mubr.bf16.mxu0 0
      %2219 = vmatmul.mubr.bf16.gmra.mxu0 %v2064
      %v2220 = vpop.f32.mrf.mxu0
      %v2221 = vadd.f32 %v2096, %v2220
      %v2222 = vpop.f32.mrf.mxu0
      %v2223 = vpop.f32.mrf.mxu0
      %v2224 = vadd.f32 %v2096, %v2223
      %v2225 = vpop.f32.mrf.mxu0
      %2226 = vmatprep.mubr.bf16.mxu0 0
      %2227 = vmatmul.mubr.bf16.gmra.mxu0 %v2065
      %v2228 = vpop.f32.mrf.mxu0
      %v2229 = vadd.f32 %v2096, %v2228
      %v2230 = vpop.f32.mrf.mxu0
      %v2231 = vpop.f32.mrf.mxu0
      %v2232 = vadd.f32 %v2096, %v2231
      %v2233 = vpop.f32.mrf.mxu0
      %2234 = vmatprep.mubr.bf16.mxu0 0
      %2235 = vmatmul.mubr.bf16.gmra.mxu0 %v2066
      %v2236 = vpop.f32.mrf.mxu0
      %v2237 = vadd.f32 %v2096, %v2236
      %v2238 = vpop.f32.mrf.mxu0
      %v2239 = vpop.f32.mrf.mxu0
      %v2240 = vadd.f32 %v2096, %v2239
      %v2241 = vpop.f32.mrf.mxu0
      %2242 = vmatprep.mubr.bf16.mxu0 0
      %2243 = vmatmul.mubr.bf16.gmra.mxu0 %v2067
      %v2244 = vpop.f32.mrf.mxu0
      %v2245 = vadd.f32 %v2096, %v2244
      %v2246 = vpop.f32.mrf.mxu0
      %v2247 = vpop.f32.mrf.mxu0
      %v2248 = vadd.f32 %v2096, %v2247
      %v2249 = vpop.f32.mrf.mxu0
      %2250 = vmatprep.mubr.bf16.mxu0 0
      %2251 = vmatmul.mubr.bf16.gmra.mxu0 %v2068
      %v2252 = vpop.f32.mrf.mxu0
      %v2253 = vadd.f32 %v2096, %v2252
      %v2254 = vpop.f32.mrf.mxu0
      %v2255 = vpop.f32.mrf.mxu0
      %v2256 = vadd.f32 %v2096, %v2255
      %v2257 = vpop.f32.mrf.mxu0
      %2258 = vmatprep.mubr.bf16.mxu0 0
      %2259 = vmatmul.mubr.bf16.gmra.mxu0 %v2069
      %v2260 = vpop.f32.mrf.mxu0
      %v2261 = vadd.f32 %v2096, %v2260
      %v2262 = vpop.f32.mrf.mxu0
      %v2263 = vpop.f32.mrf.mxu0
      %v2264 = vadd.f32 %v2096, %v2263
      %v2265 = vpop.f32.mrf.mxu0
      %2266 = vmatprep.mubr.bf16.mxu0 0
      %2267 = vmatmul.mubr.bf16.gmra.mxu0 %v2070
      %v2268 = vpop.f32.mrf.mxu0
      %v2269 = vadd.f32 %v2096, %v2268
      %v2270 = vpop.f32.mrf.mxu0
      %v2271 = vpop.f32.mrf.mxu0
      %v2272 = vadd.f32 %v2096, %v2271
      %v2273 = vpop.f32.mrf.mxu0
      %2274 = vmatprep.mubr.bf16.mxu0 0
      %2275 = vmatmul.mubr.bf16.gmra.mxu0 %v2071
      %v2276 = vpop.f32.mrf.mxu0
      %v2277 = vadd.f32 %v2096, %v2276
      %v2278 = vpop.f32.mrf.mxu0
      %v2279 = vpop.f32.mrf.mxu0
      %v2280 = vadd.f32 %v2096, %v2279
      %v2281 = vpop.f32.mrf.mxu0
      %2282 = vmatprep.mubr.bf16.mxu0 0
      %2283 = vmatmul.mubr.bf16.gmra.mxu0 %v2072
      %v2284 = vpop.f32.mrf.mxu0
      %v2285 = vadd.f32 %v2096, %v2284
      %v2286 = vpop.f32.mrf.mxu0
      %v2287 = vpop.f32.mrf.mxu0
      %v2288 = vadd.f32 %v2096, %v2287
      %v2289 = vpop.f32.mrf.mxu0
      %2290 = vmatprep.mubr.bf16.mxu0 0
      %2291 = vmatmul.mubr.bf16.gmra.mxu0 %v2073
      %v2292 = vpop.f32.mrf.mxu0
      %v2293 = vadd.f32 %v2096, %v2292
      %v2294 = vpop.f32.mrf.mxu0
      %v2295 = vpop.f32.mrf.mxu0
      %v2296 = vadd.f32 %v2096, %v2295
      %v2297 = vpop.f32.mrf.mxu0
      %2298 = vmatprep.mubr.bf16.mxu0 0
      %2299 = vmatmul.mubr.bf16.gmra.mxu0 %v2074
      %v2300 = vpop.f32.mrf.mxu0
      %v2301 = vadd.f32 %v2096, %v2300
      %v2302 = vpop.f32.mrf.mxu0
      %v2303 = vpop.f32.mrf.mxu0
      %v2304 = vadd.f32 %v2096, %v2303
      %v2305 = vpop.f32.mrf.mxu0
      %2306 = vdwg.mxu0
      %v2307 = vmax.f32 %v2181, 0.0
      %v2308 = vmax.f32 %v2184, 0.0
      %v2309 = vmax.f32 %v2189, 0.0
      %v2310 = vmax.f32 %v2192, 0.0
      %v2311 = vmax.f32 %v2197, 0.0
      %v2312 = vmax.f32 %v2200, 0.0
      %v2313 = vmax.f32 %v2205, 0.0
      %v2314 = vmax.f32 %v2208, 0.0
      %v2315 = vmax.f32 %v2213, 0.0
      %v2316 = vmax.f32 %v2216, 0.0
      %v2317 = vmax.f32 %v2221, 0.0
      %v2318 = vmax.f32 %v2224, 0.0
      %v2319 = vmax.f32 %v2229, 0.0
      %v2320 = vmax.f32 %v2232, 0.0
      %v2321 = vmax.f32 %v2237, 0.0
      %v2322 = vmax.f32 %v2240, 0.0
      %v2323 = vmax.f32 %v2245, 0.0
      %v2324 = vmax.f32 %v2248, 0.0
      %v2325 = vmax.f32 %v2253, 0.0
      %v2326 = vmax.f32 %v2256, 0.0
      %v2327 = vmax.f32 %v2261, 0.0
      %v2328 = vmax.f32 %v2264, 0.0
      %v2329 = vmax.f32 %v2269, 0.0
      %v2330 = vmax.f32 %v2272, 0.0
      %v2331 = vmax.f32 %v2277, 0.0
      %v2332 = vmax.f32 %v2280, 0.0
      %v2333 = vmax.f32 %v2285, 0.0
      %v2334 = vmax.f32 %v2288, 0.0
      %v2335 = vmax.f32 %v2293, 0.0
      %v2336 = vmax.f32 %v2296, 0.0
      %v2337 = vmax.f32 %v2301, 0.0
      %v2338 = vmax.f32 %v2304, 0.0
      %v2339 = vpack.c.bf16 %v2308, %v2307
      %v2340 = vpack.c.bf16 %v2310, %v2309
      %v2341 = vpack.c.bf16 %v2312, %v2311
      %v2342 = vpack.c.bf16 %v2314, %v2313
      %v2343 = vpack.c.bf16 %v2316, %v2315
      %v2344 = vpack.c.bf16 %v2318, %v2317
      %v2345 = vpack.c.bf16 %v2320, %v2319
      %v2346 = vpack.c.bf16 %v2322, %v2321
      %v2347 = vpack.c.bf16 %v2324, %v2323
      %v2348 = vpack.c.bf16 %v2326, %v2325
      %v2349 = vpack.c.bf16 %v2328, %v2327
      %v2350 = vpack.c.bf16 %v2330, %v2329
      %v2351 = vpack.c.bf16 %v2332, %v2331
      %v2352 = vpack.c.bf16 %v2334, %v2333
      %v2353 = vpack.c.bf16 %v2336, %v2335
      %v2354 = vpack.c.bf16 %v2338, %v2337
      %v2355 = vld [vmem:[%s3] sm:$0xf]
      %v2356 = vld [vmem:[%s3 + $0x4] sm:$0xf]
      %v2357 = vld [vmem:[%s3 + $0x8] sm:$0xf]
      %v2358 = vld [vmem:[%s3 + $0xc] sm:$0xf]
      %v2359 = vld [vmem:[%s3 + $0x10] sm:$0xf]
      %v2360 = vld [vmem:[%s3 + $0x14] sm:$0xf]
      %v2361 = vld [vmem:[%s3 + $0x18] sm:$0xf]
      %v2362 = vld [vmem:[%s3 + $0x1c] sm:$0xf]
      %v2363 = vld [vmem:[%s11] sm:$0x1]
      %v2365 = vlaneseq
      %v2366 = vshrl.u32 %v2365, 7
      %v2367 = vsub.s32 0, %v2366
      %v2368 = vrot.slane %v2363, %v2367
      %v2378 = vunpack.c.l.b16 %v2355
      %v2379 = vunpack.c.l.b16 %v2356
      %v2380 = vunpack.c.l.b16 %v2357
      %v2381 = vunpack.c.l.b16 %v2358
      %v2382 = vunpack.c.l.b16 %v2359
      %v2383 = vunpack.c.l.b16 %v2360
      %v2384 = vunpack.c.l.b16 %v2361
      %v2385 = vunpack.c.l.b16 %v2362
      %v2386 = vpack.c.b16 %v2379, %v2378
      %v2387 = vpack.c.b16 %v2381, %v2380
      %v2388 = vpack.c.b16 %v2383, %v2382
      %v2389 = vpack.c.b16 %v2385, %v2384
      %vm2394 = vcmask 523264
      %v2396 = vsel %vm2394, %v2339, 0
      %v2399 = vsel %vm2394, %v2340, 0
      %v2402 = vsel %vm2394, %v2341, 0
      %v2405 = vsel %vm2394, %v2342, 0
      %v2408 = vsel %vm2394, %v2343, 0
      %v2411 = vsel %vm2394, %v2344, 0
      %v2414 = vsel %vm2394, %v2345, 0
      %v2417 = vsel %vm2394, %v2346, 0
      %v2420 = vsel %vm2394, %v2347, 0
      %v2423 = vsel %vm2394, %v2348, 0
      %v2426 = vsel %vm2394, %v2349, 0
      %v2429 = vsel %vm2394, %v2350, 0
      %v2432 = vsel %vm2394, %v2351, 0
      %v2435 = vsel %vm2394, %v2352, 0
      %v2438 = vsel %vm2394, %v2353, 0
      %v2441 = vsel %vm2394, %v2354, 0
      %2443 = vmatprep.subr.bf16.mxu0 0
      %2444 = vmatpush1.bf16.msra.mxu0 0
      %2445 = vmatprep.subr.bf16.mxu0 0
      %2446 = vmatpush1.bf16.msra.mxu0 0
      %2447 = vmatprep.subr.bf16.mxu0 0
      %2448 = vmatpush1.bf16.msra.mxu0 0
      %2449 = vmatprep.subr.bf16.mxu0 0
      %2450 = vmatpush1.bf16.msra.mxu0 0
      %2451 = vmatprep.subr.bf16.mxu0 0
      %2452 = vmatpush1.bf16.msra.mxu0 %v2389
      %2453 = vmatprep.subr.bf16.mxu0 0
      %2454 = vmatpush1.bf16.msra.mxu0 %v2388
      %2455 = vmatprep.subr.bf16.mxu0 0
      %2456 = vmatpush1.bf16.msra.mxu0 %v2387
      %2457 = vmatprep.subr.bf16.mxu0 0
      %2458 = vmatpush1.bf16.msra.mxu0 %v2386
      %2459 = vmatprep.subr.bf16.mxu0 0
      %2460 = vmatpush2.bf16.msra.mxu0 0
      %2461 = vmatprep.subr.bf16.mxu0 0
      %2462 = vmatpush2.bf16.msra.mxu0 0
      %2463 = vmatprep.subr.bf16.mxu0 0
      %2464 = vmatpush2.bf16.msra.mxu0 0
      %2465 = vmatprep.subr.bf16.mxu0 0
      %2466 = vmatpush2.bf16.msra.mxu0 0
      %2467 = vmatprep.subr.bf16.mxu0 0
      %2468 = vmatpush2.bf16.msra.mxu0 0
      %2469 = vmatprep.subr.bf16.mxu0 0
      %2470 = vmatpush2.bf16.msra.mxu0 0
      %2471 = vmatprep.subr.bf16.mxu0 0
      %2472 = vmatpush2.bf16.msra.mxu0 0
      %2473 = vmatprep.subr.bf16.mxu0 0
      %2474 = vmatpush2.bf16.msra.mxu0 0
      %2475 = vmatprep.mubr.bf16.mxu0 0
      %2476 = vmatmul.mubr.bf16.gmra.mxu0 %v2396
      %v2477 = vpop.f32.mrf.mxu0
      %v2478 = vadd.f32 %v2368, %v2477
      %v2479 = vpop.f32.mrf.mxu0
      %v2480 = vpop.f32.mrf.mxu0
      %v2481 = vadd.f32 %v2368, %v2480
      %v2482 = vpop.f32.mrf.mxu0
      %2483 = vmatprep.mubr.bf16.mxu0 0
      %2484 = vmatmul.mubr.bf16.gmra.mxu0 %v2399
      %v2485 = vpop.f32.mrf.mxu0
      %v2486 = vadd.f32 %v2368, %v2485
      %v2487 = vpop.f32.mrf.mxu0
      %v2488 = vpop.f32.mrf.mxu0
      %v2489 = vadd.f32 %v2368, %v2488
      %v2490 = vpop.f32.mrf.mxu0
      %2491 = vmatprep.mubr.bf16.mxu0 0
      %2492 = vmatmul.mubr.bf16.gmra.mxu0 %v2402
      %v2493 = vpop.f32.mrf.mxu0
      %v2494 = vadd.f32 %v2368, %v2493
      %v2495 = vpop.f32.mrf.mxu0
      %v2496 = vpop.f32.mrf.mxu0
      %v2497 = vadd.f32 %v2368, %v2496
      %v2498 = vpop.f32.mrf.mxu0
      %2499 = vmatprep.mubr.bf16.mxu0 0
      %2500 = vmatmul.mubr.bf16.gmra.mxu0 %v2405
      %v2501 = vpop.f32.mrf.mxu0
      %v2502 = vadd.f32 %v2368, %v2501
      %v2503 = vpop.f32.mrf.mxu0
      %v2504 = vpop.f32.mrf.mxu0
      %v2505 = vadd.f32 %v2368, %v2504
      %v2506 = vpop.f32.mrf.mxu0
      %2507 = vmatprep.mubr.bf16.mxu0 0
      %2508 = vmatmul.mubr.bf16.gmra.mxu0 %v2408
      %v2509 = vpop.f32.mrf.mxu0
      %v2510 = vadd.f32 %v2368, %v2509
      %v2511 = vpop.f32.mrf.mxu0
      %v2512 = vpop.f32.mrf.mxu0
      %v2513 = vadd.f32 %v2368, %v2512
      %v2514 = vpop.f32.mrf.mxu0
      %2515 = vmatprep.mubr.bf16.mxu0 0
      %2516 = vmatmul.mubr.bf16.gmra.mxu0 %v2411
      %v2517 = vpop.f32.mrf.mxu0
      %v2518 = vadd.f32 %v2368, %v2517
      %v2519 = vpop.f32.mrf.mxu0
      %v2520 = vpop.f32.mrf.mxu0
      %v2521 = vadd.f32 %v2368, %v2520
      %v2522 = vpop.f32.mrf.mxu0
      %2523 = vmatprep.mubr.bf16.mxu0 0
      %2524 = vmatmul.mubr.bf16.gmra.mxu0 %v2414
      %v2525 = vpop.f32.mrf.mxu0
      %v2526 = vadd.f32 %v2368, %v2525
      %v2527 = vpop.f32.mrf.mxu0
      %v2528 = vpop.f32.mrf.mxu0
      %v2529 = vadd.f32 %v2368, %v2528
      %v2530 = vpop.f32.mrf.mxu0
      %2531 = vmatprep.mubr.bf16.mxu0 0
      %2532 = vmatmul.mubr.bf16.gmra.mxu0 %v2417
      %v2533 = vpop.f32.mrf.mxu0
      %v2534 = vadd.f32 %v2368, %v2533
      %v2535 = vpop.f32.mrf.mxu0
      %v2536 = vpop.f32.mrf.mxu0
      %v2537 = vadd.f32 %v2368, %v2536
      %v2538 = vpop.f32.mrf.mxu0
      %2539 = vmatprep.mubr.bf16.mxu0 0
      %2540 = vmatmul.mubr.bf16.gmra.mxu0 %v2420
      %v2541 = vpop.f32.mrf.mxu0
      %v2542 = vadd.f32 %v2368, %v2541
      %v2543 = vpop.f32.mrf.mxu0
      %v2544 = vpop.f32.mrf.mxu0
      %v2545 = vadd.f32 %v2368, %v2544
      %v2546 = vpop.f32.mrf.mxu0
      %2547 = vmatprep.mubr.bf16.mxu0 0
      %2548 = vmatmul.mubr.bf16.gmra.mxu0 %v2423
      %v2549 = vpop.f32.mrf.mxu0
      %v2550 = vadd.f32 %v2368, %v2549
      %v2551 = vpop.f32.mrf.mxu0
      %v2552 = vpop.f32.mrf.mxu0
      %v2553 = vadd.f32 %v2368, %v2552
      %v2554 = vpop.f32.mrf.mxu0
      %2555 = vmatprep.mubr.bf16.mxu0 0
      %2556 = vmatmul.mubr.bf16.gmra.mxu0 %v2426
      %v2557 = vpop.f32.mrf.mxu0
      %v2558 = vadd.f32 %v2368, %v2557
      %v2559 = vpop.f32.mrf.mxu0
      %v2560 = vpop.f32.mrf.mxu0
      %v2561 = vadd.f32 %v2368, %v2560
      %v2562 = vpop.f32.mrf.mxu0
      %2563 = vmatprep.mubr.bf16.mxu0 0
      %2564 = vmatmul.mubr.bf16.gmra.mxu0 %v2429
      %v2565 = vpop.f32.mrf.mxu0
      %v2566 = vadd.f32 %v2368, %v2565
      %v2567 = vpop.f32.mrf.mxu0
      %v2568 = vpop.f32.mrf.mxu0
      %v2569 = vadd.f32 %v2368, %v2568
      %v2570 = vpop.f32.mrf.mxu0
      %2571 = vmatprep.mubr.bf16.mxu0 0
      %2572 = vmatmul.mubr.bf16.gmra.mxu0 %v2432
      %v2573 = vpop.f32.mrf.mxu0
      %v2574 = vadd.f32 %v2368, %v2573
      %v2575 = vpop.f32.mrf.mxu0
      %v2576 = vpop.f32.mrf.mxu0
      %v2577 = vadd.f32 %v2368, %v2576
      %v2578 = vpop.f32.mrf.mxu0
      %2579 = vmatprep.mubr.bf16.mxu0 0
      %2580 = vmatmul.mubr.bf16.gmra.mxu0 %v2435
      %v2581 = vpop.f32.mrf.mxu0
      %v2582 = vadd.f32 %v2368, %v2581
      %v2583 = vpop.f32.mrf.mxu0
      %v2584 = vpop.f32.mrf.mxu0
      %v2585 = vadd.f32 %v2368, %v2584
      %v2586 = vpop.f32.mrf.mxu0
      %2587 = vmatprep.mubr.bf16.mxu0 0
      %2588 = vmatmul.mubr.bf16.gmra.mxu0 %v2438
      %v2589 = vpop.f32.mrf.mxu0
      %v2590 = vadd.f32 %v2368, %v2589
      %v2591 = vpop.f32.mrf.mxu0
      %v2592 = vpop.f32.mrf.mxu0
      %v2593 = vadd.f32 %v2368, %v2592
      %v2594 = vpop.f32.mrf.mxu0
      %2595 = vmatprep.mubr.bf16.mxu0 0
      %2596 = vmatmul.mubr.bf16.gmra.mxu0 %v2441
      %v2597 = vpop.f32.mrf.mxu0
      %v2598 = vadd.f32 %v2368, %v2597
      %v2599 = vpop.f32.mrf.mxu0
      %v2600 = vpop.f32.mrf.mxu0
      %v2601 = vadd.f32 %v2368, %v2600
      %v2602 = vpop.f32.mrf.mxu0
      %2603 = vdwg.mxu0
      %v2604 = vmax.f32 %v2478, 0.0
      %v2605 = vmax.f32 %v2481, 0.0
      %v2606 = vmax.f32 %v2486, 0.0
      %v2607 = vmax.f32 %v2489, 0.0
      %v2608 = vmax.f32 %v2494, 0.0
      %v2609 = vmax.f32 %v2497, 0.0
      %v2610 = vmax.f32 %v2502, 0.0
      %v2611 = vmax.f32 %v2505, 0.0
      %v2612 = vmax.f32 %v2510, 0.0
      %v2613 = vmax.f32 %v2513, 0.0
      %v2614 = vmax.f32 %v2518, 0.0
      %v2615 = vmax.f32 %v2521, 0.0
      %v2616 = vmax.f32 %v2526, 0.0
      %v2617 = vmax.f32 %v2529, 0.0
      %v2618 = vmax.f32 %v2534, 0.0
      %v2619 = vmax.f32 %v2537, 0.0
      %v2620 = vmax.f32 %v2542, 0.0
      %v2621 = vmax.f32 %v2545, 0.0
      %v2622 = vmax.f32 %v2550, 0.0
      %v2623 = vmax.f32 %v2553, 0.0
      %v2624 = vmax.f32 %v2558, 0.0
      %v2625 = vmax.f32 %v2561, 0.0
      %v2626 = vmax.f32 %v2566, 0.0
      %v2627 = vmax.f32 %v2569, 0.0
      %v2628 = vmax.f32 %v2574, 0.0
      %v2629 = vmax.f32 %v2577, 0.0
      %v2630 = vmax.f32 %v2582, 0.0
      %v2631 = vmax.f32 %v2585, 0.0
      %v2632 = vmax.f32 %v2590, 0.0
      %v2633 = vmax.f32 %v2593, 0.0
      %v2634 = vmax.f32 %v2598, 0.0
      %v2635 = vmax.f32 %v2601, 0.0
      %v2636 = vpack.c.bf16 %v2605, %v2604
      %v2637 = vpack.c.bf16 %v2607, %v2606
      %v2638 = vpack.c.bf16 %v2609, %v2608
      %v2639 = vpack.c.bf16 %v2611, %v2610
      %v2640 = vpack.c.bf16 %v2613, %v2612
      %v2641 = vpack.c.bf16 %v2615, %v2614
      %v2642 = vpack.c.bf16 %v2617, %v2616
      %v2643 = vpack.c.bf16 %v2619, %v2618
      %v2644 = vpack.c.bf16 %v2621, %v2620
      %v2645 = vpack.c.bf16 %v2623, %v2622
      %v2646 = vpack.c.bf16 %v2625, %v2624
      %v2647 = vpack.c.bf16 %v2627, %v2626
      %v2648 = vpack.c.bf16 %v2629, %v2628
      %v2649 = vpack.c.bf16 %v2631, %v2630
      %v2650 = vpack.c.bf16 %v2633, %v2632
      %v2651 = vpack.c.bf16 %v2635, %v2634
      %v2652 = vld [vmem:[%s4] sm:$0xf]
      %v2653 = vld [vmem:[%s4 + $0x4] sm:$0x3]
      %v2654 = vld [vmem:[%s12] sm:$0x1]
      %v2656 = vlaneseq
      %v2657 = vshrl.u32 %v2656, 7
      %v2658 = vsub.s32 0, %v2657
      %v2659 = vrot.slane %v2654, %v2658
      %v2663 = vunpack.c.l.b16 %v2652
      %v2664 = vunpack.c.l.b16 %v2653
      %v2665 = vpack.c.b16 %v2664, %v2663
      %vm2666 = vcmask 97280
      %v2668 = vsel %vm2666, %v2636, 0
      %v2671 = vsel %vm2666, %v2637, 0
      %v2674 = vsel %vm2666, %v2638, 0
      %v2677 = vsel %vm2666, %v2639, 0
      %v2680 = vsel %vm2666, %v2640, 0
      %v2683 = vsel %vm2666, %v2641, 0
      %v2686 = vsel %vm2666, %v2642, 0
      %v2689 = vsel %vm2666, %v2643, 0
      %v2692 = vsel %vm2666, %v2644, 0
      %v2695 = vsel %vm2666, %v2645, 0
      %v2698 = vsel %vm2666, %v2646, 0
      %v2701 = vsel %vm2666, %v2647, 0
      %v2704 = vsel %vm2666, %v2648, 0
      %v2707 = vsel %vm2666, %v2649, 0
      %v2710 = vsel %vm2666, %v2650, 0
      %v2713 = vsel %vm2666, %v2651, 0
      %vm2715 = vcmask 1045504
      %v2717 = vsel %vm2715, %v2665, 0
      %2719 = vmatprep.subr.bf16.mxu0 0
      %2720 = vmatpush1.bf16.msra.mxu0 0
      %2721 = vmatprep.subr.bf16.mxu0 0
      %2722 = vmatpush1.bf16.msra.mxu0 0
      %2723 = vmatprep.subr.bf16.mxu0 0
      %2724 = vmatpush1.bf16.msra.mxu0 0
      %2725 = vmatprep.subr.bf16.mxu0 0
      %2726 = vmatpush1.bf16.msra.mxu0 0
      %2727 = vmatprep.subr.bf16.mxu0 0
      %2728 = vmatpush1.bf16.msra.mxu0 0
      %2729 = vmatprep.subr.bf16.mxu0 0
      %2730 = vmatpush1.bf16.msra.mxu0 0
      %2731 = vmatprep.subr.bf16.mxu0 0
      %2732 = vmatpush1.bf16.msra.mxu0 0
      %2733 = vmatprep.subr.bf16.mxu0 0
      %2734 = vmatpush1.bf16.msra.mxu0 %v2717
      %2735 = vmatprep.subr.bf16.mxu0 0
      %2736 = vmatpush2.bf16.msra.mxu0 0
      %2737 = vmatprep.subr.bf16.mxu0 0
      %2738 = vmatpush2.bf16.msra.mxu0 0
      %2739 = vmatprep.subr.bf16.mxu0 0
      %2740 = vmatpush2.bf16.msra.mxu0 0
      %2741 = vmatprep.subr.bf16.mxu0 0
      %2742 = vmatpush2.bf16.msra.mxu0 0
      %2743 = vmatprep.subr.bf16.mxu0 0
      %2744 = vmatpush2.bf16.msra.mxu0 0
      %2745 = vmatprep.subr.bf16.mxu0 0
      %2746 = vmatpush2.bf16.msra.mxu0 0
      %2747 = vmatprep.subr.bf16.mxu0 0
      %2748 = vmatpush2.bf16.msra.mxu0 0
      %2749 = vmatprep.subr.bf16.mxu0 0
      %2750 = vmatpush2.bf16.msra.mxu0 0
      %2751 = vmatprep.mubr.bf16.mxu0 0
      %2752 = vmatmul.mubr.bf16.gmra.mxu0 %v2668
      %v2753 = vpop.f32.mrf.mxu0
      %v2754 = vadd.f32 %v2659, %v2753
      %v2755 = vpop.f32.mrf.mxu0
      %v2756 = vpop.f32.mrf.mxu0
      %v2757 = vadd.f32 %v2659, %v2756
      %v2758 = vpop.f32.mrf.mxu0
      %2759 = vmatprep.mubr.bf16.mxu0 0
      %2760 = vmatmul.mubr.bf16.gmra.mxu0 %v2671
      %v2761 = vpop.f32.mrf.mxu0
      %v2762 = vadd.f32 %v2659, %v2761
      %v2763 = vpop.f32.mrf.mxu0
      %v2764 = vpop.f32.mrf.mxu0
      %v2765 = vadd.f32 %v2659, %v2764
      %v2766 = vpop.f32.mrf.mxu0
      %2767 = vmatprep.mubr.bf16.mxu0 0
      %2768 = vmatmul.mubr.bf16.gmra.mxu0 %v2674
      %v2769 = vpop.f32.mrf.mxu0
      %v2770 = vadd.f32 %v2659, %v2769
      %v2771 = vpop.f32.mrf.mxu0
      %v2772 = vpop.f32.mrf.mxu0
      %v2773 = vadd.f32 %v2659, %v2772
      %v2774 = vpop.f32.mrf.mxu0
      %2775 = vmatprep.mubr.bf16.mxu0 0
      %2776 = vmatmul.mubr.bf16.gmra.mxu0 %v2677
      %v2777 = vpop.f32.mrf.mxu0
      %v2778 = vadd.f32 %v2659, %v2777
      %v2779 = vpop.f32.mrf.mxu0
      %v2780 = vpop.f32.mrf.mxu0
      %v2781 = vadd.f32 %v2659, %v2780
      %v2782 = vpop.f32.mrf.mxu0
      %2783 = vmatprep.mubr.bf16.mxu0 0
      %2784 = vmatmul.mubr.bf16.gmra.mxu0 %v2680
      %v2785 = vpop.f32.mrf.mxu0
      %v2786 = vadd.f32 %v2659, %v2785
      %v2787 = vpop.f32.mrf.mxu0
      %v2788 = vpop.f32.mrf.mxu0
      %v2789 = vadd.f32 %v2659, %v2788
      %v2790 = vpop.f32.mrf.mxu0
      %2791 = vmatprep.mubr.bf16.mxu0 0
      %2792 = vmatmul.mubr.bf16.gmra.mxu0 %v2683
      %v2793 = vpop.f32.mrf.mxu0
      %v2794 = vadd.f32 %v2659, %v2793
      %v2795 = vpop.f32.mrf.mxu0
      %v2796 = vpop.f32.mrf.mxu0
      %v2797 = vadd.f32 %v2659, %v2796
      %v2798 = vpop.f32.mrf.mxu0
      %2799 = vmatprep.mubr.bf16.mxu0 0
      %2800 = vmatmul.mubr.bf16.gmra.mxu0 %v2686
      %v2801 = vpop.f32.mrf.mxu0
      %v2802 = vadd.f32 %v2659, %v2801
      %v2803 = vpop.f32.mrf.mxu0
      %v2804 = vpop.f32.mrf.mxu0
      %v2805 = vadd.f32 %v2659, %v2804
      %v2806 = vpop.f32.mrf.mxu0
      %2807 = vmatprep.mubr.bf16.mxu0 0
      %2808 = vmatmul.mubr.bf16.gmra.mxu0 %v2689
      %v2809 = vpop.f32.mrf.mxu0
      %v2810 = vadd.f32 %v2659, %v2809
      %v2811 = vpop.f32.mrf.mxu0
      %v2812 = vpop.f32.mrf.mxu0
      %v2813 = vadd.f32 %v2659, %v2812
      %v2814 = vpop.f32.mrf.mxu0
      %2815 = vmatprep.mubr.bf16.mxu0 0
      %2816 = vmatmul.mubr.bf16.gmra.mxu0 %v2692
      %v2817 = vpop.f32.mrf.mxu0
      %v2818 = vadd.f32 %v2659, %v2817
      %v2819 = vpop.f32.mrf.mxu0
      %v2820 = vpop.f32.mrf.mxu0
      %v2821 = vadd.f32 %v2659, %v2820
      %v2822 = vpop.f32.mrf.mxu0
      %2823 = vmatprep.mubr.bf16.mxu0 0
      %2824 = vmatmul.mubr.bf16.gmra.mxu0 %v2695
      %v2825 = vpop.f32.mrf.mxu0
      %v2826 = vadd.f32 %v2659, %v2825
      %v2827 = vpop.f32.mrf.mxu0
      %v2828 = vpop.f32.mrf.mxu0
      %v2829 = vadd.f32 %v2659, %v2828
      %v2830 = vpop.f32.mrf.mxu0
      %2831 = vmatprep.mubr.bf16.mxu0 0
      %2832 = vmatmul.mubr.bf16.gmra.mxu0 %v2698
      %v2833 = vpop.f32.mrf.mxu0
      %v2834 = vadd.f32 %v2659, %v2833
      %v2835 = vpop.f32.mrf.mxu0
      %v2836 = vpop.f32.mrf.mxu0
      %v2837 = vadd.f32 %v2659, %v2836
      %v2838 = vpop.f32.mrf.mxu0
      %2839 = vmatprep.mubr.bf16.mxu0 0
      %2840 = vmatmul.mubr.bf16.gmra.mxu0 %v2701
      %v2841 = vpop.f32.mrf.mxu0
      %v2842 = vadd.f32 %v2659, %v2841
      %v2843 = vpop.f32.mrf.mxu0
      %v2844 = vpop.f32.mrf.mxu0
      %v2845 = vadd.f32 %v2659, %v2844
      %v2846 = vpop.f32.mrf.mxu0
      %2847 = vmatprep.mubr.bf16.mxu0 0
      %2848 = vmatmul.mubr.bf16.gmra.mxu0 %v2704
      %v2849 = vpop.f32.mrf.mxu0
      %v2850 = vadd.f32 %v2659, %v2849
      %v2851 = vpop.f32.mrf.mxu0
      %v2852 = vpop.f32.mrf.mxu0
      %v2853 = vadd.f32 %v2659, %v2852
      %v2854 = vpop.f32.mrf.mxu0
      %2855 = vmatprep.mubr.bf16.mxu0 0
      %2856 = vmatmul.mubr.bf16.gmra.mxu0 %v2707
      %v2857 = vpop.f32.mrf.mxu0
      %v2858 = vadd.f32 %v2659, %v2857
      %v2859 = vpop.f32.mrf.mxu0
      %v2860 = vpop.f32.mrf.mxu0
      %v2861 = vadd.f32 %v2659, %v2860
      %v2862 = vpop.f32.mrf.mxu0
      %2863 = vmatprep.mubr.bf16.mxu0 0
      %2864 = vmatmul.mubr.bf16.gmra.mxu0 %v2710
      %v2865 = vpop.f32.mrf.mxu0
      %v2866 = vadd.f32 %v2659, %v2865
      %v2867 = vpop.f32.mrf.mxu0
      %v2868 = vpop.f32.mrf.mxu0
      %v2869 = vadd.f32 %v2659, %v2868
      %v2870 = vpop.f32.mrf.mxu0
      %2871 = vmatprep.mubr.bf16.mxu0 0
      %2872 = vmatmul.mubr.bf16.gmra.mxu0 %v2713
      %v2873 = vpop.f32.mrf.mxu0
      %v2874 = vadd.f32 %v2659, %v2873
      %v2875 = vpop.f32.mrf.mxu0
      %v2876 = vpop.f32.mrf.mxu0
      %v2877 = vadd.f32 %v2659, %v2876
      %v2878 = vpop.f32.mrf.mxu0
      %2879 = vdwg.mxu0
      %vm2880 = vcmask 64512
      %2881 = vst.msk [vmem:[%s589] sm:$0xff] %vm2880, %v2754
      %2882 = vst.msk [vmem:[%s589 + $0x8] sm:$0xff] %vm2880, %v2757
      %2883 = vst.msk [vmem:[%s589 + $0x10] sm:$0xff] %vm2880, %v2762
      %2884 = vst.msk [vmem:[%s589 + $0x18] sm:$0xff] %vm2880, %v2765
      %2885 = vst.msk [vmem:[%s589 + $0x20] sm:$0xff] %vm2880, %v2770
      %2886 = vst.msk [vmem:[%s589 + $0x28] sm:$0xff] %vm2880, %v2773
      %2887 = vst.msk [vmem:[%s589 + $0x30] sm:$0xff] %vm2880, %v2778
      %2888 = vst.msk [vmem:[%s589 + $0x38] sm:$0xff] %vm2880, %v2781
      %2889 = vst.msk [vmem:[%s589 + $0x40] sm:$0xff] %vm2880, %v2786
      %2890 = vst.msk [vmem:[%s589 + $0x48] sm:$0xff] %vm2880, %v2789
      %2891 = vst.msk [vmem:[%s589 + $0x50] sm:$0xff] %vm2880, %v2794
      %2892 = vst.msk [vmem:[%s589 + $0x58] sm:$0xff] %vm2880, %v2797
      %2893 = vst.msk [vmem:[%s589 + $0x60] sm:$0xff] %vm2880, %v2802
      %2894 = vst.msk [vmem:[%s589 + $0x68] sm:$0xff] %vm2880, %v2805
      %2895 = vst.msk [vmem:[%s589 + $0x70] sm:$0xff] %vm2880, %v2810
      %2896 = vst.msk [vmem:[%s589 + $0x78] sm:$0xff] %vm2880, %v2813
      %2897 = vst.msk [vmem:[%s589 + $0x80] sm:$0xff] %vm2880, %v2818
      %2898 = vst.msk [vmem:[%s589 + $0x88] sm:$0xff] %vm2880, %v2821
      %2899 = vst.msk [vmem:[%s589 + $0x90] sm:$0xff] %vm2880, %v2826
      %2900 = vst.msk [vmem:[%s589 + $0x98] sm:$0xff] %vm2880, %v2829
      %2901 = vst.msk [vmem:[%s589 + $0xa0] sm:$0xff] %vm2880, %v2834
      %2902 = vst.msk [vmem:[%s589 + $0xa8] sm:$0xff] %vm2880, %v2837
      %2903 = vst.msk [vmem:[%s589 + $0xb0] sm:$0xff] %vm2880, %v2842
      %2904 = vst.msk [vmem:[%s589 + $0xb8] sm:$0xff] %vm2880, %v2845
      %2905 = vst.msk [vmem:[%s589 + $0xc0] sm:$0xff] %vm2880, %v2850
      %2906 = vst.msk [vmem:[%s589 + $0xc8] sm:$0xff] %vm2880, %v2853
      %2907 = vst.msk [vmem:[%s589 + $0xd0] sm:$0xff] %vm2880, %v2858
      %2908 = vst.msk [vmem:[%s589 + $0xd8] sm:$0xff] %vm2880, %v2861
      %2909 = vst.msk [vmem:[%s589 + $0xe0] sm:$0xff] %vm2880, %v2866
      %2910 = vst.msk [vmem:[%s589 + $0xe8] sm:$0xff] %vm2880, %v2869
      %2911 = vst.msk [vmem:[%s589 + $0xf0] sm:$0xff] %vm2880, %v2874
      %2912 = vst.msk [vmem:[%s589 + $0xf8] sm:$0xff] %vm2880, %v2877
      %v2913 = vpack.c.bf16 %v2757, %v2754
      %v2914 = vpack.c.bf16 %v2765, %v2762
      %v2915 = vpack.c.bf16 %v2773, %v2770
      %v2916 = vpack.c.bf16 %v2781, %v2778
      %v2917 = vpack.c.bf16 %v2789, %v2786
      %v2918 = vpack.c.bf16 %v2797, %v2794
      %v2919 = vpack.c.bf16 %v2805, %v2802
      %v2920 = vpack.c.bf16 %v2813, %v2810
      %v2921 = vpack.c.bf16 %v2821, %v2818
      %v2922 = vpack.c.bf16 %v2829, %v2826
      %v2923 = vpack.c.bf16 %v2837, %v2834
      %v2924 = vpack.c.bf16 %v2845, %v2842
      %v2925 = vpack.c.bf16 %v2853, %v2850
      %v2926 = vpack.c.bf16 %v2861, %v2858
      %v2927 = vpack.c.bf16 %v2869, %v2866
      %v2928 = vpack.c.bf16 %v2877, %v2874
      %v2929 = vld [vmem:[%s5] sm:$0xf]
      %v2930 = vld [vmem:[%s13] sm:$0x1]
      %v2932 = vlaneseq
      %v2933 = vshrl.u32 %v2932, 7
      %v2934 = vsub.s32 0, %v2933
      %v2935 = vrot.slane %v2930, %v2934
      %v2938 = vsel %vm2880, %v2913, 0
      %v2941 = vsel %vm2880, %v2914, 0
      %v2944 = vsel %vm2880, %v2915, 0
      %v2947 = vsel %vm2880, %v2916, 0
      %v2950 = vsel %vm2880, %v2917, 0
      %v2953 = vsel %vm2880, %v2918, 0
      %v2956 = vsel %vm2880, %v2919, 0
      %v2959 = vsel %vm2880, %v2920, 0
      %v2962 = vsel %vm2880, %v2921, 0
      %v2965 = vsel %vm2880, %v2922, 0
      %v2968 = vsel %vm2880, %v2923, 0
      %v2971 = vsel %vm2880, %v2924, 0
      %v2974 = vsel %vm2880, %v2925, 0
      %v2977 = vsel %vm2880, %v2926, 0
      %v2980 = vsel %vm2880, %v2927, 0
      %v2983 = vsel %vm2880, %v2928, 0
      %vm2985 = vcmask 1043456
      %v2987 = vsel %vm2985, %v2929, 0
      %2989 = vmatprep.subr.bf16.mxu0 0
      %2990 = vmatpush1.bf16.msra.mxu0 0
      %2991 = vmatprep.subr.bf16.mxu0 0
      %2992 = vmatpush1.bf16.msra.mxu0 0
      %2993 = vmatprep.subr.bf16.mxu0 0
      %2994 = vmatpush1.bf16.msra.mxu0 0
      %2995 = vmatprep.subr.bf16.mxu0 0
      %2996 = vmatpush1.bf16.msra.mxu0 0
      %2997 = vmatprep.subr.bf16.mxu0 0
      %2998 = vmatpush1.bf16.msra.mxu0 0
      %2999 = vmatprep.subr.bf16.mxu0 0
      %3000 = vmatpush1.bf16.msra.mxu0 0
      %3001 = vmatprep.subr.bf16.mxu0 0
      %3002 = vmatpush1.bf16.msra.mxu0 0
      %3003 = vmatprep.subr.bf16.mxu0 0
      %3004 = vmatpush1.bf16.msra.mxu0 %v2987
      %3005 = vmatprep.subr.bf16.mxu0 0
      %3006 = vmatpush2.bf16.msra.mxu0 0
      %3007 = vmatprep.subr.bf16.mxu0 0
      %3008 = vmatpush2.bf16.msra.mxu0 0
      %3009 = vmatprep.subr.bf16.mxu0 0
      %3010 = vmatpush2.bf16.msra.mxu0 0
      %3011 = vmatprep.subr.bf16.mxu0 0
      %3012 = vmatpush2.bf16.msra.mxu0 0
      %3013 = vmatprep.subr.bf16.mxu0 0
      %3014 = vmatpush2.bf16.msra.mxu0 0
      %3015 = vmatprep.subr.bf16.mxu0 0
      %3016 = vmatpush2.bf16.msra.mxu0 0
      %3017 = vmatprep.subr.bf16.mxu0 0
      %3018 = vmatpush2.bf16.msra.mxu0 0
      %3019 = vmatprep.subr.bf16.mxu0 0
      %3020 = vmatpush2.bf16.msra.mxu0 0
      %3021 = vmatprep.mubr.bf16.mxu0 0
      %3022 = vmatmul.mubr.bf16.gmra.mxu0 %v2938
      %v3023 = vpop.f32.mrf.mxu0
      %v3024 = vadd.f32 %v2935, %v3023
      %v3025 = vpop.f32.mrf.mxu0
      %v3026 = vpop.f32.mrf.mxu0
      %v3027 = vadd.f32 %v2935, %v3026
      %v3028 = vpop.f32.mrf.mxu0
      %3029 = vmatprep.mubr.bf16.mxu0 0
      %3030 = vmatmul.mubr.bf16.gmra.mxu0 %v2941
      %v3031 = vpop.f32.mrf.mxu0
      %v3032 = vadd.f32 %v2935, %v3031
      %v3033 = vpop.f32.mrf.mxu0
      %v3034 = vpop.f32.mrf.mxu0
      %v3035 = vadd.f32 %v2935, %v3034
      %v3036 = vpop.f32.mrf.mxu0
      %3037 = vmatprep.mubr.bf16.mxu0 0
      %3038 = vmatmul.mubr.bf16.gmra.mxu0 %v2944
      %v3039 = vpop.f32.mrf.mxu0
      %v3040 = vadd.f32 %v2935, %v3039
      %v3041 = vpop.f32.mrf.mxu0
      %v3042 = vpop.f32.mrf.mxu0
      %v3043 = vadd.f32 %v2935, %v3042
      %v3044 = vpop.f32.mrf.mxu0
      %3045 = vmatprep.mubr.bf16.mxu0 0
      %3046 = vmatmul.mubr.bf16.gmra.mxu0 %v2947
      %v3047 = vpop.f32.mrf.mxu0
      %v3048 = vadd.f32 %v2935, %v3047
      %v3049 = vpop.f32.mrf.mxu0
      %v3050 = vpop.f32.mrf.mxu0
      %v3051 = vadd.f32 %v2935, %v3050
      %v3052 = vpop.f32.mrf.mxu0
      %3053 = vmatprep.mubr.bf16.mxu0 0
      %3054 = vmatmul.mubr.bf16.gmra.mxu0 %v2950
      %v3055 = vpop.f32.mrf.mxu0
      %v3056 = vadd.f32 %v2935, %v3055
      %v3057 = vpop.f32.mrf.mxu0
      %v3058 = vpop.f32.mrf.mxu0
      %v3059 = vadd.f32 %v2935, %v3058
      %v3060 = vpop.f32.mrf.mxu0
      %3061 = vmatprep.mubr.bf16.mxu0 0
      %3062 = vmatmul.mubr.bf16.gmra.mxu0 %v2953
      %v3063 = vpop.f32.mrf.mxu0
      %v3064 = vadd.f32 %v2935, %v3063
      %v3065 = vpop.f32.mrf.mxu0
      %v3066 = vpop.f32.mrf.mxu0
      %v3067 = vadd.f32 %v2935, %v3066
      %v3068 = vpop.f32.mrf.mxu0
      %3069 = vmatprep.mubr.bf16.mxu0 0
      %3070 = vmatmul.mubr.bf16.gmra.mxu0 %v2956
      %v3071 = vpop.f32.mrf.mxu0
      %v3072 = vadd.f32 %v2935, %v3071
      %v3073 = vpop.f32.mrf.mxu0
      %v3074 = vpop.f32.mrf.mxu0
      %v3075 = vadd.f32 %v2935, %v3074
      %v3076 = vpop.f32.mrf.mxu0
      %3077 = vmatprep.mubr.bf16.mxu0 0
      %3078 = vmatmul.mubr.bf16.gmra.mxu0 %v2959
      %v3079 = vpop.f32.mrf.mxu0
      %v3080 = vadd.f32 %v2935, %v3079
      %v3081 = vpop.f32.mrf.mxu0
      %v3082 = vpop.f32.mrf.mxu0
      %v3083 = vadd.f32 %v2935, %v3082
      %v3084 = vpop.f32.mrf.mxu0
      %3085 = vmatprep.mubr.bf16.mxu0 0
      %3086 = vmatmul.mubr.bf16.gmra.mxu0 %v2962
      %v3087 = vpop.f32.mrf.mxu0
      %v3088 = vadd.f32 %v2935, %v3087
      %v3089 = vpop.f32.mrf.mxu0
      %v3090 = vpop.f32.mrf.mxu0
      %v3091 = vadd.f32 %v2935, %v3090
      %v3092 = vpop.f32.mrf.mxu0
      %3093 = vmatprep.mubr.bf16.mxu0 0
      %3094 = vmatmul.mubr.bf16.gmra.mxu0 %v2965
      %v3095 = vpop.f32.mrf.mxu0
      %v3096 = vadd.f32 %v2935, %v3095
      %v3097 = vpop.f32.mrf.mxu0
      %v3098 = vpop.f32.mrf.mxu0
      %v3099 = vadd.f32 %v2935, %v3098
      %v3100 = vpop.f32.mrf.mxu0
      %3101 = vmatprep.mubr.bf16.mxu0 0
      %3102 = vmatmul.mubr.bf16.gmra.mxu0 %v2968
      %v3103 = vpop.f32.mrf.mxu0
      %v3104 = vadd.f32 %v2935, %v3103
      %v3105 = vpop.f32.mrf.mxu0
      %v3106 = vpop.f32.mrf.mxu0
      %v3107 = vadd.f32 %v2935, %v3106
      %v3108 = vpop.f32.mrf.mxu0
      %3109 = vmatprep.mubr.bf16.mxu0 0
      %3110 = vmatmul.mubr.bf16.gmra.mxu0 %v2971
      %v3111 = vpop.f32.mrf.mxu0
      %v3112 = vadd.f32 %v2935, %v3111
      %v3113 = vpop.f32.mrf.mxu0
      %v3114 = vpop.f32.mrf.mxu0
      %v3115 = vadd.f32 %v2935, %v3114
      %v3116 = vpop.f32.mrf.mxu0
      %3117 = vmatprep.mubr.bf16.mxu0 0
      %3118 = vmatmul.mubr.bf16.gmra.mxu0 %v2974
      %v3119 = vpop.f32.mrf.mxu0
      %v3120 = vadd.f32 %v2935, %v3119
      %v3121 = vpop.f32.mrf.mxu0
      %v3122 = vpop.f32.mrf.mxu0
      %v3123 = vadd.f32 %v2935, %v3122
      %v3124 = vpop.f32.mrf.mxu0
      %3125 = vmatprep.mubr.bf16.mxu0 0
      %3126 = vmatmul.mubr.bf16.gmra.mxu0 %v2977
      %v3127 = vpop.f32.mrf.mxu0
      %v3128 = vadd.f32 %v2935, %v3127
      %v3129 = vpop.f32.mrf.mxu0
      %v3130 = vpop.f32.mrf.mxu0
      %v3131 = vadd.f32 %v2935, %v3130
      %v3132 = vpop.f32.mrf.mxu0
      %3133 = vmatprep.mubr.bf16.mxu0 0
      %3134 = vmatmul.mubr.bf16.gmra.mxu0 %v2980
      %v3135 = vpop.f32.mrf.mxu0
      %v3136 = vadd.f32 %v2935, %v3135
      %v3137 = vpop.f32.mrf.mxu0
      %v3138 = vpop.f32.mrf.mxu0
      %v3139 = vadd.f32 %v2935, %v3138
      %v3140 = vpop.f32.mrf.mxu0
      %3141 = vmatprep.mubr.bf16.mxu0 0
      %3142 = vmatmul.mubr.bf16.gmra.mxu0 %v2983
      %v3143 = vpop.f32.mrf.mxu0
      %v3144 = vadd.f32 %v2935, %v3143
      %v3145 = vpop.f32.mrf.mxu0
      %v3146 = vpop.f32.mrf.mxu0
      %v3147 = vadd.f32 %v2935, %v3146
      %v3148 = vpop.f32.mrf.mxu0
      %3149 = vdwg.mxu0
      %v3150 = vmax.f32 %v3024, 0.0
      %v3151 = vmax.f32 %v3027, 0.0
      %v3152 = vmax.f32 %v3032, 0.0
      %v3153 = vmax.f32 %v3035, 0.0
      %v3154 = vmax.f32 %v3040, 0.0
      %v3155 = vmax.f32 %v3043, 0.0
      %v3156 = vmax.f32 %v3048, 0.0
      %v3157 = vmax.f32 %v3051, 0.0
      %v3158 = vmax.f32 %v3056, 0.0
      %v3159 = vmax.f32 %v3059, 0.0
      %v3160 = vmax.f32 %v3064, 0.0
      %v3161 = vmax.f32 %v3067, 0.0
      %v3162 = vmax.f32 %v3072, 0.0
      %v3163 = vmax.f32 %v3075, 0.0
      %v3164 = vmax.f32 %v3080, 0.0
      %v3165 = vmax.f32 %v3083, 0.0
      %v3166 = vmax.f32 %v3088, 0.0
      %v3167 = vmax.f32 %v3091, 0.0
      %v3168 = vmax.f32 %v3096, 0.0
      %v3169 = vmax.f32 %v3099, 0.0
      %v3170 = vmax.f32 %v3104, 0.0
      %v3171 = vmax.f32 %v3107, 0.0
      %v3172 = vmax.f32 %v3112, 0.0
      %v3173 = vmax.f32 %v3115, 0.0
      %v3174 = vmax.f32 %v3120, 0.0
      %v3175 = vmax.f32 %v3123, 0.0
      %v3176 = vmax.f32 %v3128, 0.0
      %v3177 = vmax.f32 %v3131, 0.0
      %v3178 = vmax.f32 %v3136, 0.0
      %v3179 = vmax.f32 %v3139, 0.0
      %v3180 = vmax.f32 %v3144, 0.0
      %v3181 = vmax.f32 %v3147, 0.0
      %v3182 = vpack.c.bf16 %v3151, %v3150
      %v3183 = vpack.c.bf16 %v3153, %v3152
      %v3184 = vpack.c.bf16 %v3155, %v3154
      %v3185 = vpack.c.bf16 %v3157, %v3156
      %v3186 = vpack.c.bf16 %v3159, %v3158
      %v3187 = vpack.c.bf16 %v3161, %v3160
      %v3188 = vpack.c.bf16 %v3163, %v3162
      %v3189 = vpack.c.bf16 %v3165, %v3164
      %v3190 = vpack.c.bf16 %v3167, %v3166
      %v3191 = vpack.c.bf16 %v3169, %v3168
      %v3192 = vpack.c.bf16 %v3171, %v3170
      %v3193 = vpack.c.bf16 %v3173, %v3172
      %v3194 = vpack.c.bf16 %v3175, %v3174
      %v3195 = vpack.c.bf16 %v3177, %v3176
      %v3196 = vpack.c.bf16 %v3179, %v3178
      %v3197 = vpack.c.bf16 %v3181, %v3180
      %v3198 = vld [vmem:[%s6] sm:$0xf]
      %v3199 = vld [vmem:[%s6 + $0x4] sm:$0x3]
      %v3200 = vld [vmem:[%s14] sm:$0x1]
      %v3202 = vlaneseq
      %v3203 = vshrl.u32 %v3202, 7
      %v3204 = vsub.s32 0, %v3203
      %v3205 = vrot.slane %v3200, %v3204
      %v3209 = vunpack.c.l.b16 %v3198
      %v3210 = vunpack.c.l.b16 %v3199
      %v3211 = vpack.c.b16 %v3210, %v3209
      %v3213 = vsel %vm2666, %v3182, 0
      %v3216 = vsel %vm2666, %v3183, 0
      %v3219 = vsel %vm2666, %v3184, 0
      %v3222 = vsel %vm2666, %v3185, 0
      %v3225 = vsel %vm2666, %v3186, 0
      %v3228 = vsel %vm2666, %v3187, 0
      %v3231 = vsel %vm2666, %v3188, 0
      %v3234 = vsel %vm2666, %v3189, 0
      %v3237 = vsel %vm2666, %v3190, 0
      %v3240 = vsel %vm2666, %v3191, 0
      %v3243 = vsel %vm2666, %v3192, 0
      %v3246 = vsel %vm2666, %v3193, 0
      %v3249 = vsel %vm2666, %v3194, 0
      %v3252 = vsel %vm2666, %v3195, 0
      %v3255 = vsel %vm2666, %v3196, 0
      %v3258 = vsel %vm2666, %v3197, 0
      %v3261 = vsel %vm2715, %v3211, 0
      %3263 = vmatprep.subr.bf16.mxu0 0
      %3264 = vmatpush1.bf16.msra.mxu0 0
      %3265 = vmatprep.subr.bf16.mxu0 0
      %3266 = vmatpush1.bf16.msra.mxu0 0
      %3267 = vmatprep.subr.bf16.mxu0 0
      %3268 = vmatpush1.bf16.msra.mxu0 0
      %3269 = vmatprep.subr.bf16.mxu0 0
      %3270 = vmatpush1.bf16.msra.mxu0 0
      %3271 = vmatprep.subr.bf16.mxu0 0
      %3272 = vmatpush1.bf16.msra.mxu0 0
      %3273 = vmatprep.subr.bf16.mxu0 0
      %3274 = vmatpush1.bf16.msra.mxu0 0
      %3275 = vmatprep.subr.bf16.mxu0 0
      %3276 = vmatpush1.bf16.msra.mxu0 0
      %3277 = vmatprep.subr.bf16.mxu0 0
      %3278 = vmatpush1.bf16.msra.mxu0 %v3261
      %3279 = vmatprep.subr.bf16.mxu0 0
      %3280 = vmatpush2.bf16.msra.mxu0 0
      %3281 = vmatprep.subr.bf16.mxu0 0
      %3282 = vmatpush2.bf16.msra.mxu0 0
      %3283 = vmatprep.subr.bf16.mxu0 0
      %3284 = vmatpush2.bf16.msra.mxu0 0
      %3285 = vmatprep.subr.bf16.mxu0 0
      %3286 = vmatpush2.bf16.msra.mxu0 0
      %3287 = vmatprep.subr.bf16.mxu0 0
      %3288 = vmatpush2.bf16.msra.mxu0 0
      %3289 = vmatprep.subr.bf16.mxu0 0
      %3290 = vmatpush2.bf16.msra.mxu0 0
      %3291 = vmatprep.subr.bf16.mxu0 0
      %3292 = vmatpush2.bf16.msra.mxu0 0
      %3293 = vmatprep.subr.bf16.mxu0 0
      %3294 = vmatpush2.bf16.msra.mxu0 0
      %3295 = vmatprep.mubr.bf16.mxu0 0
      %3296 = vmatmul.mubr.bf16.gmra.mxu0 %v3213
      %v3297 = vpop.f32.mrf.mxu0
      %v3298 = vadd.f32 %v3205, %v3297
      %v3299 = vpop.f32.mrf.mxu0
      %v3300 = vpop.f32.mrf.mxu0
      %v3301 = vadd.f32 %v3205, %v3300
      %v3302 = vpop.f32.mrf.mxu0
      %3303 = vmatprep.mubr.bf16.mxu0 0
      %3304 = vmatmul.mubr.bf16.gmra.mxu0 %v3216
      %v3305 = vpop.f32.mrf.mxu0
      %v3306 = vadd.f32 %v3205, %v3305
      %v3307 = vpop.f32.mrf.mxu0
      %v3308 = vpop.f32.mrf.mxu0
      %v3309 = vadd.f32 %v3205, %v3308
      %v3310 = vpop.f32.mrf.mxu0
      %3311 = vmatprep.mubr.bf16.mxu0 0
      %3312 = vmatmul.mubr.bf16.gmra.mxu0 %v3219
      %v3313 = vpop.f32.mrf.mxu0
      %v3314 = vadd.f32 %v3205, %v3313
      %v3315 = vpop.f32.mrf.mxu0
      %v3316 = vpop.f32.mrf.mxu0
      %v3317 = vadd.f32 %v3205, %v3316
      %v3318 = vpop.f32.mrf.mxu0
      %3319 = vmatprep.mubr.bf16.mxu0 0
      %3320 = vmatmul.mubr.bf16.gmra.mxu0 %v3222
      %v3321 = vpop.f32.mrf.mxu0
      %v3322 = vadd.f32 %v3205, %v3321
      %v3323 = vpop.f32.mrf.mxu0
      %v3324 = vpop.f32.mrf.mxu0
      %v3325 = vadd.f32 %v3205, %v3324
      %v3326 = vpop.f32.mrf.mxu0
      %3327 = vmatprep.mubr.bf16.mxu0 0
      %3328 = vmatmul.mubr.bf16.gmra.mxu0 %v3225
      %v3329 = vpop.f32.mrf.mxu0
      %v3330 = vadd.f32 %v3205, %v3329
      %v3331 = vpop.f32.mrf.mxu0
      %v3332 = vpop.f32.mrf.mxu0
      %v3333 = vadd.f32 %v3205, %v3332
      %v3334 = vpop.f32.mrf.mxu0
      %3335 = vmatprep.mubr.bf16.mxu0 0
      %3336 = vmatmul.mubr.bf16.gmra.mxu0 %v3228
      %v3337 = vpop.f32.mrf.mxu0
      %v3338 = vadd.f32 %v3205, %v3337
      %v3339 = vpop.f32.mrf.mxu0
      %v3340 = vpop.f32.mrf.mxu0
      %v3341 = vadd.f32 %v3205, %v3340
      %v3342 = vpop.f32.mrf.mxu0
      %3343 = vmatprep.mubr.bf16.mxu0 0
      %3344 = vmatmul.mubr.bf16.gmra.mxu0 %v3231
      %v3345 = vpop.f32.mrf.mxu0
      %v3346 = vadd.f32 %v3205, %v3345
      %v3347 = vpop.f32.mrf.mxu0
      %v3348 = vpop.f32.mrf.mxu0
      %v3349 = vadd.f32 %v3205, %v3348
      %v3350 = vpop.f32.mrf.mxu0
      %3351 = vmatprep.mubr.bf16.mxu0 0
      %3352 = vmatmul.mubr.bf16.gmra.mxu0 %v3234
      %v3353 = vpop.f32.mrf.mxu0
      %v3354 = vadd.f32 %v3205, %v3353
      %v3355 = vpop.f32.mrf.mxu0
      %v3356 = vpop.f32.mrf.mxu0
      %v3357 = vadd.f32 %v3205, %v3356
      %v3358 = vpop.f32.mrf.mxu0
      %3359 = vmatprep.mubr.bf16.mxu0 0
      %3360 = vmatmul.mubr.bf16.gmra.mxu0 %v3237
      %v3361 = vpop.f32.mrf.mxu0
      %v3362 = vadd.f32 %v3205, %v3361
      %v3363 = vpop.f32.mrf.mxu0
      %v3364 = vpop.f32.mrf.mxu0
      %v3365 = vadd.f32 %v3205, %v3364
      %v3366 = vpop.f32.mrf.mxu0
      %3367 = vmatprep.mubr.bf16.mxu0 0
      %3368 = vmatmul.mubr.bf16.gmra.mxu0 %v3240
      %v3369 = vpop.f32.mrf.mxu0
      %v3370 = vadd.f32 %v3205, %v3369
      %v3371 = vpop.f32.mrf.mxu0
      %v3372 = vpop.f32.mrf.mxu0
      %v3373 = vadd.f32 %v3205, %v3372
      %v3374 = vpop.f32.mrf.mxu0
      %3375 = vmatprep.mubr.bf16.mxu0 0
      %3376 = vmatmul.mubr.bf16.gmra.mxu0 %v3243
      %v3377 = vpop.f32.mrf.mxu0
      %v3378 = vadd.f32 %v3205, %v3377
      %v3379 = vpop.f32.mrf.mxu0
      %v3380 = vpop.f32.mrf.mxu0
      %v3381 = vadd.f32 %v3205, %v3380
      %v3382 = vpop.f32.mrf.mxu0
      %3383 = vmatprep.mubr.bf16.mxu0 0
      %3384 = vmatmul.mubr.bf16.gmra.mxu0 %v3246
      %v3385 = vpop.f32.mrf.mxu0
      %v3386 = vadd.f32 %v3205, %v3385
      %v3387 = vpop.f32.mrf.mxu0
      %v3388 = vpop.f32.mrf.mxu0
      %v3389 = vadd.f32 %v3205, %v3388
      %v3390 = vpop.f32.mrf.mxu0
      %3391 = vmatprep.mubr.bf16.mxu0 0
      %3392 = vmatmul.mubr.bf16.gmra.mxu0 %v3249
      %v3393 = vpop.f32.mrf.mxu0
      %v3394 = vadd.f32 %v3205, %v3393
      %v3395 = vpop.f32.mrf.mxu0
      %v3396 = vpop.f32.mrf.mxu0
      %v3397 = vadd.f32 %v3205, %v3396
      %v3398 = vpop.f32.mrf.mxu0
      %3399 = vmatprep.mubr.bf16.mxu0 0
      %3400 = vmatmul.mubr.bf16.gmra.mxu0 %v3252
      %v3401 = vpop.f32.mrf.mxu0
      %v3402 = vadd.f32 %v3205, %v3401
      %v3403 = vpop.f32.mrf.mxu0
      %v3404 = vpop.f32.mrf.mxu0
      %v3405 = vadd.f32 %v3205, %v3404
      %v3406 = vpop.f32.mrf.mxu0
      %3407 = vmatprep.mubr.bf16.mxu0 0
      %3408 = vmatmul.mubr.bf16.gmra.mxu0 %v3255
      %v3409 = vpop.f32.mrf.mxu0
      %v3410 = vadd.f32 %v3205, %v3409
      %v3411 = vpop.f32.mrf.mxu0
      %v3412 = vpop.f32.mrf.mxu0
      %v3413 = vadd.f32 %v3205, %v3412
      %v3414 = vpop.f32.mrf.mxu0
      %3415 = vmatprep.mubr.bf16.mxu0 0
      %3416 = vmatmul.mubr.bf16.gmra.mxu0 %v3258
      %v3417 = vpop.f32.mrf.mxu0
      %v3418 = vadd.f32 %v3205, %v3417
      %v3419 = vpop.f32.mrf.mxu0
      %v3420 = vpop.f32.mrf.mxu0
      %v3421 = vadd.f32 %v3205, %v3420
      %v3422 = vpop.f32.mrf.mxu0
      %3423 = vdwg.mxu0
      %v3424 = vmax.f32 %v3298, 0.0
      %v3425 = vmax.f32 %v3301, 0.0
      %v3426 = vmax.f32 %v3306, 0.0
      %v3427 = vmax.f32 %v3309, 0.0
      %v3428 = vmax.f32 %v3314, 0.0
      %v3429 = vmax.f32 %v3317, 0.0
      %v3430 = vmax.f32 %v3322, 0.0
      %v3431 = vmax.f32 %v3325, 0.0
      %v3432 = vmax.f32 %v3330, 0.0
      %v3433 = vmax.f32 %v3333, 0.0
      %v3434 = vmax.f32 %v3338, 0.0
      %v3435 = vmax.f32 %v3341, 0.0
      %v3436 = vmax.f32 %v3346, 0.0
      %v3437 = vmax.f32 %v3349, 0.0
      %v3438 = vmax.f32 %v3354, 0.0
      %v3439 = vmax.f32 %v3357, 0.0
      %v3440 = vmax.f32 %v3362, 0.0
      %v3441 = vmax.f32 %v3365, 0.0
      %v3442 = vmax.f32 %v3370, 0.0
      %v3443 = vmax.f32 %v3373, 0.0
      %v3444 = vmax.f32 %v3378, 0.0
      %v3445 = vmax.f32 %v3381, 0.0
      %v3446 = vmax.f32 %v3386, 0.0
      %v3447 = vmax.f32 %v3389, 0.0
      %v3448 = vmax.f32 %v3394, 0.0
      %v3449 = vmax.f32 %v3397, 0.0
      %v3450 = vmax.f32 %v3402, 0.0
      %v3451 = vmax.f32 %v3405, 0.0
      %v3452 = vmax.f32 %v3410, 0.0
      %v3453 = vmax.f32 %v3413, 0.0
      %v3454 = vmax.f32 %v3418, 0.0
      %v3455 = vmax.f32 %v3421, 0.0
      %v3456 = vpack.c.bf16 %v3425, %v3424
      %v3457 = vpack.c.bf16 %v3427, %v3426
      %v3458 = vpack.c.bf16 %v3429, %v3428
      %v3459 = vpack.c.bf16 %v3431, %v3430
      %v3460 = vpack.c.bf16 %v3433, %v3432
      %v3461 = vpack.c.bf16 %v3435, %v3434
      %v3462 = vpack.c.bf16 %v3437, %v3436
      %v3463 = vpack.c.bf16 %v3439, %v3438
      %v3464 = vpack.c.bf16 %v3441, %v3440
      %v3465 = vpack.c.bf16 %v3443, %v3442
      %v3466 = vpack.c.bf16 %v3445, %v3444
      %v3467 = vpack.c.bf16 %v3447, %v3446
      %v3468 = vpack.c.bf16 %v3449, %v3448
      %v3469 = vpack.c.bf16 %v3451, %v3450
      %v3470 = vpack.c.bf16 %v3453, %v3452
      %v3471 = vpack.c.bf16 %v3455, %v3454
      %v3472 = vld [vmem:[%s7] sm:$0xf]
      %v3473 = vld [vmem:[%s7 + $0x4] sm:$0xf]
      %v3474 = vld [vmem:[%s7 + $0x8] sm:$0xf]
      %v3475 = vld [vmem:[%s7 + $0xc] sm:$0xf]
      %v3476 = vld [vmem:[%s7 + $0x10] sm:$0xf]
      %v3477 = vld [vmem:[%s7 + $0x14] sm:$0xf]
      %v3478 = vld [vmem:[%s7 + $0x18] sm:$0xf]
      %v3479 = vld [vmem:[%s7 + $0x1c] sm:$0xf]
      %v3480 = vld [vmem:[%s15] sm:$0x1]
      %v3482 = vlaneseq
      %v3483 = vshrl.u32 %v3482, 7
      %v3484 = vsub.s32 0, %v3483
      %v3485 = vrot.slane %v3480, %v3484
      %v3495 = vunpack.c.l.b16 %v3472
      %v3496 = vunpack.c.l.b16 %v3473
      %v3497 = vunpack.c.l.b16 %v3474
      %v3498 = vunpack.c.l.b16 %v3475
      %v3499 = vunpack.c.l.b16 %v3476
      %v3500 = vunpack.c.l.b16 %v3477
      %v3501 = vunpack.c.l.b16 %v3478
      %v3502 = vunpack.c.l.b16 %v3479
      %v3503 = vpack.c.b16 %v3496, %v3495
      %v3504 = vpack.c.b16 %v3498, %v3497
      %v3505 = vpack.c.b16 %v3500, %v3499
      %v3506 = vpack.c.b16 %v3502, %v3501
      %v3512 = vsel %vm2394, %v3456, 0
      %v3515 = vsel %vm2394, %v3457, 0
      %v3518 = vsel %vm2394, %v3458, 0
      %v3521 = vsel %vm2394, %v3459, 0
      %v3524 = vsel %vm2394, %v3460, 0
      %v3527 = vsel %vm2394, %v3461, 0
      %v3530 = vsel %vm2394, %v3462, 0
      %v3533 = vsel %vm2394, %v3463, 0
      %v3536 = vsel %vm2394, %v3464, 0
      %v3539 = vsel %vm2394, %v3465, 0
      %v3542 = vsel %vm2394, %v3466, 0
      %v3545 = vsel %vm2394, %v3467, 0
      %v3548 = vsel %vm2394, %v3468, 0
      %v3551 = vsel %vm2394, %v3469, 0
      %v3554 = vsel %vm2394, %v3470, 0
      %v3557 = vsel %vm2394, %v3471, 0
      %3559 = vmatprep.subr.bf16.mxu0 0
      %3560 = vmatpush1.bf16.msra.mxu0 0
      %3561 = vmatprep.subr.bf16.mxu0 0
      %3562 = vmatpush1.bf16.msra.mxu0 0
      %3563 = vmatprep.subr.bf16.mxu0 0
      %3564 = vmatpush1.bf16.msra.mxu0 0
      %3565 = vmatprep.subr.bf16.mxu0 0
      %3566 = vmatpush1.bf16.msra.mxu0 0
      %3567 = vmatprep.subr.bf16.mxu0 0
      %3568 = vmatpush1.bf16.msra.mxu0 %v3506
      %3569 = vmatprep.subr.bf16.mxu0 0
      %3570 = vmatpush1.bf16.msra.mxu0 %v3505
      %3571 = vmatprep.subr.bf16.mxu0 0
      %3572 = vmatpush1.bf16.msra.mxu0 %v3504
      %3573 = vmatprep.subr.bf16.mxu0 0
      %3574 = vmatpush1.bf16.msra.mxu0 %v3503
      %3575 = vmatprep.subr.bf16.mxu0 0
      %3576 = vmatpush2.bf16.msra.mxu0 0
      %3577 = vmatprep.subr.bf16.mxu0 0
      %3578 = vmatpush2.bf16.msra.mxu0 0
      %3579 = vmatprep.subr.bf16.mxu0 0
      %3580 = vmatpush2.bf16.msra.mxu0 0
      %3581 = vmatprep.subr.bf16.mxu0 0
      %3582 = vmatpush2.bf16.msra.mxu0 0
      %3583 = vmatprep.subr.bf16.mxu0 0
      %3584 = vmatpush2.bf16.msra.mxu0 0
      %3585 = vmatprep.subr.bf16.mxu0 0
      %3586 = vmatpush2.bf16.msra.mxu0 0
      %3587 = vmatprep.subr.bf16.mxu0 0
      %3588 = vmatpush2.bf16.msra.mxu0 0
      %3589 = vmatprep.subr.bf16.mxu0 0
      %3590 = vmatpush2.bf16.msra.mxu0 0
      %3591 = vmatprep.mubr.bf16.mxu0 0
      %3592 = vmatmul.mubr.bf16.gmra.mxu0 %v3512
      %v3593 = vpop.f32.mrf.mxu0
      %v3594 = vadd.f32 %v3485, %v3593
      %v3595 = vpop.f32.mrf.mxu0
      %v3596 = vpop.f32.mrf.mxu0
      %v3597 = vadd.f32 %v3485, %v3596
      %v3598 = vpop.f32.mrf.mxu0
      %3599 = vmatprep.mubr.bf16.mxu0 0
      %3600 = vmatmul.mubr.bf16.gmra.mxu0 %v3515
      %v3601 = vpop.f32.mrf.mxu0
      %v3602 = vadd.f32 %v3485, %v3601
      %v3603 = vpop.f32.mrf.mxu0
      %v3604 = vpop.f32.mrf.mxu0
      %v3605 = vadd.f32 %v3485, %v3604
      %v3606 = vpop.f32.mrf.mxu0
      %3607 = vmatprep.mubr.bf16.mxu0 0
      %3608 = vmatmul.mubr.bf16.gmra.mxu0 %v3518
      %v3609 = vpop.f32.mrf.mxu0
      %v3610 = vadd.f32 %v3485, %v3609
      %v3611 = vpop.f32.mrf.mxu0
      %v3612 = vpop.f32.mrf.mxu0
      %v3613 = vadd.f32 %v3485, %v3612
      %v3614 = vpop.f32.mrf.mxu0
      %3615 = vmatprep.mubr.bf16.mxu0 0
      %3616 = vmatmul.mubr.bf16.gmra.mxu0 %v3521
      %v3617 = vpop.f32.mrf.mxu0
      %v3618 = vadd.f32 %v3485, %v3617
      %v3619 = vpop.f32.mrf.mxu0
      %v3620 = vpop.f32.mrf.mxu0
      %v3621 = vadd.f32 %v3485, %v3620
      %v3622 = vpop.f32.mrf.mxu0
      %3623 = vmatprep.mubr.bf16.mxu0 0
      %3624 = vmatmul.mubr.bf16.gmra.mxu0 %v3524
      %v3625 = vpop.f32.mrf.mxu0
      %v3626 = vadd.f32 %v3485, %v3625
      %v3627 = vpop.f32.mrf.mxu0
      %v3628 = vpop.f32.mrf.mxu0
      %v3629 = vadd.f32 %v3485, %v3628
      %v3630 = vpop.f32.mrf.mxu0
      %3631 = vmatprep.mubr.bf16.mxu0 0
      %3632 = vmatmul.mubr.bf16.gmra.mxu0 %v3527
      %v3633 = vpop.f32.mrf.mxu0
      %v3634 = vadd.f32 %v3485, %v3633
      %v3635 = vpop.f32.mrf.mxu0
      %v3636 = vpop.f32.mrf.mxu0
      %v3637 = vadd.f32 %v3485, %v3636
      %v3638 = vpop.f32.mrf.mxu0
      %3639 = vmatprep.mubr.bf16.mxu0 0
      %3640 = vmatmul.mubr.bf16.gmra.mxu0 %v3530
      %v3641 = vpop.f32.mrf.mxu0
      %v3642 = vadd.f32 %v3485, %v3641
      %v3643 = vpop.f32.mrf.mxu0
      %v3644 = vpop.f32.mrf.mxu0
      %v3645 = vadd.f32 %v3485, %v3644
      %v3646 = vpop.f32.mrf.mxu0
      %3647 = vmatprep.mubr.bf16.mxu0 0
      %3648 = vmatmul.mubr.bf16.gmra.mxu0 %v3533
      %v3649 = vpop.f32.mrf.mxu0
      %v3650 = vadd.f32 %v3485, %v3649
      %v3651 = vpop.f32.mrf.mxu0
      %v3652 = vpop.f32.mrf.mxu0
      %v3653 = vadd.f32 %v3485, %v3652
      %v3654 = vpop.f32.mrf.mxu0
      %3655 = vmatprep.mubr.bf16.mxu0 0
      %3656 = vmatmul.mubr.bf16.gmra.mxu0 %v3536
      %v3657 = vpop.f32.mrf.mxu0
      %v3658 = vadd.f32 %v3485, %v3657
      %v3659 = vpop.f32.mrf.mxu0
      %v3660 = vpop.f32.mrf.mxu0
      %v3661 = vadd.f32 %v3485, %v3660
      %v3662 = vpop.f32.mrf.mxu0
      %3663 = vmatprep.mubr.bf16.mxu0 0
      %3664 = vmatmul.mubr.bf16.gmra.mxu0 %v3539
      %v3665 = vpop.f32.mrf.mxu0
      %v3666 = vadd.f32 %v3485, %v3665
      %v3667 = vpop.f32.mrf.mxu0
      %v3668 = vpop.f32.mrf.mxu0
      %v3669 = vadd.f32 %v3485, %v3668
      %v3670 = vpop.f32.mrf.mxu0
      %3671 = vmatprep.mubr.bf16.mxu0 0
      %3672 = vmatmul.mubr.bf16.gmra.mxu0 %v3542
      %v3673 = vpop.f32.mrf.mxu0
      %v3674 = vadd.f32 %v3485, %v3673
      %v3675 = vpop.f32.mrf.mxu0
      %v3676 = vpop.f32.mrf.mxu0
      %v3677 = vadd.f32 %v3485, %v3676
      %v3678 = vpop.f32.mrf.mxu0
      %3679 = vmatprep.mubr.bf16.mxu0 0
      %3680 = vmatmul.mubr.bf16.gmra.mxu0 %v3545
      %v3681 = vpop.f32.mrf.mxu0
      %v3682 = vadd.f32 %v3485, %v3681
      %v3683 = vpop.f32.mrf.mxu0
      %v3684 = vpop.f32.mrf.mxu0
      %v3685 = vadd.f32 %v3485, %v3684
      %v3686 = vpop.f32.mrf.mxu0
      %3687 = vmatprep.mubr.bf16.mxu0 0
      %3688 = vmatmul.mubr.bf16.gmra.mxu0 %v3548
      %v3689 = vpop.f32.mrf.mxu0
      %v3690 = vadd.f32 %v3485, %v3689
      %v3691 = vpop.f32.mrf.mxu0
      %v3692 = vpop.f32.mrf.mxu0
      %v3693 = vadd.f32 %v3485, %v3692
      %v3694 = vpop.f32.mrf.mxu0
      %3695 = vmatprep.mubr.bf16.mxu0 0
      %3696 = vmatmul.mubr.bf16.gmra.mxu0 %v3551
      %v3697 = vpop.f32.mrf.mxu0
      %v3698 = vadd.f32 %v3485, %v3697
      %v3699 = vpop.f32.mrf.mxu0
      %v3700 = vpop.f32.mrf.mxu0
      %v3701 = vadd.f32 %v3485, %v3700
      %v3702 = vpop.f32.mrf.mxu0
      %3703 = vmatprep.mubr.bf16.mxu0 0
      %3704 = vmatmul.mubr.bf16.gmra.mxu0 %v3554
      %v3705 = vpop.f32.mrf.mxu0
      %v3706 = vadd.f32 %v3485, %v3705
      %v3707 = vpop.f32.mrf.mxu0
      %v3708 = vpop.f32.mrf.mxu0
      %v3709 = vadd.f32 %v3485, %v3708
      %v3710 = vpop.f32.mrf.mxu0
      %3711 = vmatprep.mubr.bf16.mxu0 0
      %3712 = vmatmul.mubr.bf16.gmra.mxu0 %v3557
      %v3713 = vpop.f32.mrf.mxu0
      %v3714 = vadd.f32 %v3485, %v3713
      %v3715 = vpop.f32.mrf.mxu0
      %v3716 = vpop.f32.mrf.mxu0
      %v3717 = vadd.f32 %v3485, %v3716
      %v3718 = vpop.f32.mrf.mxu0
      %3719 = vdwg.mxu0
      %v3720 = vmax.f32 %v3594, 0.0
      %v3721 = vmax.f32 %v3597, 0.0
      %v3722 = vmax.f32 %v3602, 0.0
      %v3723 = vmax.f32 %v3605, 0.0
      %v3724 = vmax.f32 %v3610, 0.0
      %v3725 = vmax.f32 %v3613, 0.0
      %v3726 = vmax.f32 %v3618, 0.0
      %v3727 = vmax.f32 %v3621, 0.0
      %v3728 = vmax.f32 %v3626, 0.0
      %v3729 = vmax.f32 %v3629, 0.0
      %v3730 = vmax.f32 %v3634, 0.0
      %v3731 = vmax.f32 %v3637, 0.0
      %v3732 = vmax.f32 %v3642, 0.0
      %v3733 = vmax.f32 %v3645, 0.0
      %v3734 = vmax.f32 %v3650, 0.0
      %v3735 = vmax.f32 %v3653, 0.0
      %v3736 = vmax.f32 %v3658, 0.0
      %v3737 = vmax.f32 %v3661, 0.0
      %v3738 = vmax.f32 %v3666, 0.0
      %v3739 = vmax.f32 %v3669, 0.0
      %v3740 = vmax.f32 %v3674, 0.0
      %v3741 = vmax.f32 %v3677, 0.0
      %v3742 = vmax.f32 %v3682, 0.0
      %v3743 = vmax.f32 %v3685, 0.0
      %v3744 = vmax.f32 %v3690, 0.0
      %v3745 = vmax.f32 %v3693, 0.0
      %v3746 = vmax.f32 %v3698, 0.0
      %v3747 = vmax.f32 %v3701, 0.0
      %v3748 = vmax.f32 %v3706, 0.0
      %v3749 = vmax.f32 %v3709, 0.0
      %v3750 = vmax.f32 %v3714, 0.0
      %v3751 = vmax.f32 %v3717, 0.0
      %v3752 = vpack.c.bf16 %v3721, %v3720
      %v3753 = vpack.c.bf16 %v3723, %v3722
      %v3754 = vpack.c.bf16 %v3725, %v3724
      %v3755 = vpack.c.bf16 %v3727, %v3726
      %v3756 = vpack.c.bf16 %v3729, %v3728
      %v3757 = vpack.c.bf16 %v3731, %v3730
      %v3758 = vpack.c.bf16 %v3733, %v3732
      %v3759 = vpack.c.bf16 %v3735, %v3734
      %v3760 = vpack.c.bf16 %v3737, %v3736
      %v3761 = vpack.c.bf16 %v3739, %v3738
      %v3762 = vpack.c.bf16 %v3741, %v3740
      %v3763 = vpack.c.bf16 %v3743, %v3742
      %v3764 = vpack.c.bf16 %v3745, %v3744
      %v3765 = vpack.c.bf16 %v3747, %v3746
      %v3766 = vpack.c.bf16 %v3749, %v3748
      %v3767 = vpack.c.bf16 %v3751, %v3750
      %v3768 = vld [vmem:[%s8] sm:$0xff]
      %v3769 = vld [vmem:[%s8 + $0x8] sm:$0xff]
      %v3770 = vld [vmem:[%s8 + $0x10] sm:$0xff]
      %v3771 = vld [vmem:[%s8 + $0x18] sm:$0xf]
      %v3772 = vld [vmem:[%s8 + $0x1c] sm:$0xff]
      %v3773 = vld [vmem:[%s8 + $0x24] sm:$0xff]
      %v3774 = vld [vmem:[%s8 + $0x2c] sm:$0xff]
      %v3775 = vld [vmem:[%s8 + $0x34] sm:$0xf]
      %v3776 = vld [vmem:[%s8 + $0x38] sm:$0xff]
      %v3777 = vld [vmem:[%s8 + $0x40] sm:$0xff]
      %v3778 = vld [vmem:[%s8 + $0x48] sm:$0xff]
      %v3779 = vld [vmem:[%s8 + $0x50] sm:$0xf]
      %v3780 = vld [vmem:[%s8 + $0x54] sm:$0xff]
      %v3781 = vld [vmem:[%s8 + $0x5c] sm:$0xff]
      %v3782 = vld [vmem:[%s8 + $0x64] sm:$0xff]
      %v3783 = vld [vmem:[%s8 + $0x6c] sm:$0xf]
      %v3784 = vld [vmem:[%s8 + $0x70] sm:$0xff]
      %v3785 = vld [vmem:[%s8 + $0x78] sm:$0xff]
      %v3786 = vld [vmem:[%s8 + $0x80] sm:$0xff]
      %v3787 = vld [vmem:[%s8 + $0x88] sm:$0xf]
      %v3788 = vld [vmem:[%s8 + $0x8c] sm:$0xff]
      %v3789 = vld [vmem:[%s8 + $0x94] sm:$0xff]
      %v3790 = vld [vmem:[%s8 + $0x9c] sm:$0xff]
      %v3791 = vld [vmem:[%s8 + $0xa4] sm:$0xf]
      %v3792 = vld [vmem:[%s8 + $0xa8] sm:$0xff]
      %v3793 = vld [vmem:[%s8 + $0xb0] sm:$0xff]
      %v3794 = vld [vmem:[%s8 + $0xb8] sm:$0xff]
      %v3795 = vld [vmem:[%s8 + $0xc0] sm:$0xf]
      %v3796 = vld [vmem:[%s8 + $0xc4] sm:$0xff]
      %v3797 = vld [vmem:[%s8 + $0xcc] sm:$0xff]
      %v3798 = vld [vmem:[%s8 + $0xd4] sm:$0xff]
      %v3799 = vld [vmem:[%s8 + $0xdc] sm:$0xf]
      %v3800 = vld [vmem:[%s8 + $0xe0] sm:$0xff]
      %v3801 = vld [vmem:[%s8 + $0xe8] sm:$0xff]
      %v3802 = vld [vmem:[%s8 + $0xf0] sm:$0xff]
      %v3803 = vld [vmem:[%s8 + $0xf8] sm:$0xf]
      %v3804 = vld [vmem:[%s8 + $0xfc] sm:$0xff]
      %v3805 = vld [vmem:[%s8 + $0x104] sm:$0xff]
      %v3806 = vld [vmem:[%s8 + $0x10c] sm:$0xff]
      %v3807 = vld [vmem:[%s8 + $0x114] sm:$0xf]
      %v3808 = vld [vmem:[%s8 + $0x118] sm:$0xff]
      %v3809 = vld [vmem:[%s8 + $0x120] sm:$0xff]
      %v3810 = vld [vmem:[%s8 + $0x128] sm:$0xff]
      %v3811 = vld [vmem:[%s8 + $0x130] sm:$0xf]
      %v3812 = vld [vmem:[%s8 + $0x134] sm:$0xff]
      %v3813 = vld [vmem:[%s8 + $0x13c] sm:$0xff]
      %v3814 = vld [vmem:[%s8 + $0x144] sm:$0xff]
      %v3815 = vld [vmem:[%s8 + $0x14c] sm:$0xf]
      %v3816 = vld [vmem:[%s8 + $0x150] sm:$0xff]
      %v3817 = vld [vmem:[%s8 + $0x158] sm:$0xff]
      %v3818 = vld [vmem:[%s8 + $0x160] sm:$0xff]
      %v3819 = vld [vmem:[%s8 + $0x168] sm:$0xf]
      %v3820 = vld [vmem:[%s8 + $0x16c] sm:$0xff]
      %v3821 = vld [vmem:[%s8 + $0x174] sm:$0xff]
      %v3822 = vld [vmem:[%s8 + $0x17c] sm:$0xff]
      %v3823 = vld [vmem:[%s8 + $0x184] sm:$0xf]
      %v3824 = vld [vmem:[%s8 + $0x188] sm:$0xff]
      %v3825 = vld [vmem:[%s8 + $0x190] sm:$0xff]
      %v3826 = vld [vmem:[%s8 + $0x198] sm:$0xff]
      %v3827 = vld [vmem:[%s8 + $0x1a0] sm:$0xf]
      %v3828 = vld [vmem:[%s8 + $0x1a4] sm:$0xff]
      %v3829 = vld [vmem:[%s8 + $0x1ac] sm:$0xff]
      %v3830 = vld [vmem:[%s8 + $0x1b4] sm:$0xff]
      %v3831 = vld [vmem:[%s8 + $0x1bc] sm:$0xf]
      %v3832 = vld [vmem:[%s16] sm:$0x7f]
      %v3834 = vlaneseq
      %v3835 = vshrl.u32 %v3834, 7
      %v3836 = vsub.s32 0, %v3835
      %v3837 = vrot.slane %v3832, %v3836
      %v3838 = vlaneseq
      %v3839 = vshrl.u32 %v3838, 7
      %v3840 = vsub.s32 1, %v3839
      %v3841 = vrot.slane %v3832, %v3840
      %v3842 = vlaneseq
      %v3843 = vshrl.u32 %v3842, 7
      %v3844 = vsub.s32 2, %v3843
      %v3845 = vrot.slane %v3832, %v3844
      %v3846 = vlaneseq
      %v3847 = vshrl.u32 %v3846, 7
      %v3848 = vsub.s32 3, %v3847
      %v3849 = vrot.slane %v3832, %v3848
      %v3850 = vlaneseq
      %v3851 = vshrl.u32 %v3850, 7
      %v3852 = vsub.s32 4, %v3851
      %v3853 = vrot.slane %v3832, %v3852
      %v3854 = vlaneseq
      %v3855 = vshrl.u32 %v3854, 7
      %v3856 = vsub.s32 5, %v3855
      %v3857 = vrot.slane %v3832, %v3856
      %v3858 = vlaneseq
      %v3859 = vshrl.u32 %v3858, 7
      %v3860 = vsub.s32 6, %v3859
      %v3861 = vrot.slane %v3832, %v3860
      %v3933 = vunpack.c.l.b16 %v3768
      %v3934 = vunpack.c.h.b16 %v3768
      %v3935 = vunpack.c.l.b16 %v3769
      %v3936 = vunpack.c.h.b16 %v3769
      %v3937 = vunpack.c.l.b16 %v3770
      %v3938 = vunpack.c.h.b16 %v3770
      %v3939 = vunpack.c.l.b16 %v3771
      %v3940 = vunpack.c.l.b16 %v3772
      %v3941 = vunpack.c.h.b16 %v3772
      %v3942 = vunpack.c.l.b16 %v3773
      %v3943 = vunpack.c.h.b16 %v3773
      %v3944 = vunpack.c.l.b16 %v3774
      %v3945 = vunpack.c.h.b16 %v3774
      %v3946 = vunpack.c.l.b16 %v3775
      %v3947 = vunpack.c.l.b16 %v3776
      %v3948 = vunpack.c.h.b16 %v3776
      %v3949 = vunpack.c.l.b16 %v3777
      %v3950 = vunpack.c.h.b16 %v3777
      %v3951 = vunpack.c.l.b16 %v3778
      %v3952 = vunpack.c.h.b16 %v3778
      %v3953 = vunpack.c.l.b16 %v3779
      %v3954 = vunpack.c.l.b16 %v3780
      %v3955 = vunpack.c.h.b16 %v3780
      %v3956 = vunpack.c.l.b16 %v3781
      %v3957 = vunpack.c.h.b16 %v3781
      %v3958 = vunpack.c.l.b16 %v3782
      %v3959 = vunpack.c.h.b16 %v3782
      %v3960 = vunpack.c.l.b16 %v3783
      %v3961 = vunpack.c.l.b16 %v3784
      %v3962 = vunpack.c.h.b16 %v3784
      %v3963 = vunpack.c.l.b16 %v3785
      %v3964 = vunpack.c.h.b16 %v3785
      %v3965 = vunpack.c.l.b16 %v3786
      %v3966 = vunpack.c.h.b16 %v3786
      %v3967 = vunpack.c.l.b16 %v3787
      %v3968 = vunpack.c.l.b16 %v3788
      %v3969 = vunpack.c.h.b16 %v3788
      %v3970 = vunpack.c.l.b16 %v3789
      %v3971 = vunpack.c.h.b16 %v3789
      %v3972 = vunpack.c.l.b16 %v3790
      %v3973 = vunpack.c.h.b16 %v3790
      %v3974 = vunpack.c.l.b16 %v3791
      %v3975 = vunpack.c.l.b16 %v3792
      %v3976 = vunpack.c.h.b16 %v3792
      %v3977 = vunpack.c.l.b16 %v3793
      %v3978 = vunpack.c.h.b16 %v3793
      %v3979 = vunpack.c.l.b16 %v3794
      %v3980 = vunpack.c.h.b16 %v3794
      %v3981 = vunpack.c.l.b16 %v3795
      %v3982 = vunpack.c.l.b16 %v3796
      %v3983 = vunpack.c.h.b16 %v3796
      %v3984 = vunpack.c.l.b16 %v3797
      %v3985 = vunpack.c.h.b16 %v3797
      %v3986 = vunpack.c.l.b16 %v3798
      %v3987 = vunpack.c.h.b16 %v3798
      %v3988 = vunpack.c.l.b16 %v3799
      %v3989 = vunpack.c.l.b16 %v3800
      %v3990 = vunpack.c.h.b16 %v3800
      %v3991 = vunpack.c.l.b16 %v3801
      %v3992 = vunpack.c.h.b16 %v3801
      %v3993 = vunpack.c.l.b16 %v3802
      %v3994 = vunpack.c.h.b16 %v3802
      %v3995 = vunpack.c.l.b16 %v3803
      %v3996 = vunpack.c.l.b16 %v3804
      %v3997 = vunpack.c.h.b16 %v3804
      %v3998 = vunpack.c.l.b16 %v3805
      %v3999 = vunpack.c.h.b16 %v3805
      %v4000 = vunpack.c.l.b16 %v3806
      %v4001 = vunpack.c.h.b16 %v3806
      %v4002 = vunpack.c.l.b16 %v3807
      %v4003 = vunpack.c.l.b16 %v3808
      %v4004 = vunpack.c.h.b16 %v3808
      %v4005 = vunpack.c.l.b16 %v3809
      %v4006 = vunpack.c.h.b16 %v3809
      %v4007 = vunpack.c.l.b16 %v3810
      %v4008 = vunpack.c.h.b16 %v3810
      %v4009 = vunpack.c.l.b16 %v3811
      %v4010 = vunpack.c.l.b16 %v3812
      %v4011 = vunpack.c.h.b16 %v3812
      %v4012 = vunpack.c.l.b16 %v3813
      %v4013 = vunpack.c.h.b16 %v3813
      %v4014 = vunpack.c.l.b16 %v3814
      %v4015 = vunpack.c.h.b16 %v3814
      %v4016 = vunpack.c.l.b16 %v3815
      %v4017 = vunpack.c.l.b16 %v3816
      %v4018 = vunpack.c.h.b16 %v3816
      %v4019 = vunpack.c.l.b16 %v3817
      %v4020 = vunpack.c.h.b16 %v3817
      %v4021 = vunpack.c.l.b16 %v3818
      %v4022 = vunpack.c.h.b16 %v3818
      %v4023 = vunpack.c.l.b16 %v3819
      %v4024 = vunpack.c.l.b16 %v3820
      %v4025 = vunpack.c.h.b16 %v3820
      %v4026 = vunpack.c.l.b16 %v3821
      %v4027 = vunpack.c.h.b16 %v3821
      %v4028 = vunpack.c.l.b16 %v3822
      %v4029 = vunpack.c.h.b16 %v3822
      %v4030 = vunpack.c.l.b16 %v3823
      %v4031 = vunpack.c.l.b16 %v3824
      %v4032 = vunpack.c.h.b16 %v3824
      %v4033 = vunpack.c.l.b16 %v3825
      %v4034 = vunpack.c.h.b16 %v3825
      %v4035 = vunpack.c.l.b16 %v3826
      %v4036 = vunpack.c.h.b16 %v3826
      %v4037 = vunpack.c.l.b16 %v3827
      %v4038 = vunpack.c.l.b16 %v3828
      %v4039 = vunpack.c.h.b16 %v3828
      %v4040 = vunpack.c.l.b16 %v3829
      %v4041 = vunpack.c.h.b16 %v3829
      %v4042 = vunpack.c.l.b16 %v3830
      %v4043 = vunpack.c.h.b16 %v3830
      %v4044 = vunpack.c.l.b16 %v3831
      %v4045 = vpack.c.b16 %v3940, %v3933
      %v4046 = vpack.c.b16 %v3941, %v3934
      %v4047 = vpack.c.b16 %v3942, %v3935
      %v4048 = vpack.c.b16 %v3943, %v3936
      %v4049 = vpack.c.b16 %v3944, %v3937
      %v4050 = vpack.c.b16 %v3945, %v3938
      %v4051 = vpack.c.b16 %v3946, %v3939
      %v4052 = vpack.c.b16 %v3954, %v3947
      %v4053 = vpack.c.b16 %v3955, %v3948
      %v4054 = vpack.c.b16 %v3956, %v3949
      %v4055 = vpack.c.b16 %v3957, %v3950
      %v4056 = vpack.c.b16 %v3958, %v3951
      %v4057 = vpack.c.b16 %v3959, %v3952
      %v4058 = vpack.c.b16 %v3960, %v3953
      %v4059 = vpack.c.b16 %v3968, %v3961
      %v4060 = vpack.c.b16 %v3969, %v3962
      %v4061 = vpack.c.b16 %v3970, %v3963
      %v4062 = vpack.c.b16 %v3971, %v3964
      %v4063 = vpack.c.b16 %v3972, %v3965
      %v4064 = vpack.c.b16 %v3973, %v3966
      %v4065 = vpack.c.b16 %v3974, %v3967
      %v4066 = vpack.c.b16 %v3982, %v3975
      %v4067 = vpack.c.b16 %v3983, %v3976
      %v4068 = vpack.c.b16 %v3984, %v3977
      %v4069 = vpack.c.b16 %v3985, %v3978
      %v4070 = vpack.c.b16 %v3986, %v3979
      %v4071 = vpack.c.b16 %v3987, %v3980
      %v4072 = vpack.c.b16 %v3988, %v3981
      %v4073 = vpack.c.b16 %v3996, %v3989
      %v4074 = vpack.c.b16 %v3997, %v3990
      %v4075 = vpack.c.b16 %v3998, %v3991
      %v4076 = vpack.c.b16 %v3999, %v3992
      %v4077 = vpack.c.b16 %v4000, %v3993
      %v4078 = vpack.c.b16 %v4001, %v3994
      %v4079 = vpack.c.b16 %v4002, %v3995
      %v4080 = vpack.c.b16 %v4010, %v4003
      %v4081 = vpack.c.b16 %v4011, %v4004
      %v4082 = vpack.c.b16 %v4012, %v4005
      %v4083 = vpack.c.b16 %v4013, %v4006
      %v4084 = vpack.c.b16 %v4014, %v4007
      %v4085 = vpack.c.b16 %v4015, %v4008
      %v4086 = vpack.c.b16 %v4016, %v4009
      %v4087 = vpack.c.b16 %v4024, %v4017
      %v4088 = vpack.c.b16 %v4025, %v4018
      %v4089 = vpack.c.b16 %v4026, %v4019
      %v4090 = vpack.c.b16 %v4027, %v4020
      %v4091 = vpack.c.b16 %v4028, %v4021
      %v4092 = vpack.c.b16 %v4029, %v4022
      %v4093 = vpack.c.b16 %v4030, %v4023
      %v4094 = vpack.c.b16 %v4038, %v4031
      %v4095 = vpack.c.b16 %v4039, %v4032
      %v4096 = vpack.c.b16 %v4040, %v4033
      %v4097 = vpack.c.b16 %v4041, %v4034
      %v4098 = vpack.c.b16 %v4042, %v4035
      %v4099 = vpack.c.b16 %v4043, %v4036
      %v4100 = vpack.c.b16 %v4044, %v4037
      %4157 = vmatprep.subr.bf16.mxu0 %v4095
      %4158 = vmatpush1.bf16.msra.mxu0 %v4094
      %4159 = vmatprep.subr.bf16.mxu0 %v4088
      %4160 = vmatpush1.bf16.msra.mxu0 %v4087
      %4161 = vmatprep.subr.bf16.mxu0 %v4081
      %4162 = vmatpush1.bf16.msra.mxu0 %v4080
      %4163 = vmatprep.subr.bf16.mxu0 %v4074
      %4164 = vmatpush1.bf16.msra.mxu0 %v4073
      %4165 = vmatprep.subr.bf16.mxu0 %v4067
      %4166 = vmatpush1.bf16.msra.mxu0 %v4066
      %4167 = vmatprep.subr.bf16.mxu0 %v4060
      %4168 = vmatpush1.bf16.msra.mxu0 %v4059
      %4169 = vmatprep.subr.bf16.mxu0 %v4053
      %4170 = vmatpush1.bf16.msra.mxu0 %v4052
      %4171 = vmatprep.subr.bf16.mxu0 %v4046
      %4172 = vmatpush1.bf16.msra.mxu0 %v4045
      %4173 = vmatprep.subr.bf16.mxu0 0
      %4174 = vmatpush2.bf16.msra.mxu0 0
      %4175 = vmatprep.subr.bf16.mxu0 0
      %4176 = vmatpush2.bf16.msra.mxu0 0
      %4177 = vmatprep.subr.bf16.mxu0 0
      %4178 = vmatpush2.bf16.msra.mxu0 0
      %4179 = vmatprep.subr.bf16.mxu0 0
      %4180 = vmatpush2.bf16.msra.mxu0 0
      %4181 = vmatprep.subr.bf16.mxu0 0
      %4182 = vmatpush2.bf16.msra.mxu0 0
      %4183 = vmatprep.subr.bf16.mxu0 0
      %4184 = vmatpush2.bf16.msra.mxu0 0
      %4185 = vmatprep.subr.bf16.mxu0 0
      %4186 = vmatpush2.bf16.msra.mxu0 0
      %4187 = vmatprep.subr.bf16.mxu0 0
      %4188 = vmatpush2.bf16.msra.mxu0 0
      %4189 = vmatprep.mubr.bf16.mxu0 0
      %4190 = vmatmul.mubr.bf16.gmra.mxu0 %v3752
      %v4191 = vpop.f32.mrf.mxu0
      %v4192 = vadd.f32 %v3837, %v4191
      %v4193 = vpop.f32.mrf.mxu0
      %v4194 = vadd.f32 %v3841, %v4193
      %v4195 = vpop.f32.mrf.mxu0
      %v4196 = vadd.f32 %v3837, %v4195
      %v4197 = vpop.f32.mrf.mxu0
      %v4198 = vadd.f32 %v3841, %v4197
      %4199 = vmatprep.mubr.bf16.mxu0 0
      %4200 = vmatmul.mubr.bf16.gmra.mxu0 %v3753
      %v4201 = vpop.f32.mrf.mxu0
      %v4202 = vadd.f32 %v3837, %v4201
      %v4203 = vpop.f32.mrf.mxu0
      %v4204 = vadd.f32 %v3841, %v4203
      %v4205 = vpop.f32.mrf.mxu0
      %v4206 = vadd.f32 %v3837, %v4205
      %v4207 = vpop.f32.mrf.mxu0
      %v4208 = vadd.f32 %v3841, %v4207
      %4209 = vmatprep.mubr.bf16.mxu0 0
      %4210 = vmatmul.mubr.bf16.gmra.mxu0 %v3754
      %v4211 = vpop.f32.mrf.mxu0
      %v4212 = vadd.f32 %v3837, %v4211
      %v4213 = vpop.f32.mrf.mxu0
      %v4214 = vadd.f32 %v3841, %v4213
      %v4215 = vpop.f32.mrf.mxu0
      %v4216 = vadd.f32 %v3837, %v4215
      %v4217 = vpop.f32.mrf.mxu0
      %v4218 = vadd.f32 %v3841, %v4217
      %4219 = vmatprep.mubr.bf16.mxu0 0
      %4220 = vmatmul.mubr.bf16.gmra.mxu0 %v3755
      %v4221 = vpop.f32.mrf.mxu0
      %v4222 = vadd.f32 %v3837, %v4221
      %v4223 = vpop.f32.mrf.mxu0
      %v4224 = vadd.f32 %v3841, %v4223
      %v4225 = vpop.f32.mrf.mxu0
      %v4226 = vadd.f32 %v3837, %v4225
      %v4227 = vpop.f32.mrf.mxu0
      %v4228 = vadd.f32 %v3841, %v4227
      %4229 = vmatprep.mubr.bf16.mxu0 0
      %4230 = vmatmul.mubr.bf16.gmra.mxu0 %v3756
      %v4231 = vpop.f32.mrf.mxu0
      %v4232 = vadd.f32 %v3837, %v4231
      %v4233 = vpop.f32.mrf.mxu0
      %v4234 = vadd.f32 %v3841, %v4233
      %v4235 = vpop.f32.mrf.mxu0
      %v4236 = vadd.f32 %v3837, %v4235
      %v4237 = vpop.f32.mrf.mxu0
      %v4238 = vadd.f32 %v3841, %v4237
      %4239 = vmatprep.mubr.bf16.mxu0 0
      %4240 = vmatmul.mubr.bf16.gmra.mxu0 %v3757
      %v4241 = vpop.f32.mrf.mxu0
      %v4242 = vadd.f32 %v3837, %v4241
      %v4243 = vpop.f32.mrf.mxu0
      %v4244 = vadd.f32 %v3841, %v4243
      %v4245 = vpop.f32.mrf.mxu0
      %v4246 = vadd.f32 %v3837, %v4245
      %v4247 = vpop.f32.mrf.mxu0
      %v4248 = vadd.f32 %v3841, %v4247
      %4249 = vmatprep.mubr.bf16.mxu0 0
      %4250 = vmatmul.mubr.bf16.gmra.mxu0 %v3758
      %v4251 = vpop.f32.mrf.mxu0
      %v4252 = vadd.f32 %v3837, %v4251
      %v4253 = vpop.f32.mrf.mxu0
      %v4254 = vadd.f32 %v3841, %v4253
      %v4255 = vpop.f32.mrf.mxu0
      %v4256 = vadd.f32 %v3837, %v4255
      %v4257 = vpop.f32.mrf.mxu0
      %v4258 = vadd.f32 %v3841, %v4257
      %4259 = vmatprep.mubr.bf16.mxu0 0
      %4260 = vmatmul.mubr.bf16.gmra.mxu0 %v3759
      %v4261 = vpop.f32.mrf.mxu0
      %v4262 = vadd.f32 %v3837, %v4261
      %v4263 = vpop.f32.mrf.mxu0
      %v4264 = vadd.f32 %v3841, %v4263
      %v4265 = vpop.f32.mrf.mxu0
      %v4266 = vadd.f32 %v3837, %v4265
      %v4267 = vpop.f32.mrf.mxu0
      %v4268 = vadd.f32 %v3841, %v4267
      %4269 = vmatprep.mubr.bf16.mxu0 0
      %4270 = vmatmul.mubr.bf16.gmra.mxu0 %v3760
      %v4271 = vpop.f32.mrf.mxu0
      %v4272 = vadd.f32 %v3837, %v4271
      %v4273 = vpop.f32.mrf.mxu0
      %v4274 = vadd.f32 %v3841, %v4273
      %v4275 = vpop.f32.mrf.mxu0
      %v4276 = vadd.f32 %v3837, %v4275
      %v4277 = vpop.f32.mrf.mxu0
      %v4278 = vadd.f32 %v3841, %v4277
      %4279 = vmatprep.mubr.bf16.mxu0 0
      %4280 = vmatmul.mubr.bf16.gmra.mxu0 %v3761
      %v4281 = vpop.f32.mrf.mxu0
      %v4282 = vadd.f32 %v3837, %v4281
      %v4283 = vpop.f32.mrf.mxu0
      %v4284 = vadd.f32 %v3841, %v4283
      %v4285 = vpop.f32.mrf.mxu0
      %v4286 = vadd.f32 %v3837, %v4285
      %v4287 = vpop.f32.mrf.mxu0
      %v4288 = vadd.f32 %v3841, %v4287
      %4289 = vmatprep.mubr.bf16.mxu0 0
      %4290 = vmatmul.mubr.bf16.gmra.mxu0 %v3762
      %v4291 = vpop.f32.mrf.mxu0
      %v4292 = vadd.f32 %v3837, %v4291
      %v4293 = vpop.f32.mrf.mxu0
      %v4294 = vadd.f32 %v3841, %v4293
      %v4295 = vpop.f32.mrf.mxu0
      %v4296 = vadd.f32 %v3837, %v4295
      %v4297 = vpop.f32.mrf.mxu0
      %v4298 = vadd.f32 %v3841, %v4297
      %4299 = vmatprep.mubr.bf16.mxu0 0
      %4300 = vmatmul.mubr.bf16.gmra.mxu0 %v3763
      %v4301 = vpop.f32.mrf.mxu0
      %v4302 = vadd.f32 %v3837, %v4301
      %v4303 = vpop.f32.mrf.mxu0
      %v4304 = vadd.f32 %v3841, %v4303
      %v4305 = vpop.f32.mrf.mxu0
      %v4306 = vadd.f32 %v3837, %v4305
      %v4307 = vpop.f32.mrf.mxu0
      %v4308 = vadd.f32 %v3841, %v4307
      %4309 = vmatprep.mubr.bf16.mxu0 0
      %4310 = vmatmul.mubr.bf16.gmra.mxu0 %v3764
      %v4311 = vpop.f32.mrf.mxu0
      %v4312 = vadd.f32 %v3837, %v4311
      %v4313 = vpop.f32.mrf.mxu0
      %v4314 = vadd.f32 %v3841, %v4313
      %v4315 = vpop.f32.mrf.mxu0
      %v4316 = vadd.f32 %v3837, %v4315
      %v4317 = vpop.f32.mrf.mxu0
      %v4318 = vadd.f32 %v3841, %v4317
      %4319 = vmatprep.mubr.bf16.mxu0 0
      %4320 = vmatmul.mubr.bf16.gmra.mxu0 %v3765
      %v4321 = vpop.f32.mrf.mxu0
      %v4322 = vadd.f32 %v3837, %v4321
      %v4323 = vpop.f32.mrf.mxu0
      %v4324 = vadd.f32 %v3841, %v4323
      %v4325 = vpop.f32.mrf.mxu0
      %v4326 = vadd.f32 %v3837, %v4325
      %v4327 = vpop.f32.mrf.mxu0
      %v4328 = vadd.f32 %v3841, %v4327
      %4329 = vmatprep.mubr.bf16.mxu0 0
      %4330 = vmatmul.mubr.bf16.gmra.mxu0 %v3766
      %v4331 = vpop.f32.mrf.mxu0
      %v4332 = vadd.f32 %v3837, %v4331
      %v4333 = vpop.f32.mrf.mxu0
      %v4334 = vadd.f32 %v3841, %v4333
      %v4335 = vpop.f32.mrf.mxu0
      %v4336 = vadd.f32 %v3837, %v4335
      %v4337 = vpop.f32.mrf.mxu0
      %v4338 = vadd.f32 %v3841, %v4337
      %4339 = vmatprep.mubr.bf16.mxu0 0
      %4340 = vmatmul.mubr.bf16.gmra.mxu0 %v3767
      %v4341 = vpop.f32.mrf.mxu0
      %v4342 = vadd.f32 %v3837, %v4341
      %v4343 = vpop.f32.mrf.mxu0
      %v4344 = vadd.f32 %v3841, %v4343
      %v4345 = vpop.f32.mrf.mxu0
      %v4346 = vadd.f32 %v3837, %v4345
      %v4347 = vpop.f32.mrf.mxu0
      %v4348 = vadd.f32 %v3841, %v4347
      %4349 = vdwg.mxu0
      %4350 = vmatprep.subr.bf16.mxu0 %v4097
      %4351 = vmatpush1.bf16.msra.mxu0 %v4096
      %4352 = vmatprep.subr.bf16.mxu0 %v4090
      %4353 = vmatpush1.bf16.msra.mxu0 %v4089
      %4354 = vmatprep.subr.bf16.mxu0 %v4083
      %4355 = vmatpush1.bf16.msra.mxu0 %v4082
      %4356 = vmatprep.subr.bf16.mxu0 %v4076
      %4357 = vmatpush1.bf16.msra.mxu0 %v4075
      %4358 = vmatprep.subr.bf16.mxu0 %v4069
      %4359 = vmatpush1.bf16.msra.mxu0 %v4068
      %4360 = vmatprep.subr.bf16.mxu0 %v4062
      %4361 = vmatpush1.bf16.msra.mxu0 %v4061
      %4362 = vmatprep.subr.bf16.mxu0 %v4055
      %4363 = vmatpush1.bf16.msra.mxu0 %v4054
      %4364 = vmatprep.subr.bf16.mxu0 %v4048
      %4365 = vmatpush1.bf16.msra.mxu0 %v4047
      %4366 = vmatprep.subr.bf16.mxu0 0
      %4367 = vmatpush2.bf16.msra.mxu0 0
      %4368 = vmatprep.subr.bf16.mxu0 0
      %4369 = vmatpush2.bf16.msra.mxu0 0
      %4370 = vmatprep.subr.bf16.mxu0 0
      %4371 = vmatpush2.bf16.msra.mxu0 0
      %4372 = vmatprep.subr.bf16.mxu0 0
      %4373 = vmatpush2.bf16.msra.mxu0 0
      %4374 = vmatprep.subr.bf16.mxu0 0
      %4375 = vmatpush2.bf16.msra.mxu0 0
      %4376 = vmatprep.subr.bf16.mxu0 0
      %4377 = vmatpush2.bf16.msra.mxu0 0
      %4378 = vmatprep.subr.bf16.mxu0 0
      %4379 = vmatpush2.bf16.msra.mxu0 0
      %4380 = vmatprep.subr.bf16.mxu0 0
      %4381 = vmatpush2.bf16.msra.mxu0 0
      %4382 = vmatprep.mubr.bf16.mxu0 0
      %4383 = vmatmul.mubr.bf16.gmra.mxu0 %v3752
      %v4384 = vpop.f32.mrf.mxu0
      %v4385 = vadd.f32 %v3845, %v4384
      %v4386 = vpop.f32.mrf.mxu0
      %v4387 = vadd.f32 %v3849, %v4386
      %v4388 = vpop.f32.mrf.mxu0
      %v4389 = vadd.f32 %v3845, %v4388
      %v4390 = vpop.f32.mrf.mxu0
      %v4391 = vadd.f32 %v3849, %v4390
      %4392 = vmatprep.mubr.bf16.mxu0 0
      %4393 = vmatmul.mubr.bf16.gmra.mxu0 %v3753
      %v4394 = vpop.f32.mrf.mxu0
      %v4395 = vadd.f32 %v3845, %v4394
      %v4396 = vpop.f32.mrf.mxu0
      %v4397 = vadd.f32 %v3849, %v4396
      %v4398 = vpop.f32.mrf.mxu0
      %v4399 = vadd.f32 %v3845, %v4398
      %v4400 = vpop.f32.mrf.mxu0
      %v4401 = vadd.f32 %v3849, %v4400
      %4402 = vmatprep.mubr.bf16.mxu0 0
      %4403 = vmatmul.mubr.bf16.gmra.mxu0 %v3754
      %v4404 = vpop.f32.mrf.mxu0
      %v4405 = vadd.f32 %v3845, %v4404
      %v4406 = vpop.f32.mrf.mxu0
      %v4407 = vadd.f32 %v3849, %v4406
      %v4408 = vpop.f32.mrf.mxu0
      %v4409 = vadd.f32 %v3845, %v4408
      %v4410 = vpop.f32.mrf.mxu0
      %v4411 = vadd.f32 %v3849, %v4410
      %4412 = vmatprep.mubr.bf16.mxu0 0
      %4413 = vmatmul.mubr.bf16.gmra.mxu0 %v3755
      %v4414 = vpop.f32.mrf.mxu0
      %v4415 = vadd.f32 %v3845, %v4414
      %v4416 = vpop.f32.mrf.mxu0
      %v4417 = vadd.f32 %v3849, %v4416
      %v4418 = vpop.f32.mrf.mxu0
      %v4419 = vadd.f32 %v3845, %v4418
      %v4420 = vpop.f32.mrf.mxu0
      %v4421 = vadd.f32 %v3849, %v4420
      %4422 = vmatprep.mubr.bf16.mxu0 0
      %4423 = vmatmul.mubr.bf16.gmra.mxu0 %v3756
      %v4424 = vpop.f32.mrf.mxu0
      %v4425 = vadd.f32 %v3845, %v4424
      %v4426 = vpop.f32.mrf.mxu0
      %v4427 = vadd.f32 %v3849, %v4426
      %v4428 = vpop.f32.mrf.mxu0
      %v4429 = vadd.f32 %v3845, %v4428
      %v4430 = vpop.f32.mrf.mxu0
      %v4431 = vadd.f32 %v3849, %v4430
      %4432 = vmatprep.mubr.bf16.mxu0 0
      %4433 = vmatmul.mubr.bf16.gmra.mxu0 %v3757
      %v4434 = vpop.f32.mrf.mxu0
      %v4435 = vadd.f32 %v3845, %v4434
      %v4436 = vpop.f32.mrf.mxu0
      %v4437 = vadd.f32 %v3849, %v4436
      %v4438 = vpop.f32.mrf.mxu0
      %v4439 = vadd.f32 %v3845, %v4438
      %v4440 = vpop.f32.mrf.mxu0
      %v4441 = vadd.f32 %v3849, %v4440
      %4442 = vmatprep.mubr.bf16.mxu0 0
      %4443 = vmatmul.mubr.bf16.gmra.mxu0 %v3758
      %v4444 = vpop.f32.mrf.mxu0
      %v4445 = vadd.f32 %v3845, %v4444
      %v4446 = vpop.f32.mrf.mxu0
      %v4447 = vadd.f32 %v3849, %v4446
      %v4448 = vpop.f32.mrf.mxu0
      %v4449 = vadd.f32 %v3845, %v4448
      %v4450 = vpop.f32.mrf.mxu0
      %v4451 = vadd.f32 %v3849, %v4450
      %4452 = vmatprep.mubr.bf16.mxu0 0
      %4453 = vmatmul.mubr.bf16.gmra.mxu0 %v3759
      %v4454 = vpop.f32.mrf.mxu0
      %v4455 = vadd.f32 %v3845, %v4454
      %v4456 = vpop.f32.mrf.mxu0
      %v4457 = vadd.f32 %v3849, %v4456
      %v4458 = vpop.f32.mrf.mxu0
      %v4459 = vadd.f32 %v3845, %v4458
      %v4460 = vpop.f32.mrf.mxu0
      %v4461 = vadd.f32 %v3849, %v4460
      %4462 = vmatprep.mubr.bf16.mxu0 0
      %4463 = vmatmul.mubr.bf16.gmra.mxu0 %v3760
      %v4464 = vpop.f32.mrf.mxu0
      %v4465 = vadd.f32 %v3845, %v4464
      %v4466 = vpop.f32.mrf.mxu0
      %v4467 = vadd.f32 %v3849, %v4466
      %v4468 = vpop.f32.mrf.mxu0
      %v4469 = vadd.f32 %v3845, %v4468
      %v4470 = vpop.f32.mrf.mxu0
      %v4471 = vadd.f32 %v3849, %v4470
      %4472 = vmatprep.mubr.bf16.mxu0 0
      %4473 = vmatmul.mubr.bf16.gmra.mxu0 %v3761
      %v4474 = vpop.f32.mrf.mxu0
      %v4475 = vadd.f32 %v3845, %v4474
      %v4476 = vpop.f32.mrf.mxu0
      %v4477 = vadd.f32 %v3849, %v4476
      %v4478 = vpop.f32.mrf.mxu0
      %v4479 = vadd.f32 %v3845, %v4478
      %v4480 = vpop.f32.mrf.mxu0
      %v4481 = vadd.f32 %v3849, %v4480
      %4482 = vmatprep.mubr.bf16.mxu0 0
      %4483 = vmatmul.mubr.bf16.gmra.mxu0 %v3762
      %v4484 = vpop.f32.mrf.mxu0
      %v4485 = vadd.f32 %v3845, %v4484
      %v4486 = vpop.f32.mrf.mxu0
      %v4487 = vadd.f32 %v3849, %v4486
      %v4488 = vpop.f32.mrf.mxu0
      %v4489 = vadd.f32 %v3845, %v4488
      %v4490 = vpop.f32.mrf.mxu0
      %v4491 = vadd.f32 %v3849, %v4490
      %4492 = vmatprep.mubr.bf16.mxu0 0
      %4493 = vmatmul.mubr.bf16.gmra.mxu0 %v3763
      %v4494 = vpop.f32.mrf.mxu0
      %v4495 = vadd.f32 %v3845, %v4494
      %v4496 = vpop.f32.mrf.mxu0
      %v4497 = vadd.f32 %v3849, %v4496
      %v4498 = vpop.f32.mrf.mxu0
      %v4499 = vadd.f32 %v3845, %v4498
      %v4500 = vpop.f32.mrf.mxu0
      %v4501 = vadd.f32 %v3849, %v4500
      %4502 = vmatprep.mubr.bf16.mxu0 0
      %4503 = vmatmul.mubr.bf16.gmra.mxu0 %v3764
      %v4504 = vpop.f32.mrf.mxu0
      %v4505 = vadd.f32 %v3845, %v4504
      %v4506 = vpop.f32.mrf.mxu0
      %v4507 = vadd.f32 %v3849, %v4506
      %v4508 = vpop.f32.mrf.mxu0
      %v4509 = vadd.f32 %v3845, %v4508
      %v4510 = vpop.f32.mrf.mxu0
      %v4511 = vadd.f32 %v3849, %v4510
      %4512 = vmatprep.mubr.bf16.mxu0 0
      %4513 = vmatmul.mubr.bf16.gmra.mxu0 %v3765
      %v4514 = vpop.f32.mrf.mxu0
      %v4515 = vadd.f32 %v3845, %v4514
      %v4516 = vpop.f32.mrf.mxu0
      %v4517 = vadd.f32 %v3849, %v4516
      %v4518 = vpop.f32.mrf.mxu0
      %v4519 = vadd.f32 %v3845, %v4518
      %v4520 = vpop.f32.mrf.mxu0
      %v4521 = vadd.f32 %v3849, %v4520
      %4522 = vmatprep.mubr.bf16.mxu0 0
      %4523 = vmatmul.mubr.bf16.gmra.mxu0 %v3766
      %v4524 = vpop.f32.mrf.mxu0
      %v4525 = vadd.f32 %v3845, %v4524
      %v4526 = vpop.f32.mrf.mxu0
      %v4527 = vadd.f32 %v3849, %v4526
      %v4528 = vpop.f32.mrf.mxu0
      %v4529 = vadd.f32 %v3845, %v4528
      %v4530 = vpop.f32.mrf.mxu0
      %v4531 = vadd.f32 %v3849, %v4530
      %4532 = vmatprep.mubr.bf16.mxu0 0
      %4533 = vmatmul.mubr.bf16.gmra.mxu0 %v3767
      %v4534 = vpop.f32.mrf.mxu0
      %v4535 = vadd.f32 %v3845, %v4534
      %v4536 = vpop.f32.mrf.mxu0
      %v4537 = vadd.f32 %v3849, %v4536
      %v4538 = vpop.f32.mrf.mxu0
      %v4539 = vadd.f32 %v3845, %v4538
      %v4540 = vpop.f32.mrf.mxu0
      %v4541 = vadd.f32 %v3849, %v4540
      %4542 = vdwg.mxu0
      %4543 = vmatprep.subr.bf16.mxu0 %v4099
      %4544 = vmatpush1.bf16.msra.mxu0 %v4098
      %4545 = vmatprep.subr.bf16.mxu0 %v4092
      %4546 = vmatpush1.bf16.msra.mxu0 %v4091
      %4547 = vmatprep.subr.bf16.mxu0 %v4085
      %4548 = vmatpush1.bf16.msra.mxu0 %v4084
      %4549 = vmatprep.subr.bf16.mxu0 %v4078
      %4550 = vmatpush1.bf16.msra.mxu0 %v4077
      %4551 = vmatprep.subr.bf16.mxu0 %v4071
      %4552 = vmatpush1.bf16.msra.mxu0 %v4070
      %4553 = vmatprep.subr.bf16.mxu0 %v4064
      %4554 = vmatpush1.bf16.msra.mxu0 %v4063
      %4555 = vmatprep.subr.bf16.mxu0 %v4057
      %4556 = vmatpush1.bf16.msra.mxu0 %v4056
      %4557 = vmatprep.subr.bf16.mxu0 %v4050
      %4558 = vmatpush1.bf16.msra.mxu0 %v4049
      %4559 = vmatprep.subr.bf16.mxu0 0
      %4560 = vmatpush2.bf16.msra.mxu0 0
      %4561 = vmatprep.subr.bf16.mxu0 0
      %4562 = vmatpush2.bf16.msra.mxu0 0
      %4563 = vmatprep.subr.bf16.mxu0 0
      %4564 = vmatpush2.bf16.msra.mxu0 0
      %4565 = vmatprep.subr.bf16.mxu0 0
      %4566 = vmatpush2.bf16.msra.mxu0 0
      %4567 = vmatprep.subr.bf16.mxu0 0
      %4568 = vmatpush2.bf16.msra.mxu0 0
      %4569 = vmatprep.subr.bf16.mxu0 0
      %4570 = vmatpush2.bf16.msra.mxu0 0
      %4571 = vmatprep.subr.bf16.mxu0 0
      %4572 = vmatpush2.bf16.msra.mxu0 0
      %4573 = vmatprep.subr.bf16.mxu0 0
      %4574 = vmatpush2.bf16.msra.mxu0 0
      %4575 = vmatprep.mubr.bf16.mxu0 0
      %4576 = vmatmul.mubr.bf16.gmra.mxu0 %v3752
      %v4577 = vpop.f32.mrf.mxu0
      %v4578 = vadd.f32 %v3853, %v4577
      %v4579 = vpop.f32.mrf.mxu0
      %v4580 = vadd.f32 %v3857, %v4579
      %v4581 = vpop.f32.mrf.mxu0
      %v4582 = vadd.f32 %v3853, %v4581
      %v4583 = vpop.f32.mrf.mxu0
      %v4584 = vadd.f32 %v3857, %v4583
      %4585 = vmatprep.mubr.bf16.mxu0 0
      %4586 = vmatmul.mubr.bf16.gmra.mxu0 %v3753
      %v4587 = vpop.f32.mrf.mxu0
      %v4588 = vadd.f32 %v3853, %v4587
      %v4589 = vpop.f32.mrf.mxu0
      %v4590 = vadd.f32 %v3857, %v4589
      %v4591 = vpop.f32.mrf.mxu0
      %v4592 = vadd.f32 %v3853, %v4591
      %v4593 = vpop.f32.mrf.mxu0
      %v4594 = vadd.f32 %v3857, %v4593
      %4595 = vmatprep.mubr.bf16.mxu0 0
      %4596 = vmatmul.mubr.bf16.gmra.mxu0 %v3754
      %v4597 = vpop.f32.mrf.mxu0
      %v4598 = vadd.f32 %v3853, %v4597
      %v4599 = vpop.f32.mrf.mxu0
      %v4600 = vadd.f32 %v3857, %v4599
      %v4601 = vpop.f32.mrf.mxu0
      %v4602 = vadd.f32 %v3853, %v4601
      %v4603 = vpop.f32.mrf.mxu0
      %v4604 = vadd.f32 %v3857, %v4603
      %4605 = vmatprep.mubr.bf16.mxu0 0
      %4606 = vmatmul.mubr.bf16.gmra.mxu0 %v3755
      %v4607 = vpop.f32.mrf.mxu0
      %v4608 = vadd.f32 %v3853, %v4607
      %v4609 = vpop.f32.mrf.mxu0
      %v4610 = vadd.f32 %v3857, %v4609
      %v4611 = vpop.f32.mrf.mxu0
      %v4612 = vadd.f32 %v3853, %v4611
      %v4613 = vpop.f32.mrf.mxu0
      %v4614 = vadd.f32 %v3857, %v4613
      %4615 = vmatprep.mubr.bf16.mxu0 0
      %4616 = vmatmul.mubr.bf16.gmra.mxu0 %v3756
      %v4617 = vpop.f32.mrf.mxu0
      %v4618 = vadd.f32 %v3853, %v4617
      %v4619 = vpop.f32.mrf.mxu0
      %v4620 = vadd.f32 %v3857, %v4619
      %v4621 = vpop.f32.mrf.mxu0
      %v4622 = vadd.f32 %v3853, %v4621
      %v4623 = vpop.f32.mrf.mxu0
      %v4624 = vadd.f32 %v3857, %v4623
      %4625 = vmatprep.mubr.bf16.mxu0 0
      %4626 = vmatmul.mubr.bf16.gmra.mxu0 %v3757
      %v4627 = vpop.f32.mrf.mxu0
      %v4628 = vadd.f32 %v3853, %v4627
      %v4629 = vpop.f32.mrf.mxu0
      %v4630 = vadd.f32 %v3857, %v4629
      %v4631 = vpop.f32.mrf.mxu0
      %v4632 = vadd.f32 %v3853, %v4631
      %v4633 = vpop.f32.mrf.mxu0
      %v4634 = vadd.f32 %v3857, %v4633
      %4635 = vmatprep.mubr.bf16.mxu0 0
      %4636 = vmatmul.mubr.bf16.gmra.mxu0 %v3758
      %v4637 = vpop.f32.mrf.mxu0
      %v4638 = vadd.f32 %v3853, %v4637
      %v4639 = vpop.f32.mrf.mxu0
      %v4640 = vadd.f32 %v3857, %v4639
      %v4641 = vpop.f32.mrf.mxu0
      %v4642 = vadd.f32 %v3853, %v4641
      %v4643 = vpop.f32.mrf.mxu0
      %v4644 = vadd.f32 %v3857, %v4643
      %4645 = vmatprep.mubr.bf16.mxu0 0
      %4646 = vmatmul.mubr.bf16.gmra.mxu0 %v3759
      %v4647 = vpop.f32.mrf.mxu0
      %v4648 = vadd.f32 %v3853, %v4647
      %v4649 = vpop.f32.mrf.mxu0
      %v4650 = vadd.f32 %v3857, %v4649
      %v4651 = vpop.f32.mrf.mxu0
      %v4652 = vadd.f32 %v3853, %v4651
      %v4653 = vpop.f32.mrf.mxu0
      %v4654 = vadd.f32 %v3857, %v4653
      %4655 = vmatprep.mubr.bf16.mxu0 0
      %4656 = vmatmul.mubr.bf16.gmra.mxu0 %v3760
      %v4657 = vpop.f32.mrf.mxu0
      %v4658 = vadd.f32 %v3853, %v4657
      %v4659 = vpop.f32.mrf.mxu0
      %v4660 = vadd.f32 %v3857, %v4659
      %v4661 = vpop.f32.mrf.mxu0
      %v4662 = vadd.f32 %v3853, %v4661
      %v4663 = vpop.f32.mrf.mxu0
      %v4664 = vadd.f32 %v3857, %v4663
      %4665 = vmatprep.mubr.bf16.mxu0 0
      %4666 = vmatmul.mubr.bf16.gmra.mxu0 %v3761
      %v4667 = vpop.f32.mrf.mxu0
      %v4668 = vadd.f32 %v3853, %v4667
      %v4669 = vpop.f32.mrf.mxu0
      %v4670 = vadd.f32 %v3857, %v4669
      %v4671 = vpop.f32.mrf.mxu0
      %v4672 = vadd.f32 %v3853, %v4671
      %v4673 = vpop.f32.mrf.mxu0
      %v4674 = vadd.f32 %v3857, %v4673
      %4675 = vmatprep.mubr.bf16.mxu0 0
      %4676 = vmatmul.mubr.bf16.gmra.mxu0 %v3762
      %v4677 = vpop.f32.mrf.mxu0
      %v4678 = vadd.f32 %v3853, %v4677
      %v4679 = vpop.f32.mrf.mxu0
      %v4680 = vadd.f32 %v3857, %v4679
      %v4681 = vpop.f32.mrf.mxu0
      %v4682 = vadd.f32 %v3853, %v4681
      %v4683 = vpop.f32.mrf.mxu0
      %v4684 = vadd.f32 %v3857, %v4683
      %4685 = vmatprep.mubr.bf16.mxu0 0
      %4686 = vmatmul.mubr.bf16.gmra.mxu0 %v3763
      %v4687 = vpop.f32.mrf.mxu0
      %v4688 = vadd.f32 %v3853, %v4687
      %v4689 = vpop.f32.mrf.mxu0
      %v4690 = vadd.f32 %v3857, %v4689
      %v4691 = vpop.f32.mrf.mxu0
      %v4692 = vadd.f32 %v3853, %v4691
      %v4693 = vpop.f32.mrf.mxu0
      %v4694 = vadd.f32 %v3857, %v4693
      %4695 = vmatprep.mubr.bf16.mxu0 0
      %4696 = vmatmul.mubr.bf16.gmra.mxu0 %v3764
      %v4697 = vpop.f32.mrf.mxu0
      %v4698 = vadd.f32 %v3853, %v4697
      %v4699 = vpop.f32.mrf.mxu0
      %v4700 = vadd.f32 %v3857, %v4699
      %v4701 = vpop.f32.mrf.mxu0
      %v4702 = vadd.f32 %v3853, %v4701
      %v4703 = vpop.f32.mrf.mxu0
      %v4704 = vadd.f32 %v3857, %v4703
      %4705 = vmatprep.mubr.bf16.mxu0 0
      %4706 = vmatmul.mubr.bf16.gmra.mxu0 %v3765
      %v4707 = vpop.f32.mrf.mxu0
      %v4708 = vadd.f32 %v3853, %v4707
      %v4709 = vpop.f32.mrf.mxu0
      %v4710 = vadd.f32 %v3857, %v4709
      %v4711 = vpop.f32.mrf.mxu0
      %v4712 = vadd.f32 %v3853, %v4711
      %v4713 = vpop.f32.mrf.mxu0
      %v4714 = vadd.f32 %v3857, %v4713
      %4715 = vmatprep.mubr.bf16.mxu0 0
      %4716 = vmatmul.mubr.bf16.gmra.mxu0 %v3766
      %v4717 = vpop.f32.mrf.mxu0
      %v4718 = vadd.f32 %v3853, %v4717
      %v4719 = vpop.f32.mrf.mxu0
      %v4720 = vadd.f32 %v3857, %v4719
      %v4721 = vpop.f32.mrf.mxu0
      %v4722 = vadd.f32 %v3853, %v4721
      %v4723 = vpop.f32.mrf.mxu0
      %v4724 = vadd.f32 %v3857, %v4723
      %4725 = vmatprep.mubr.bf16.mxu0 0
      %4726 = vmatmul.mubr.bf16.gmra.mxu0 %v3767
      %v4727 = vpop.f32.mrf.mxu0
      %v4728 = vadd.f32 %v3853, %v4727
      %v4729 = vpop.f32.mrf.mxu0
      %v4730 = vadd.f32 %v3857, %v4729
      %v4731 = vpop.f32.mrf.mxu0
      %v4732 = vadd.f32 %v3853, %v4731
      %v4733 = vpop.f32.mrf.mxu0
      %v4734 = vadd.f32 %v3857, %v4733
      %4735 = vdwg.mxu0
      %4736 = vmatprep.subr.bf16.mxu0 0
      %4737 = vmatpush1.bf16.msra.mxu0 %v4100
      %4738 = vmatprep.subr.bf16.mxu0 0
      %4739 = vmatpush1.bf16.msra.mxu0 %v4093
      %4740 = vmatprep.subr.bf16.mxu0 0
      %4741 = vmatpush1.bf16.msra.mxu0 %v4086
      %4742 = vmatprep.subr.bf16.mxu0 0
      %4743 = vmatpush1.bf16.msra.mxu0 %v4079
      %4744 = vmatprep.subr.bf16.mxu0 0
      %4745 = vmatpush1.bf16.msra.mxu0 %v4072
      %4746 = vmatprep.subr.bf16.mxu0 0
      %4747 = vmatpush1.bf16.msra.mxu0 %v4065
      %4748 = vmatprep.subr.bf16.mxu0 0
      %4749 = vmatpush1.bf16.msra.mxu0 %v4058
      %4750 = vmatprep.subr.bf16.mxu0 0
      %4751 = vmatpush1.bf16.msra.mxu0 %v4051
      %4752 = vmatprep.subr.bf16.mxu0 0
      %4753 = vmatpush2.bf16.msra.mxu0 0
      %4754 = vmatprep.subr.bf16.mxu0 0
      %4755 = vmatpush2.bf16.msra.mxu0 0
      %4756 = vmatprep.subr.bf16.mxu0 0
      %4757 = vmatpush2.bf16.msra.mxu0 0
      %4758 = vmatprep.subr.bf16.mxu0 0
      %4759 = vmatpush2.bf16.msra.mxu0 0
      %4760 = vmatprep.subr.bf16.mxu0 0
      %4761 = vmatpush2.bf16.msra.mxu0 0
      %4762 = vmatprep.subr.bf16.mxu0 0
      %4763 = vmatpush2.bf16.msra.mxu0 0
      %4764 = vmatprep.subr.bf16.mxu0 0
      %4765 = vmatpush2.bf16.msra.mxu0 0
      %4766 = vmatprep.subr.bf16.mxu0 0
      %4767 = vmatpush2.bf16.msra.mxu0 0
      %4768 = vmatprep.mubr.bf16.mxu0 0
      %4769 = vmatmul.mubr.bf16.gmra.mxu0 %v3752
      %v4770 = vpop.f32.mrf.mxu0
      %v4771 = vadd.f32 %v3861, %v4770
      %v4772 = vpop.f32.mrf.mxu0
      %v4773 = vpop.f32.mrf.mxu0
      %v4774 = vadd.f32 %v3861, %v4773
      %v4775 = vpop.f32.mrf.mxu0
      %4776 = vmatprep.mubr.bf16.mxu0 0
      %4777 = vmatmul.mubr.bf16.gmra.mxu0 %v3753
      %v4778 = vpop.f32.mrf.mxu0
      %v4779 = vadd.f32 %v3861, %v4778
      %v4780 = vpop.f32.mrf.mxu0
      %v4781 = vpop.f32.mrf.mxu0
      %v4782 = vadd.f32 %v3861, %v4781
      %v4783 = vpop.f32.mrf.mxu0
      %4784 = vmatprep.mubr.bf16.mxu0 0
      %4785 = vmatmul.mubr.bf16.gmra.mxu0 %v3754
      %v4786 = vpop.f32.mrf.mxu0
      %v4787 = vadd.f32 %v3861, %v4786
      %v4788 = vpop.f32.mrf.mxu0
      %v4789 = vpop.f32.mrf.mxu0
      %v4790 = vadd.f32 %v3861, %v4789
      %v4791 = vpop.f32.mrf.mxu0
      %4792 = vmatprep.mubr.bf16.mxu0 0
      %4793 = vmatmul.mubr.bf16.gmra.mxu0 %v3755
      %v4794 = vpop.f32.mrf.mxu0
      %v4795 = vadd.f32 %v3861, %v4794
      %v4796 = vpop.f32.mrf.mxu0
      %v4797 = vpop.f32.mrf.mxu0
      %v4798 = vadd.f32 %v3861, %v4797
      %v4799 = vpop.f32.mrf.mxu0
      %4800 = vmatprep.mubr.bf16.mxu0 0
      %4801 = vmatmul.mubr.bf16.gmra.mxu0 %v3756
      %v4802 = vpop.f32.mrf.mxu0
      %v4803 = vadd.f32 %v3861, %v4802
      %v4804 = vpop.f32.mrf.mxu0
      %v4805 = vpop.f32.mrf.mxu0
      %v4806 = vadd.f32 %v3861, %v4805
      %v4807 = vpop.f32.mrf.mxu0
      %4808 = vmatprep.mubr.bf16.mxu0 0
      %4809 = vmatmul.mubr.bf16.gmra.mxu0 %v3757
      %v4810 = vpop.f32.mrf.mxu0
      %v4811 = vadd.f32 %v3861, %v4810
      %v4812 = vpop.f32.mrf.mxu0
      %v4813 = vpop.f32.mrf.mxu0
      %v4814 = vadd.f32 %v3861, %v4813
      %v4815 = vpop.f32.mrf.mxu0
      %4816 = vmatprep.mubr.bf16.mxu0 0
      %4817 = vmatmul.mubr.bf16.gmra.mxu0 %v3758
      %v4818 = vpop.f32.mrf.mxu0
      %v4819 = vadd.f32 %v3861, %v4818
      %v4820 = vpop.f32.mrf.mxu0
      %v4821 = vpop.f32.mrf.mxu0
      %v4822 = vadd.f32 %v3861, %v4821
      %v4823 = vpop.f32.mrf.mxu0
      %4824 = vmatprep.mubr.bf16.mxu0 0
      %4825 = vmatmul.mubr.bf16.gmra.mxu0 %v3759
      %v4826 = vpop.f32.mrf.mxu0
      %v4827 = vadd.f32 %v3861, %v4826
      %v4828 = vpop.f32.mrf.mxu0
      %v4829 = vpop.f32.mrf.mxu0
      %v4830 = vadd.f32 %v3861, %v4829
      %v4831 = vpop.f32.mrf.mxu0
      %4832 = vmatprep.mubr.bf16.mxu0 0
      %4833 = vmatmul.mubr.bf16.gmra.mxu0 %v3760
      %v4834 = vpop.f32.mrf.mxu0
      %v4835 = vadd.f32 %v3861, %v4834
      %v4836 = vpop.f32.mrf.mxu0
      %v4837 = vpop.f32.mrf.mxu0
      %v4838 = vadd.f32 %v3861, %v4837
      %v4839 = vpop.f32.mrf.mxu0
      %4840 = vmatprep.mubr.bf16.mxu0 0
      %4841 = vmatmul.mubr.bf16.gmra.mxu0 %v3761
      %v4842 = vpop.f32.mrf.mxu0
      %v4843 = vadd.f32 %v3861, %v4842
      %v4844 = vpop.f32.mrf.mxu0
      %v4845 = vpop.f32.mrf.mxu0
      %v4846 = vadd.f32 %v3861, %v4845
      %v4847 = vpop.f32.mrf.mxu0
      %4848 = vmatprep.mubr.bf16.mxu0 0
      %4849 = vmatmul.mubr.bf16.gmra.mxu0 %v3762
      %v4850 = vpop.f32.mrf.mxu0
      %v4851 = vadd.f32 %v3861, %v4850
      %v4852 = vpop.f32.mrf.mxu0
      %v4853 = vpop.f32.mrf.mxu0
      %v4854 = vadd.f32 %v3861, %v4853
      %v4855 = vpop.f32.mrf.mxu0
      %4856 = vmatprep.mubr.bf16.mxu0 0
      %4857 = vmatmul.mubr.bf16.gmra.mxu0 %v3763
      %v4858 = vpop.f32.mrf.mxu0
      %v4859 = vadd.f32 %v3861, %v4858
      %v4860 = vpop.f32.mrf.mxu0
      %v4861 = vpop.f32.mrf.mxu0
      %v4862 = vadd.f32 %v3861, %v4861
      %v4863 = vpop.f32.mrf.mxu0
      %4864 = vmatprep.mubr.bf16.mxu0 0
      %4865 = vmatmul.mubr.bf16.gmra.mxu0 %v3764
      %v4866 = vpop.f32.mrf.mxu0
      %v4867 = vadd.f32 %v3861, %v4866
      %v4868 = vpop.f32.mrf.mxu0
      %v4869 = vpop.f32.mrf.mxu0
      %v4870 = vadd.f32 %v3861, %v4869
      %v4871 = vpop.f32.mrf.mxu0
      %4872 = vmatprep.mubr.bf16.mxu0 0
      %4873 = vmatmul.mubr.bf16.gmra.mxu0 %v3765
      %v4874 = vpop.f32.mrf.mxu0
      %v4875 = vadd.f32 %v3861, %v4874
      %v4876 = vpop.f32.mrf.mxu0
      %v4877 = vpop.f32.mrf.mxu0
      %v4878 = vadd.f32 %v3861, %v4877
      %v4879 = vpop.f32.mrf.mxu0
      %4880 = vmatprep.mubr.bf16.mxu0 0
      %4881 = vmatmul.mubr.bf16.gmra.mxu0 %v3766
      %v4882 = vpop.f32.mrf.mxu0
      %v4883 = vadd.f32 %v3861, %v4882
      %v4884 = vpop.f32.mrf.mxu0
      %v4885 = vpop.f32.mrf.mxu0
      %v4886 = vadd.f32 %v3861, %v4885
      %v4887 = vpop.f32.mrf.mxu0
      %4888 = vmatprep.mubr.bf16.mxu0 0
      %4889 = vmatmul.mubr.bf16.gmra.mxu0 %v3767
      %v4890 = vpop.f32.mrf.mxu0
      %v4891 = vadd.f32 %v3861, %v4890
      %v4892 = vpop.f32.mrf.mxu0
      %v4893 = vpop.f32.mrf.mxu0
      %v4894 = vadd.f32 %v3861, %v4893
      %v4895 = vpop.f32.mrf.mxu0
      %4896 = vdwg.mxu0
      %v4897 = vxor.u32 %v4192, 2147483648
      %v4898 = vxor.u32 %v4194, 2147483648
      %v4899 = vxor.u32 %v4385, 2147483648
      %v4900 = vxor.u32 %v4387, 2147483648
      %v4901 = vxor.u32 %v4578, 2147483648
      %v4902 = vxor.u32 %v4580, 2147483648
      %v4903 = vxor.u32 %v4771, 2147483648
      %v4904 = vxor.u32 %v4196, 2147483648
      %v4905 = vxor.u32 %v4198, 2147483648
      %v4906 = vxor.u32 %v4389, 2147483648
      %v4907 = vxor.u32 %v4391, 2147483648
      %v4908 = vxor.u32 %v4582, 2147483648
      %v4909 = vxor.u32 %v4584, 2147483648
      %v4910 = vxor.u32 %v4774, 2147483648
      %v4911 = vxor.u32 %v4202, 2147483648
      %v4912 = vxor.u32 %v4204, 2147483648
      %v4913 = vxor.u32 %v4395, 2147483648
      %v4914 = vxor.u32 %v4397, 2147483648
      %v4915 = vxor.u32 %v4588, 2147483648
      %v4916 = vxor.u32 %v4590, 2147483648
      %v4917 = vxor.u32 %v4779, 2147483648
      %v4918 = vxor.u32 %v4206, 2147483648
      %v4919 = vxor.u32 %v4208, 2147483648
      %v4920 = vxor.u32 %v4399, 2147483648
      %v4921 = vxor.u32 %v4401, 2147483648
      %v4922 = vxor.u32 %v4592, 2147483648
      %v4923 = vxor.u32 %v4594, 2147483648
      %v4924 = vxor.u32 %v4782, 2147483648
      %v4925 = vxor.u32 %v4212, 2147483648
      %v4926 = vxor.u32 %v4214, 2147483648
      %v4927 = vxor.u32 %v4405, 2147483648
      %v4928 = vxor.u32 %v4407, 2147483648
      %v4929 = vxor.u32 %v4598, 2147483648
      %v4930 = vxor.u32 %v4600, 2147483648
      %v4931 = vxor.u32 %v4787, 2147483648
      %v4932 = vxor.u32 %v4216, 2147483648
      %v4933 = vxor.u32 %v4218, 2147483648
      %v4934 = vxor.u32 %v4409, 2147483648
      %v4935 = vxor.u32 %v4411, 2147483648
      %v4936 = vxor.u32 %v4602, 2147483648
      %v4937 = vxor.u32 %v4604, 2147483648
      %v4938 = vxor.u32 %v4790, 2147483648
      %v4939 = vxor.u32 %v4222, 2147483648
      %v4940 = vxor.u32 %v4224, 2147483648
      %v4941 = vxor.u32 %v4415, 2147483648
      %v4942 = vxor.u32 %v4417, 2147483648
      %v4943 = vxor.u32 %v4608, 2147483648
      %v4944 = vxor.u32 %v4610, 2147483648
      %v4945 = vxor.u32 %v4795, 2147483648
      %v4946 = vxor.u32 %v4226, 2147483648
      %v4947 = vxor.u32 %v4228, 2147483648
      %v4948 = vxor.u32 %v4419, 2147483648
      %v4949 = vxor.u32 %v4421, 2147483648
      %v4950 = vxor.u32 %v4612, 2147483648
      %v4951 = vxor.u32 %v4614, 2147483648
      %v4952 = vxor.u32 %v4798, 2147483648
      %v4953 = vxor.u32 %v4232, 2147483648
      %v4954 = vxor.u32 %v4234, 2147483648
      %v4955 = vxor.u32 %v4425, 2147483648
      %v4956 = vxor.u32 %v4427, 2147483648
      %v4957 = vxor.u32 %v4618, 2147483648
      %v4958 = vxor.u32 %v4620, 2147483648
      %v4959 = vxor.u32 %v4803, 2147483648
      %v4960 = vxor.u32 %v4236, 2147483648
      %v4961 = vxor.u32 %v4238, 2147483648
      %v4962 = vxor.u32 %v4429, 2147483648
      %v4963 = vxor.u32 %v4431, 2147483648
      %v4964 = vxor.u32 %v4622, 2147483648
      %v4965 = vxor.u32 %v4624, 2147483648
      %v4966 = vxor.u32 %v4806, 2147483648
      %v4967 = vxor.u32 %v4242, 2147483648
      %v4968 = vxor.u32 %v4244, 2147483648
      %v4969 = vxor.u32 %v4435, 2147483648
      %v4970 = vxor.u32 %v4437, 2147483648
      %v4971 = vxor.u32 %v4628, 2147483648
      %v4972 = vxor.u32 %v4630, 2147483648
      %v4973 = vxor.u32 %v4811, 2147483648
      %v4974 = vxor.u32 %v4246, 2147483648
      %v4975 = vxor.u32 %v4248, 2147483648
      %v4976 = vxor.u32 %v4439, 2147483648
      %v4977 = vxor.u32 %v4441, 2147483648
      %v4978 = vxor.u32 %v4632, 2147483648
      %v4979 = vxor.u32 %v4634, 2147483648
      %v4980 = vxor.u32 %v4814, 2147483648
      %v4981 = vxor.u32 %v4252, 2147483648
      %v4982 = vxor.u32 %v4254, 2147483648
      %v4983 = vxor.u32 %v4445, 2147483648
      %v4984 = vxor.u32 %v4447, 2147483648
      %v4985 = vxor.u32 %v4638, 2147483648
      %v4986 = vxor.u32 %v4640, 2147483648
      %v4987 = vxor.u32 %v4819, 2147483648
      %v4988 = vxor.u32 %v4256, 2147483648
      %v4989 = vxor.u32 %v4258, 2147483648
      %v4990 = vxor.u32 %v4449, 2147483648
      %v4991 = vxor.u32 %v4451, 2147483648
      %v4992 = vxor.u32 %v4642, 2147483648
      %v4993 = vxor.u32 %v4644, 2147483648
      %v4994 = vxor.u32 %v4822, 2147483648
      %v4995 = vxor.u32 %v4262, 2147483648
      %v4996 = vxor.u32 %v4264, 2147483648
      %v4997 = vxor.u32 %v4455, 2147483648
      %v4998 = vxor.u32 %v4457, 2147483648
      %v4999 = vxor.u32 %v4648, 2147483648
      %v5000 = vxor.u32 %v4650, 2147483648
      %v5001 = vxor.u32 %v4827, 2147483648
      %v5002 = vxor.u32 %v4266, 2147483648
      %v5003 = vxor.u32 %v4268, 2147483648
      %v5004 = vxor.u32 %v4459, 2147483648
      %v5005 = vxor.u32 %v4461, 2147483648
      %v5006 = vxor.u32 %v4652, 2147483648
      %v5007 = vxor.u32 %v4654, 2147483648
      %v5008 = vxor.u32 %v4830, 2147483648
      %v5009 = vxor.u32 %v4272, 2147483648
      %v5010 = vxor.u32 %v4274, 2147483648
      %v5011 = vxor.u32 %v4465, 2147483648
      %v5012 = vxor.u32 %v4467, 2147483648
      %v5013 = vxor.u32 %v4658, 2147483648
      %v5014 = vxor.u32 %v4660, 2147483648
      %v5015 = vxor.u32 %v4835, 2147483648
      %v5016 = vxor.u32 %v4276, 2147483648
      %v5017 = vxor.u32 %v4278, 2147483648
      %v5018 = vxor.u32 %v4469, 2147483648
      %v5019 = vxor.u32 %v4471, 2147483648
      %v5020 = vxor.u32 %v4662, 2147483648
      %v5021 = vxor.u32 %v4664, 2147483648
      %v5022 = vxor.u32 %v4838, 2147483648
      %v5023 = vxor.u32 %v4282, 2147483648
      %v5024 = vxor.u32 %v4284, 2147483648
      %v5025 = vxor.u32 %v4475, 2147483648
      %v5026 = vxor.u32 %v4477, 2147483648
      %v5027 = vxor.u32 %v4668, 2147483648
      %v5028 = vxor.u32 %v4670, 2147483648
      %v5029 = vxor.u32 %v4843, 2147483648
      %v5030 = vxor.u32 %v4286, 2147483648
      %v5031 = vxor.u32 %v4288, 2147483648
      %v5032 = vxor.u32 %v4479, 2147483648
      %v5033 = vxor.u32 %v4481, 2147483648
      %v5034 = vxor.u32 %v4672, 2147483648
      %v5035 = vxor.u32 %v4674, 2147483648
      %v5036 = vxor.u32 %v4846, 2147483648
      %v5037 = vxor.u32 %v4292, 2147483648
      %v5038 = vxor.u32 %v4294, 2147483648
      %v5039 = vxor.u32 %v4485, 2147483648
      %v5040 = vxor.u32 %v4487, 2147483648
      %v5041 = vxor.u32 %v4678, 2147483648
      %v5042 = vxor.u32 %v4680, 2147483648
      %v5043 = vxor.u32 %v4851, 2147483648
      %v5044 = vxor.u32 %v4296, 2147483648
      %v5045 = vxor.u32 %v4298, 2147483648
      %v5046 = vxor.u32 %v4489, 2147483648
      %v5047 = vxor.u32 %v4491, 2147483648
      %v5048 = vxor.u32 %v4682, 2147483648
      %v5049 = vxor.u32 %v4684, 2147483648
      %v5050 = vxor.u32 %v4854, 2147483648
      %v5051 = vxor.u32 %v4302, 2147483648
      %v5052 = vxor.u32 %v4304, 2147483648
      %v5053 = vxor.u32 %v4495, 2147483648
      %v5054 = vxor.u32 %v4497, 2147483648
      %v5055 = vxor.u32 %v4688, 2147483648
      %v5056 = vxor.u32 %v4690, 2147483648
      %v5057 = vxor.u32 %v4859, 2147483648
      %v5058 = vxor.u32 %v4306, 2147483648
      %v5059 = vxor.u32 %v4308, 2147483648
      %v5060 = vxor.u32 %v4499, 2147483648
      %v5061 = vxor.u32 %v4501, 2147483648
      %v5062 = vxor.u32 %v4692, 2147483648
      %v5063 = vxor.u32 %v4694, 2147483648
      %v5064 = vxor.u32 %v4862, 2147483648
      %v5065 = vxor.u32 %v4312, 2147483648
      %v5066 = vxor.u32 %v4314, 2147483648
      %v5067 = vxor.u32 %v4505, 2147483648
      %v5068 = vxor.u32 %v4507, 2147483648
      %v5069 = vxor.u32 %v4698, 2147483648
      %v5070 = vxor.u32 %v4700, 2147483648
      %v5071 = vxor.u32 %v4867, 2147483648
      %v5072 = vxor.u32 %v4316, 2147483648
      %v5073 = vxor.u32 %v4318, 2147483648
      %v5074 = vxor.u32 %v4509, 2147483648
      %v5075 = vxor.u32 %v4511, 2147483648
      %v5076 = vxor.u32 %v4702, 2147483648
      %v5077 = vxor.u32 %v4704, 2147483648
      %v5078 = vxor.u32 %v4870, 2147483648
      %v5079 = vxor.u32 %v4322, 2147483648
      %v5080 = vxor.u32 %v4324, 2147483648
      %v5081 = vxor.u32 %v4515, 2147483648
      %v5082 = vxor.u32 %v4517, 2147483648
      %v5083 = vxor.u32 %v4708, 2147483648
      %v5084 = vxor.u32 %v4710, 2147483648
      %v5085 = vxor.u32 %v4875, 2147483648
      %v5086 = vxor.u32 %v4326, 2147483648
      %v5087 = vxor.u32 %v4328, 2147483648
      %v5088 = vxor.u32 %v4519, 2147483648
      %v5089 = vxor.u32 %v4521, 2147483648
      %v5090 = vxor.u32 %v4712, 2147483648
      %v5091 = vxor.u32 %v4714, 2147483648
      %v5092 = vxor.u32 %v4878, 2147483648
      %v5093 = vxor.u32 %v4332, 2147483648
      %v5094 = vxor.u32 %v4334, 2147483648
      %v5095 = vxor.u32 %v4525, 2147483648
      %v5096 = vxor.u32 %v4527, 2147483648
      %v5097 = vxor.u32 %v4718, 2147483648
      %v5098 = vxor.u32 %v4720, 2147483648
      %v5099 = vxor.u32 %v4883, 2147483648
      %v5100 = vxor.u32 %v4336, 2147483648
      %v5101 = vxor.u32 %v4338, 2147483648
      %v5102 = vxor.u32 %v4529, 2147483648
      %v5103 = vxor.u32 %v4531, 2147483648
      %v5104 = vxor.u32 %v4722, 2147483648
      %v5105 = vxor.u32 %v4724, 2147483648
      %v5106 = vxor.u32 %v4886, 2147483648
      %v5107 = vxor.u32 %v4342, 2147483648
      %v5108 = vxor.u32 %v4344, 2147483648
      %v5109 = vxor.u32 %v4535, 2147483648
      %v5110 = vxor.u32 %v4537, 2147483648
      %v5111 = vxor.u32 %v4728, 2147483648
      %v5112 = vxor.u32 %v4730, 2147483648
      %v5113 = vxor.u32 %v4891, 2147483648
      %v5114 = vxor.u32 %v4346, 2147483648
      %v5115 = vxor.u32 %v4348, 2147483648
      %v5116 = vxor.u32 %v4539, 2147483648
      %v5117 = vxor.u32 %v4541, 2147483648
      %v5118 = vxor.u32 %v4732, 2147483648
      %v5119 = vxor.u32 %v4734, 2147483648
      %v5120 = vxor.u32 %v4894, 2147483648
      %v5121 = vmul.f32 %v4897, 1.442695
      %v5122 = vpow.pop %v5121
      %v5123 = vmul.f32 %v4898, 1.442695
      %v5124 = vpow.pop %v5123
      %v5125 = vmul.f32 %v4899, 1.442695
      %v5126 = vpow.pop %v5125
      %v5127 = vmul.f32 %v4900, 1.442695
      %v5128 = vpow.pop %v5127
      %v5129 = vmul.f32 %v4901, 1.442695
      %v5130 = vpow.pop %v5129
      %v5131 = vmul.f32 %v4902, 1.442695
      %v5132 = vpow.pop %v5131
      %v5133 = vmul.f32 %v4903, 1.442695
      %v5134 = vpow.pop %v5133
      %v5135 = vmul.f32 %v4904, 1.442695
      %v5136 = vpow.pop %v5135
      %v5137 = vmul.f32 %v4905, 1.442695
      %v5138 = vpow.pop %v5137
      %v5139 = vmul.f32 %v4906, 1.442695
      %v5140 = vpow.pop %v5139
      %v5141 = vmul.f32 %v4907, 1.442695
      %v5142 = vpow.pop %v5141
      %v5143 = vmul.f32 %v4908, 1.442695
      %v5144 = vpow.pop %v5143
      %v5145 = vmul.f32 %v4909, 1.442695
      %v5146 = vpow.pop %v5145
      %v5147 = vmul.f32 %v4910, 1.442695
      %v5148 = vpow.pop %v5147
      %v5149 = vmul.f32 %v4911, 1.442695
      %v5150 = vpow.pop %v5149
      %v5151 = vmul.f32 %v4912, 1.442695
      %v5152 = vpow.pop %v5151
      %v5153 = vmul.f32 %v4913, 1.442695
      %v5154 = vpow.pop %v5153
      %v5155 = vmul.f32 %v4914, 1.442695
      %v5156 = vpow.pop %v5155
      %v5157 = vmul.f32 %v4915, 1.442695
      %v5158 = vpow.pop %v5157
      %v5159 = vmul.f32 %v4916, 1.442695
      %v5160 = vpow.pop %v5159
      %v5161 = vmul.f32 %v4917, 1.442695
      %v5162 = vpow.pop %v5161
      %v5163 = vmul.f32 %v4918, 1.442695
      %v5164 = vpow.pop %v5163
      %v5165 = vmul.f32 %v4919, 1.442695
      %v5166 = vpow.pop %v5165
      %v5167 = vmul.f32 %v4920, 1.442695
      %v5168 = vpow.pop %v5167
      %v5169 = vmul.f32 %v4921, 1.442695
      %v5170 = vpow.pop %v5169
      %v5171 = vmul.f32 %v4922, 1.442695
      %v5172 = vpow.pop %v5171
      %v5173 = vmul.f32 %v4923, 1.442695
      %v5174 = vpow.pop %v5173
      %v5175 = vmul.f32 %v4924, 1.442695
      %v5176 = vpow.pop %v5175
      %v5177 = vmul.f32 %v4925, 1.442695
      %v5178 = vpow.pop %v5177
      %v5179 = vmul.f32 %v4926, 1.442695
      %v5180 = vpow.pop %v5179
      %v5181 = vmul.f32 %v4927, 1.442695
      %v5182 = vpow.pop %v5181
      %v5183 = vmul.f32 %v4928, 1.442695
      %v5184 = vpow.pop %v5183
      %v5185 = vmul.f32 %v4929, 1.442695
      %v5186 = vpow.pop %v5185
      %v5187 = vmul.f32 %v4930, 1.442695
      %v5188 = vpow.pop %v5187
      %v5189 = vmul.f32 %v4931, 1.442695
      %v5190 = vpow.pop %v5189
      %v5191 = vmul.f32 %v4932, 1.442695
      %v5192 = vpow.pop %v5191
      %v5193 = vmul.f32 %v4933, 1.442695
      %v5194 = vpow.pop %v5193
      %v5195 = vmul.f32 %v4934, 1.442695
      %v5196 = vpow.pop %v5195
      %v5197 = vmul.f32 %v4935, 1.442695
      %v5198 = vpow.pop %v5197
      %v5199 = vmul.f32 %v4936, 1.442695
      %v5200 = vpow.pop %v5199
      %v5201 = vmul.f32 %v4937, 1.442695
      %v5202 = vpow.pop %v5201
      %v5203 = vmul.f32 %v4938, 1.442695
      %v5204 = vpow.pop %v5203
      %v5205 = vmul.f32 %v4939, 1.442695
      %v5206 = vpow.pop %v5205
      %v5207 = vmul.f32 %v4940, 1.442695
      %v5208 = vpow.pop %v5207
      %v5209 = vmul.f32 %v4941, 1.442695
      %v5210 = vpow.pop %v5209
      %v5211 = vmul.f32 %v4942, 1.442695
      %v5212 = vpow.pop %v5211
      %v5213 = vmul.f32 %v4943, 1.442695
      %v5214 = vpow.pop %v5213
      %v5215 = vmul.f32 %v4944, 1.442695
      %v5216 = vpow.pop %v5215
      %v5217 = vmul.f32 %v4945, 1.442695
      %v5218 = vpow.pop %v5217
      %v5219 = vmul.f32 %v4946, 1.442695
      %v5220 = vpow.pop %v5219
      %v5221 = vmul.f32 %v4947, 1.442695
      %v5222 = vpow.pop %v5221
      %v5223 = vmul.f32 %v4948, 1.442695
      %v5224 = vpow.pop %v5223
      %v5225 = vmul.f32 %v4949, 1.442695
      %v5226 = vpow.pop %v5225
      %v5227 = vmul.f32 %v4950, 1.442695
      %v5228 = vpow.pop %v5227
      %v5229 = vmul.f32 %v4951, 1.442695
      %v5230 = vpow.pop %v5229
      %v5231 = vmul.f32 %v4952, 1.442695
      %v5232 = vpow.pop %v5231
      %v5233 = vmul.f32 %v4953, 1.442695
      %v5234 = vpow.pop %v5233
      %v5235 = vmul.f32 %v4954, 1.442695
      %v5236 = vpow.pop %v5235
      %v5237 = vmul.f32 %v4955, 1.442695
      %v5238 = vpow.pop %v5237
      %v5239 = vmul.f32 %v4956, 1.442695
      %v5240 = vpow.pop %v5239
      %v5241 = vmul.f32 %v4957, 1.442695
      %v5242 = vpow.pop %v5241
      %v5243 = vmul.f32 %v4958, 1.442695
      %v5244 = vpow.pop %v5243
      %v5245 = vmul.f32 %v4959, 1.442695
      %v5246 = vpow.pop %v5245
      %v5247 = vmul.f32 %v4960, 1.442695
      %v5248 = vpow.pop %v5247
      %v5249 = vmul.f32 %v4961, 1.442695
      %v5250 = vpow.pop %v5249
      %v5251 = vmul.f32 %v4962, 1.442695
      %v5252 = vpow.pop %v5251
      %v5253 = vmul.f32 %v4963, 1.442695
      %v5254 = vpow.pop %v5253
      %v5255 = vmul.f32 %v4964, 1.442695
      %v5256 = vpow.pop %v5255
      %v5257 = vmul.f32 %v4965, 1.442695
      %v5258 = vpow.pop %v5257
      %v5259 = vmul.f32 %v4966, 1.442695
      %v5260 = vpow.pop %v5259
      %v5261 = vmul.f32 %v4967, 1.442695
      %v5262 = vpow.pop %v5261
      %v5263 = vmul.f32 %v4968, 1.442695
      %v5264 = vpow.pop %v5263
      %v5265 = vmul.f32 %v4969, 1.442695
      %v5266 = vpow.pop %v5265
      %v5267 = vmul.f32 %v4970, 1.442695
      %v5268 = vpow.pop %v5267
      %v5269 = vmul.f32 %v4971, 1.442695
      %v5270 = vpow.pop %v5269
      %v5271 = vmul.f32 %v4972, 1.442695
      %v5272 = vpow.pop %v5271
      %v5273 = vmul.f32 %v4973, 1.442695
      %v5274 = vpow.pop %v5273
      %v5275 = vmul.f32 %v4974, 1.442695
      %v5276 = vpow.pop %v5275
      %v5277 = vmul.f32 %v4975, 1.442695
      %v5278 = vpow.pop %v5277
      %v5279 = vmul.f32 %v4976, 1.442695
      %v5280 = vpow.pop %v5279
      %v5281 = vmul.f32 %v4977, 1.442695
      %v5282 = vpow.pop %v5281
      %v5283 = vmul.f32 %v4978, 1.442695
      %v5284 = vpow.pop %v5283
      %v5285 = vmul.f32 %v4979, 1.442695
      %v5286 = vpow.pop %v5285
      %v5287 = vmul.f32 %v4980, 1.442695
      %v5288 = vpow.pop %v5287
      %v5289 = vmul.f32 %v4981, 1.442695
      %v5290 = vpow.pop %v5289
      %v5291 = vmul.f32 %v4982, 1.442695
      %v5292 = vpow.pop %v5291
      %v5293 = vmul.f32 %v4983, 1.442695
      %v5294 = vpow.pop %v5293
      %v5295 = vmul.f32 %v4984, 1.442695
      %v5296 = vpow.pop %v5295
      %v5297 = vmul.f32 %v4985, 1.442695
      %v5298 = vpow.pop %v5297
      %v5299 = vmul.f32 %v4986, 1.442695
      %v5300 = vpow.pop %v5299
      %v5301 = vmul.f32 %v4987, 1.442695
      %v5302 = vpow.pop %v5301
      %v5303 = vmul.f32 %v4988, 1.442695
      %v5304 = vpow.pop %v5303
      %v5305 = vmul.f32 %v4989, 1.442695
      %v5306 = vpow.pop %v5305
      %v5307 = vmul.f32 %v4990, 1.442695
      %v5308 = vpow.pop %v5307
      %v5309 = vmul.f32 %v4991, 1.442695
      %v5310 = vpow.pop %v5309
      %v5311 = vmul.f32 %v4992, 1.442695
      %v5312 = vpow.pop %v5311
      %v5313 = vmul.f32 %v4993, 1.442695
      %v5314 = vpow.pop %v5313
      %v5315 = vmul.f32 %v4994, 1.442695
      %v5316 = vpow.pop %v5315
      %v5317 = vmul.f32 %v4995, 1.442695
      %v5318 = vpow.pop %v5317
      %v5319 = vmul.f32 %v4996, 1.442695
      %v5320 = vpow.pop %v5319
      %v5321 = vmul.f32 %v4997, 1.442695
      %v5322 = vpow.pop %v5321
      %v5323 = vmul.f32 %v4998, 1.442695
      %v5324 = vpow.pop %v5323
      %v5325 = vmul.f32 %v4999, 1.442695
      %v5326 = vpow.pop %v5325
      %v5327 = vmul.f32 %v5000, 1.442695
      %v5328 = vpow.pop %v5327
      %v5329 = vmul.f32 %v5001, 1.442695
      %v5330 = vpow.pop %v5329
      %v5331 = vmul.f32 %v5002, 1.442695
      %v5332 = vpow.pop %v5331
      %v5333 = vmul.f32 %v5003, 1.442695
      %v5334 = vpow.pop %v5333
      %v5335 = vmul.f32 %v5004, 1.442695
      %v5336 = vpow.pop %v5335
      %v5337 = vmul.f32 %v5005, 1.442695
      %v5338 = vpow.pop %v5337
      %v5339 = vmul.f32 %v5006, 1.442695
      %v5340 = vpow.pop %v5339
      %v5341 = vmul.f32 %v5007, 1.442695
      %v5342 = vpow.pop %v5341
      %v5343 = vmul.f32 %v5008, 1.442695
      %v5344 = vpow.pop %v5343
      %v5345 = vmul.f32 %v5009, 1.442695
      %v5346 = vpow.pop %v5345
      %v5347 = vmul.f32 %v5010, 1.442695
      %v5348 = vpow.pop %v5347
      %v5349 = vmul.f32 %v5011, 1.442695
      %v5350 = vpow.pop %v5349
      %v5351 = vmul.f32 %v5012, 1.442695
      %v5352 = vpow.pop %v5351
      %v5353 = vmul.f32 %v5013, 1.442695
      %v5354 = vpow.pop %v5353
      %v5355 = vmul.f32 %v5014, 1.442695
      %v5356 = vpow.pop %v5355
      %v5357 = vmul.f32 %v5015, 1.442695
      %v5358 = vpow.pop %v5357
      %v5359 = vmul.f32 %v5016, 1.442695
      %v5360 = vpow.pop %v5359
      %v5361 = vmul.f32 %v5017, 1.442695
      %v5362 = vpow.pop %v5361
      %v5363 = vmul.f32 %v5018, 1.442695
      %v5364 = vpow.pop %v5363
      %v5365 = vmul.f32 %v5019, 1.442695
      %v5366 = vpow.pop %v5365
      %v5367 = vmul.f32 %v5020, 1.442695
      %v5368 = vpow.pop %v5367
      %v5369 = vmul.f32 %v5021, 1.442695
      %v5370 = vpow.pop %v5369
      %v5371 = vmul.f32 %v5022, 1.442695
      %v5372 = vpow.pop %v5371
      %v5373 = vmul.f32 %v5023, 1.442695
      %v5374 = vpow.pop %v5373
      %v5375 = vmul.f32 %v5024, 1.442695
      %v5376 = vpow.pop %v5375
      %v5377 = vmul.f32 %v5025, 1.442695
      %v5378 = vpow.pop %v5377
      %v5379 = vmul.f32 %v5026, 1.442695
      %v5380 = vpow.pop %v5379
      %v5381 = vmul.f32 %v5027, 1.442695
      %v5382 = vpow.pop %v5381
      %v5383 = vmul.f32 %v5028, 1.442695
      %v5384 = vpow.pop %v5383
      %v5385 = vmul.f32 %v5029, 1.442695
      %v5386 = vpow.pop %v5385
      %v5387 = vmul.f32 %v5030, 1.442695
      %v5388 = vpow.pop %v5387
      %v5389 = vmul.f32 %v5031, 1.442695
      %v5390 = vpow.pop %v5389
      %v5391 = vmul.f32 %v5032, 1.442695
      %v5392 = vpow.pop %v5391
      %v5393 = vmul.f32 %v5033, 1.442695
      %v5394 = vpow.pop %v5393
      %v5395 = vmul.f32 %v5034, 1.442695
      %v5396 = vpow.pop %v5395
      %v5397 = vmul.f32 %v5035, 1.442695
      %v5398 = vpow.pop %v5397
      %v5399 = vmul.f32 %v5036, 1.442695
      %v5400 = vpow.pop %v5399
      %v5401 = vmul.f32 %v5037, 1.442695
      %v5402 = vpow.pop %v5401
      %v5403 = vmul.f32 %v5038, 1.442695
      %v5404 = vpow.pop %v5403
      %v5405 = vmul.f32 %v5039, 1.442695
      %v5406 = vpow.pop %v5405
      %v5407 = vmul.f32 %v5040, 1.442695
      %v5408 = vpow.pop %v5407
      %v5409 = vmul.f32 %v5041, 1.442695
      %v5410 = vpow.pop %v5409
      %v5411 = vmul.f32 %v5042, 1.442695
      %v5412 = vpow.pop %v5411
      %v5413 = vmul.f32 %v5043, 1.442695
      %v5414 = vpow.pop %v5413
      %v5415 = vmul.f32 %v5044, 1.442695
      %v5416 = vpow.pop %v5415
      %v5417 = vmul.f32 %v5045, 1.442695
      %v5418 = vpow.pop %v5417
      %v5419 = vmul.f32 %v5046, 1.442695
      %v5420 = vpow.pop %v5419
      %v5421 = vmul.f32 %v5047, 1.442695
      %v5422 = vpow.pop %v5421
      %v5423 = vmul.f32 %v5048, 1.442695
      %v5424 = vpow.pop %v5423
      %v5425 = vmul.f32 %v5049, 1.442695
      %v5426 = vpow.pop %v5425
      %v5427 = vmul.f32 %v5050, 1.442695
      %v5428 = vpow.pop %v5427
      %v5429 = vmul.f32 %v5051, 1.442695
      %v5430 = vpow.pop %v5429
      %v5431 = vmul.f32 %v5052, 1.442695
      %v5432 = vpow.pop %v5431
      %v5433 = vmul.f32 %v5053, 1.442695
      %v5434 = vpow.pop %v5433
      %v5435 = vmul.f32 %v5054, 1.442695
      %v5436 = vpow.pop %v5435
      %v5437 = vmul.f32 %v5055, 1.442695
      %v5438 = vpow.pop %v5437
      %v5439 = vmul.f32 %v5056, 1.442695
      %v5440 = vpow.pop %v5439
      %v5441 = vmul.f32 %v5057, 1.442695
      %v5442 = vpow.pop %v5441
      %v5443 = vmul.f32 %v5058, 1.442695
      %v5444 = vpow.pop %v5443
      %v5445 = vmul.f32 %v5059, 1.442695
      %v5446 = vpow.pop %v5445
      %v5447 = vmul.f32 %v5060, 1.442695
      %v5448 = vpow.pop %v5447
      %v5449 = vmul.f32 %v5061, 1.442695
      %v5450 = vpow.pop %v5449
      %v5451 = vmul.f32 %v5062, 1.442695
      %v5452 = vpow.pop %v5451
      %v5453 = vmul.f32 %v5063, 1.442695
      %v5454 = vpow.pop %v5453
      %v5455 = vmul.f32 %v5064, 1.442695
      %v5456 = vpow.pop %v5455
      %v5457 = vmul.f32 %v5065, 1.442695
      %v5458 = vpow.pop %v5457
      %v5459 = vmul.f32 %v5066, 1.442695
      %v5460 = vpow.pop %v5459
      %v5461 = vmul.f32 %v5067, 1.442695
      %v5462 = vpow.pop %v5461
      %v5463 = vmul.f32 %v5068, 1.442695
      %v5464 = vpow.pop %v5463
      %v5465 = vmul.f32 %v5069, 1.442695
      %v5466 = vpow.pop %v5465
      %v5467 = vmul.f32 %v5070, 1.442695
      %v5468 = vpow.pop %v5467
      %v5469 = vmul.f32 %v5071, 1.442695
      %v5470 = vpow.pop %v5469
      %v5471 = vmul.f32 %v5072, 1.442695
      %v5472 = vpow.pop %v5471
      %v5473 = vmul.f32 %v5073, 1.442695
      %v5474 = vpow.pop %v5473
      %v5475 = vmul.f32 %v5074, 1.442695
      %v5476 = vpow.pop %v5475
      %v5477 = vmul.f32 %v5075, 1.442695
      %v5478 = vpow.pop %v5477
      %v5479 = vmul.f32 %v5076, 1.442695
      %v5480 = vpow.pop %v5479
      %v5481 = vmul.f32 %v5077, 1.442695
      %v5482 = vpow.pop %v5481
      %v5483 = vmul.f32 %v5078, 1.442695
      %v5484 = vpow.pop %v5483
      %v5485 = vmul.f32 %v5079, 1.442695
      %v5486 = vpow.pop %v5485
      %v5487 = vmul.f32 %v5080, 1.442695
      %v5488 = vpow.pop %v5487
      %v5489 = vmul.f32 %v5081, 1.442695
      %v5490 = vpow.pop %v5489
      %v5491 = vmul.f32 %v5082, 1.442695
      %v5492 = vpow.pop %v5491
      %v5493 = vmul.f32 %v5083, 1.442695
      %v5494 = vpow.pop %v5493
      %v5495 = vmul.f32 %v5084, 1.442695
      %v5496 = vpow.pop %v5495
      %v5497 = vmul.f32 %v5085, 1.442695
      %v5498 = vpow.pop %v5497
      %v5499 = vmul.f32 %v5086, 1.442695
      %v5500 = vpow.pop %v5499
      %v5501 = vmul.f32 %v5087, 1.442695
      %v5502 = vpow.pop %v5501
      %v5503 = vmul.f32 %v5088, 1.442695
      %v5504 = vpow.pop %v5503
      %v5505 = vmul.f32 %v5089, 1.442695
      %v5506 = vpow.pop %v5505
      %v5507 = vmul.f32 %v5090, 1.442695
      %v5508 = vpow.pop %v5507
      %v5509 = vmul.f32 %v5091, 1.442695
      %v5510 = vpow.pop %v5509
      %v5511 = vmul.f32 %v5092, 1.442695
      %v5512 = vpow.pop %v5511
      %v5513 = vmul.f32 %v5093, 1.442695
      %v5514 = vpow.pop %v5513
      %v5515 = vmul.f32 %v5094, 1.442695
      %v5516 = vpow.pop %v5515
      %v5517 = vmul.f32 %v5095, 1.442695
      %v5518 = vpow.pop %v5517
      %v5519 = vmul.f32 %v5096, 1.442695
      %v5520 = vpow.pop %v5519
      %v5521 = vmul.f32 %v5097, 1.442695
      %v5522 = vpow.pop %v5521
      %v5523 = vmul.f32 %v5098, 1.442695
      %v5524 = vpow.pop %v5523
      %v5525 = vmul.f32 %v5099, 1.442695
      %v5526 = vpow.pop %v5525
      %v5527 = vmul.f32 %v5100, 1.442695
      %v5528 = vpow.pop %v5527
      %v5529 = vmul.f32 %v5101, 1.442695
      %v5530 = vpow.pop %v5529
      %v5531 = vmul.f32 %v5102, 1.442695
      %v5532 = vpow.pop %v5531
      %v5533 = vmul.f32 %v5103, 1.442695
      %v5534 = vpow.pop %v5533
      %v5535 = vmul.f32 %v5104, 1.442695
      %v5536 = vpow.pop %v5535
      %v5537 = vmul.f32 %v5105, 1.442695
      %v5538 = vpow.pop %v5537
      %v5539 = vmul.f32 %v5106, 1.442695
      %v5540 = vpow.pop %v5539
      %v5541 = vmul.f32 %v5107, 1.442695
      %v5542 = vpow.pop %v5541
      %v5543 = vmul.f32 %v5108, 1.442695
      %v5544 = vpow.pop %v5543
      %v5545 = vmul.f32 %v5109, 1.442695
      %v5546 = vpow.pop %v5545
      %v5547 = vmul.f32 %v5110, 1.442695
      %v5548 = vpow.pop %v5547
      %v5549 = vmul.f32 %v5111, 1.442695
      %v5550 = vpow.pop %v5549
      %v5551 = vmul.f32 %v5112, 1.442695
      %v5552 = vpow.pop %v5551
      %v5553 = vmul.f32 %v5113, 1.442695
      %v5554 = vpow.pop %v5553
      %v5555 = vmul.f32 %v5114, 1.442695
      %v5556 = vpow.pop %v5555
      %v5557 = vmul.f32 %v5115, 1.442695
      %v5558 = vpow.pop %v5557
      %v5559 = vmul.f32 %v5116, 1.442695
      %v5560 = vpow.pop %v5559
      %v5561 = vmul.f32 %v5117, 1.442695
      %v5562 = vpow.pop %v5561
      %v5563 = vmul.f32 %v5118, 1.442695
      %v5564 = vpow.pop %v5563
      %v5565 = vmul.f32 %v5119, 1.442695
      %v5566 = vpow.pop %v5565
      %v5567 = vmul.f32 %v5120, 1.442695
      %v5568 = vpow.pop %v5567
      %v5569 = vadd.f32 %v5122, 1.0
      %v5570 = vadd.f32 %v5124, 1.0
      %v5571 = vadd.f32 %v5126, 1.0
      %v5572 = vadd.f32 %v5128, 1.0
      %v5573 = vadd.f32 %v5130, 1.0
      %v5574 = vadd.f32 %v5132, 1.0
      %v5575 = vadd.f32 %v5134, 1.0
      %v5576 = vadd.f32 %v5136, 1.0
      %v5577 = vadd.f32 %v5138, 1.0
      %v5578 = vadd.f32 %v5140, 1.0
      %v5579 = vadd.f32 %v5142, 1.0
      %v5580 = vadd.f32 %v5144, 1.0
      %v5581 = vadd.f32 %v5146, 1.0
      %v5582 = vadd.f32 %v5148, 1.0
      %v5583 = vadd.f32 %v5150, 1.0
      %v5584 = vadd.f32 %v5152, 1.0
      %v5585 = vadd.f32 %v5154, 1.0
      %v5586 = vadd.f32 %v5156, 1.0
      %v5587 = vadd.f32 %v5158, 1.0
      %v5588 = vadd.f32 %v5160, 1.0
      %v5589 = vadd.f32 %v5162, 1.0
      %v5590 = vadd.f32 %v5164, 1.0
      %v5591 = vadd.f32 %v5166, 1.0
      %v5592 = vadd.f32 %v5168, 1.0
      %v5593 = vadd.f32 %v5170, 1.0
      %v5594 = vadd.f32 %v5172, 1.0
      %v5595 = vadd.f32 %v5174, 1.0
      %v5596 = vadd.f32 %v5176, 1.0
      %v5597 = vadd.f32 %v5178, 1.0
      %v5598 = vadd.f32 %v5180, 1.0
      %v5599 = vadd.f32 %v5182, 1.0
      %v5600 = vadd.f32 %v5184, 1.0
      %v5601 = vadd.f32 %v5186, 1.0
      %v5602 = vadd.f32 %v5188, 1.0
      %v5603 = vadd.f32 %v5190, 1.0
      %v5604 = vadd.f32 %v5192, 1.0
      %v5605 = vadd.f32 %v5194, 1.0
      %v5606 = vadd.f32 %v5196, 1.0
      %v5607 = vadd.f32 %v5198, 1.0
      %v5608 = vadd.f32 %v5200, 1.0
      %v5609 = vadd.f32 %v5202, 1.0
      %v5610 = vadd.f32 %v5204, 1.0
      %v5611 = vadd.f32 %v5206, 1.0
      %v5612 = vadd.f32 %v5208, 1.0
      %v5613 = vadd.f32 %v5210, 1.0
      %v5614 = vadd.f32 %v5212, 1.0
      %v5615 = vadd.f32 %v5214, 1.0
      %v5616 = vadd.f32 %v5216, 1.0
      %v5617 = vadd.f32 %v5218, 1.0
      %v5618 = vadd.f32 %v5220, 1.0
      %v5619 = vadd.f32 %v5222, 1.0
      %v5620 = vadd.f32 %v5224, 1.0
      %v5621 = vadd.f32 %v5226, 1.0
      %v5622 = vadd.f32 %v5228, 1.0
      %v5623 = vadd.f32 %v5230, 1.0
      %v5624 = vadd.f32 %v5232, 1.0
      %v5625 = vadd.f32 %v5234, 1.0
      %v5626 = vadd.f32 %v5236, 1.0
      %v5627 = vadd.f32 %v5238, 1.0
      %v5628 = vadd.f32 %v5240, 1.0
      %v5629 = vadd.f32 %v5242, 1.0
      %v5630 = vadd.f32 %v5244, 1.0
      %v5631 = vadd.f32 %v5246, 1.0
      %v5632 = vadd.f32 %v5248, 1.0
      %v5633 = vadd.f32 %v5250, 1.0
      %v5634 = vadd.f32 %v5252, 1.0
      %v5635 = vadd.f32 %v5254, 1.0
      %v5636 = vadd.f32 %v5256, 1.0
      %v5637 = vadd.f32 %v5258, 1.0
      %v5638 = vadd.f32 %v5260, 1.0
      %v5639 = vadd.f32 %v5262, 1.0
      %v5640 = vadd.f32 %v5264, 1.0
      %v5641 = vadd.f32 %v5266, 1.0
      %v5642 = vadd.f32 %v5268, 1.0
      %v5643 = vadd.f32 %v5270, 1.0
      %v5644 = vadd.f32 %v5272, 1.0
      %v5645 = vadd.f32 %v5274, 1.0
      %v5646 = vadd.f32 %v5276, 1.0
      %v5647 = vadd.f32 %v5278, 1.0
      %v5648 = vadd.f32 %v5280, 1.0
      %v5649 = vadd.f32 %v5282, 1.0
      %v5650 = vadd.f32 %v5284, 1.0
      %v5651 = vadd.f32 %v5286, 1.0
      %v5652 = vadd.f32 %v5288, 1.0
      %v5653 = vadd.f32 %v5290, 1.0
      %v5654 = vadd.f32 %v5292, 1.0
      %v5655 = vadd.f32 %v5294, 1.0
      %v5656 = vadd.f32 %v5296, 1.0
      %v5657 = vadd.f32 %v5298, 1.0
      %v5658 = vadd.f32 %v5300, 1.0
      %v5659 = vadd.f32 %v5302, 1.0
      %v5660 = vadd.f32 %v5304, 1.0
      %v5661 = vadd.f32 %v5306, 1.0
      %v5662 = vadd.f32 %v5308, 1.0
      %v5663 = vadd.f32 %v5310, 1.0
      %v5664 = vadd.f32 %v5312, 1.0
      %v5665 = vadd.f32 %v5314, 1.0
      %v5666 = vadd.f32 %v5316, 1.0
      %v5667 = vadd.f32 %v5318, 1.0
      %v5668 = vadd.f32 %v5320, 1.0
      %v5669 = vadd.f32 %v5322, 1.0
      %v5670 = vadd.f32 %v5324, 1.0
      %v5671 = vadd.f32 %v5326, 1.0
      %v5672 = vadd.f32 %v5328, 1.0
      %v5673 = vadd.f32 %v5330, 1.0
      %v5674 = vadd.f32 %v5332, 1.0
      %v5675 = vadd.f32 %v5334, 1.0
      %v5676 = vadd.f32 %v5336, 1.0
      %v5677 = vadd.f32 %v5338, 1.0
      %v5678 = vadd.f32 %v5340, 1.0
      %v5679 = vadd.f32 %v5342, 1.0
      %v5680 = vadd.f32 %v5344, 1.0
      %v5681 = vadd.f32 %v5346, 1.0
      %v5682 = vadd.f32 %v5348, 1.0
      %v5683 = vadd.f32 %v5350, 1.0
      %v5684 = vadd.f32 %v5352, 1.0
      %v5685 = vadd.f32 %v5354, 1.0
      %v5686 = vadd.f32 %v5356, 1.0
      %v5687 = vadd.f32 %v5358, 1.0
      %v5688 = vadd.f32 %v5360, 1.0
      %v5689 = vadd.f32 %v5362, 1.0
      %v5690 = vadd.f32 %v5364, 1.0
      %v5691 = vadd.f32 %v5366, 1.0
      %v5692 = vadd.f32 %v5368, 1.0
      %v5693 = vadd.f32 %v5370, 1.0
      %v5694 = vadd.f32 %v5372, 1.0
      %v5695 = vadd.f32 %v5374, 1.0
      %v5696 = vadd.f32 %v5376, 1.0
      %v5697 = vadd.f32 %v5378, 1.0
      %v5698 = vadd.f32 %v5380, 1.0
      %v5699 = vadd.f32 %v5382, 1.0
      %v5700 = vadd.f32 %v5384, 1.0
      %v5701 = vadd.f32 %v5386, 1.0
      %v5702 = vadd.f32 %v5388, 1.0
      %v5703 = vadd.f32 %v5390, 1.0
      %v5704 = vadd.f32 %v5392, 1.0
      %v5705 = vadd.f32 %v5394, 1.0
      %v5706 = vadd.f32 %v5396, 1.0
      %v5707 = vadd.f32 %v5398, 1.0
      %v5708 = vadd.f32 %v5400, 1.0
      %v5709 = vadd.f32 %v5402, 1.0
      %v5710 = vadd.f32 %v5404, 1.0
      %v5711 = vadd.f32 %v5406, 1.0
      %v5712 = vadd.f32 %v5408, 1.0
      %v5713 = vadd.f32 %v5410, 1.0
      %v5714 = vadd.f32 %v5412, 1.0
      %v5715 = vadd.f32 %v5414, 1.0
      %v5716 = vadd.f32 %v5416, 1.0
      %v5717 = vadd.f32 %v5418, 1.0
      %v5718 = vadd.f32 %v5420, 1.0
      %v5719 = vadd.f32 %v5422, 1.0
      %v5720 = vadd.f32 %v5424, 1.0
      %v5721 = vadd.f32 %v5426, 1.0
      %v5722 = vadd.f32 %v5428, 1.0
      %v5723 = vadd.f32 %v5430, 1.0
      %v5724 = vadd.f32 %v5432, 1.0
      %v5725 = vadd.f32 %v5434, 1.0
      %v5726 = vadd.f32 %v5436, 1.0
      %v5727 = vadd.f32 %v5438, 1.0
      %v5728 = vadd.f32 %v5440, 1.0
      %v5729 = vadd.f32 %v5442, 1.0
      %v5730 = vadd.f32 %v5444, 1.0
      %v5731 = vadd.f32 %v5446, 1.0
      %v5732 = vadd.f32 %v5448, 1.0
      %v5733 = vadd.f32 %v5450, 1.0
      %v5734 = vadd.f32 %v5452, 1.0
      %v5735 = vadd.f32 %v5454, 1.0
      %v5736 = vadd.f32 %v5456, 1.0
      %v5737 = vadd.f32 %v5458, 1.0
      %v5738 = vadd.f32 %v5460, 1.0
      %v5739 = vadd.f32 %v5462, 1.0
      %v5740 = vadd.f32 %v5464, 1.0
      %v5741 = vadd.f32 %v5466, 1.0
      %v5742 = vadd.f32 %v5468, 1.0
      %v5743 = vadd.f32 %v5470, 1.0
      %v5744 = vadd.f32 %v5472, 1.0
      %v5745 = vadd.f32 %v5474, 1.0
      %v5746 = vadd.f32 %v5476, 1.0
      %v5747 = vadd.f32 %v5478, 1.0
      %v5748 = vadd.f32 %v5480, 1.0
      %v5749 = vadd.f32 %v5482, 1.0
      %v5750 = vadd.f32 %v5484, 1.0
      %v5751 = vadd.f32 %v5486, 1.0
      %v5752 = vadd.f32 %v5488, 1.0
      %v5753 = vadd.f32 %v5490, 1.0
      %v5754 = vadd.f32 %v5492, 1.0
      %v5755 = vadd.f32 %v5494, 1.0
      %v5756 = vadd.f32 %v5496, 1.0
      %v5757 = vadd.f32 %v5498, 1.0
      %v5758 = vadd.f32 %v5500, 1.0
      %v5759 = vadd.f32 %v5502, 1.0
      %v5760 = vadd.f32 %v5504, 1.0
      %v5761 = vadd.f32 %v5506, 1.0
      %v5762 = vadd.f32 %v5508, 1.0
      %v5763 = vadd.f32 %v5510, 1.0
      %v5764 = vadd.f32 %v5512, 1.0
      %v5765 = vadd.f32 %v5514, 1.0
      %v5766 = vadd.f32 %v5516, 1.0
      %v5767 = vadd.f32 %v5518, 1.0
      %v5768 = vadd.f32 %v5520, 1.0
      %v5769 = vadd.f32 %v5522, 1.0
      %v5770 = vadd.f32 %v5524, 1.0
      %v5771 = vadd.f32 %v5526, 1.0
      %v5772 = vadd.f32 %v5528, 1.0
      %v5773 = vadd.f32 %v5530, 1.0
      %v5774 = vadd.f32 %v5532, 1.0
      %v5775 = vadd.f32 %v5534, 1.0
      %v5776 = vadd.f32 %v5536, 1.0
      %v5777 = vadd.f32 %v5538, 1.0
      %v5778 = vadd.f32 %v5540, 1.0
      %v5779 = vadd.f32 %v5542, 1.0
      %v5780 = vadd.f32 %v5544, 1.0
      %v5781 = vadd.f32 %v5546, 1.0
      %v5782 = vadd.f32 %v5548, 1.0
      %v5783 = vadd.f32 %v5550, 1.0
      %v5784 = vadd.f32 %v5552, 1.0
      %v5785 = vadd.f32 %v5554, 1.0
      %v5786 = vadd.f32 %v5556, 1.0
      %v5787 = vadd.f32 %v5558, 1.0
      %v5788 = vadd.f32 %v5560, 1.0
      %v5789 = vadd.f32 %v5562, 1.0
      %v5790 = vadd.f32 %v5564, 1.0
      %v5791 = vadd.f32 %v5566, 1.0
      %v5792 = vadd.f32 %v5568, 1.0
      %v5793 = vrcp.pop %v5569
      %v5794 = vmul.f32 1.0, %v5793
      %v5795 = vrcp.pop %v5570
      %v5796 = vmul.f32 1.0, %v5795
      %v5797 = vrcp.pop %v5571
      %v5798 = vmul.f32 1.0, %v5797
      %v5799 = vrcp.pop %v5572
      %v5800 = vmul.f32 1.0, %v5799
      %v5801 = vrcp.pop %v5573
      %v5802 = vmul.f32 1.0, %v5801
      %v5803 = vrcp.pop %v5574
      %v5804 = vmul.f32 1.0, %v5803
      %v5805 = vrcp.pop %v5575
      %v5806 = vmul.f32 1.0, %v5805
      %v5807 = vrcp.pop %v5576
      %v5808 = vmul.f32 1.0, %v5807
      %v5809 = vrcp.pop %v5577
      %v5810 = vmul.f32 1.0, %v5809
      %v5811 = vrcp.pop %v5578
      %v5812 = vmul.f32 1.0, %v5811
      %v5813 = vrcp.pop %v5579
      %v5814 = vmul.f32 1.0, %v5813
      %v5815 = vrcp.pop %v5580
      %v5816 = vmul.f32 1.0, %v5815
      %v5817 = vrcp.pop %v5581
      %v5818 = vmul.f32 1.0, %v5817
      %v5819 = vrcp.pop %v5582
      %v5820 = vmul.f32 1.0, %v5819
      %v5821 = vrcp.pop %v5583
      %v5822 = vmul.f32 1.0, %v5821
      %v5823 = vrcp.pop %v5584
      %v5824 = vmul.f32 1.0, %v5823
      %v5825 = vrcp.pop %v5585
      %v5826 = vmul.f32 1.0, %v5825
      %v5827 = vrcp.pop %v5586
      %v5828 = vmul.f32 1.0, %v5827
      %v5829 = vrcp.pop %v5587
      %v5830 = vmul.f32 1.0, %v5829
      %v5831 = vrcp.pop %v5588
      %v5832 = vmul.f32 1.0, %v5831
      %v5833 = vrcp.pop %v5589
      %v5834 = vmul.f32 1.0, %v5833
      %v5835 = vrcp.pop %v5590
      %v5836 = vmul.f32 1.0, %v5835
      %v5837 = vrcp.pop %v5591
      %v5838 = vmul.f32 1.0, %v5837
      %v5839 = vrcp.pop %v5592
      %v5840 = vmul.f32 1.0, %v5839
      %v5841 = vrcp.pop %v5593
      %v5842 = vmul.f32 1.0, %v5841
      %v5843 = vrcp.pop %v5594
      %v5844 = vmul.f32 1.0, %v5843
      %v5845 = vrcp.pop %v5595
      %v5846 = vmul.f32 1.0, %v5845
      %v5847 = vrcp.pop %v5596
      %v5848 = vmul.f32 1.0, %v5847
      %v5849 = vrcp.pop %v5597
      %v5850 = vmul.f32 1.0, %v5849
      %v5851 = vrcp.pop %v5598
      %v5852 = vmul.f32 1.0, %v5851
      %v5853 = vrcp.pop %v5599
      %v5854 = vmul.f32 1.0, %v5853
      %v5855 = vrcp.pop %v5600
      %v5856 = vmul.f32 1.0, %v5855
      %v5857 = vrcp.pop %v5601
      %v5858 = vmul.f32 1.0, %v5857
      %v5859 = vrcp.pop %v5602
      %v5860 = vmul.f32 1.0, %v5859
      %v5861 = vrcp.pop %v5603
      %v5862 = vmul.f32 1.0, %v5861
      %v5863 = vrcp.pop %v5604
      %v5864 = vmul.f32 1.0, %v5863
      %v5865 = vrcp.pop %v5605
      %v5866 = vmul.f32 1.0, %v5865
      %v5867 = vrcp.pop %v5606
      %v5868 = vmul.f32 1.0, %v5867
      %v5869 = vrcp.pop %v5607
      %v5870 = vmul.f32 1.0, %v5869
      %v5871 = vrcp.pop %v5608
      %v5872 = vmul.f32 1.0, %v5871
      %v5873 = vrcp.pop %v5609
      %v5874 = vmul.f32 1.0, %v5873
      %v5875 = vrcp.pop %v5610
      %v5876 = vmul.f32 1.0, %v5875
      %v5877 = vrcp.pop %v5611
      %v5878 = vmul.f32 1.0, %v5877
      %v5879 = vrcp.pop %v5612
      %v5880 = vmul.f32 1.0, %v5879
      %v5881 = vrcp.pop %v5613
      %v5882 = vmul.f32 1.0, %v5881
      %v5883 = vrcp.pop %v5614
      %v5884 = vmul.f32 1.0, %v5883
      %v5885 = vrcp.pop %v5615
      %v5886 = vmul.f32 1.0, %v5885
      %v5887 = vrcp.pop %v5616
      %v5888 = vmul.f32 1.0, %v5887
      %v5889 = vrcp.pop %v5617
      %v5890 = vmul.f32 1.0, %v5889
      %v5891 = vrcp.pop %v5618
      %v5892 = vmul.f32 1.0, %v5891
      %v5893 = vrcp.pop %v5619
      %v5894 = vmul.f32 1.0, %v5893
      %v5895 = vrcp.pop %v5620
      %v5896 = vmul.f32 1.0, %v5895
      %v5897 = vrcp.pop %v5621
      %v5898 = vmul.f32 1.0, %v5897
      %v5899 = vrcp.pop %v5622
      %v5900 = vmul.f32 1.0, %v5899
      %v5901 = vrcp.pop %v5623
      %v5902 = vmul.f32 1.0, %v5901
      %v5903 = vrcp.pop %v5624
      %v5904 = vmul.f32 1.0, %v5903
      %v5905 = vrcp.pop %v5625
      %v5906 = vmul.f32 1.0, %v5905
      %v5907 = vrcp.pop %v5626
      %v5908 = vmul.f32 1.0, %v5907
      %v5909 = vrcp.pop %v5627
      %v5910 = vmul.f32 1.0, %v5909
      %v5911 = vrcp.pop %v5628
      %v5912 = vmul.f32 1.0, %v5911
      %v5913 = vrcp.pop %v5629
      %v5914 = vmul.f32 1.0, %v5913
      %v5915 = vrcp.pop %v5630
      %v5916 = vmul.f32 1.0, %v5915
      %v5917 = vrcp.pop %v5631
      %v5918 = vmul.f32 1.0, %v5917
      %v5919 = vrcp.pop %v5632
      %v5920 = vmul.f32 1.0, %v5919
      %v5921 = vrcp.pop %v5633
      %v5922 = vmul.f32 1.0, %v5921
      %v5923 = vrcp.pop %v5634
      %v5924 = vmul.f32 1.0, %v5923
      %v5925 = vrcp.pop %v5635
      %v5926 = vmul.f32 1.0, %v5925
      %v5927 = vrcp.pop %v5636
      %v5928 = vmul.f32 1.0, %v5927
      %v5929 = vrcp.pop %v5637
      %v5930 = vmul.f32 1.0, %v5929
      %v5931 = vrcp.pop %v5638
      %v5932 = vmul.f32 1.0, %v5931
      %v5933 = vrcp.pop %v5639
      %v5934 = vmul.f32 1.0, %v5933
      %v5935 = vrcp.pop %v5640
      %v5936 = vmul.f32 1.0, %v5935
      %v5937 = vrcp.pop %v5641
      %v5938 = vmul.f32 1.0, %v5937
      %v5939 = vrcp.pop %v5642
      %v5940 = vmul.f32 1.0, %v5939
      %v5941 = vrcp.pop %v5643
      %v5942 = vmul.f32 1.0, %v5941
      %v5943 = vrcp.pop %v5644
      %v5944 = vmul.f32 1.0, %v5943
      %v5945 = vrcp.pop %v5645
      %v5946 = vmul.f32 1.0, %v5945
      %v5947 = vrcp.pop %v5646
      %v5948 = vmul.f32 1.0, %v5947
      %v5949 = vrcp.pop %v5647
      %v5950 = vmul.f32 1.0, %v5949
      %v5951 = vrcp.pop %v5648
      %v5952 = vmul.f32 1.0, %v5951
      %v5953 = vrcp.pop %v5649
      %v5954 = vmul.f32 1.0, %v5953
      %v5955 = vrcp.pop %v5650
      %v5956 = vmul.f32 1.0, %v5955
      %v5957 = vrcp.pop %v5651
      %v5958 = vmul.f32 1.0, %v5957
      %v5959 = vrcp.pop %v5652
      %v5960 = vmul.f32 1.0, %v5959
      %v5961 = vrcp.pop %v5653
      %v5962 = vmul.f32 1.0, %v5961
      %v5963 = vrcp.pop %v5654
      %v5964 = vmul.f32 1.0, %v5963
      %v5965 = vrcp.pop %v5655
      %v5966 = vmul.f32 1.0, %v5965
      %v5967 = vrcp.pop %v5656
      %v5968 = vmul.f32 1.0, %v5967
      %v5969 = vrcp.pop %v5657
      %v5970 = vmul.f32 1.0, %v5969
      %v5971 = vrcp.pop %v5658
      %v5972 = vmul.f32 1.0, %v5971
      %v5973 = vrcp.pop %v5659
      %v5974 = vmul.f32 1.0, %v5973
      %v5975 = vrcp.pop %v5660
      %v5976 = vmul.f32 1.0, %v5975
      %v5977 = vrcp.pop %v5661
      %v5978 = vmul.f32 1.0, %v5977
      %v5979 = vrcp.pop %v5662
      %v5980 = vmul.f32 1.0, %v5979
      %v5981 = vrcp.pop %v5663
      %v5982 = vmul.f32 1.0, %v5981
      %v5983 = vrcp.pop %v5664
      %v5984 = vmul.f32 1.0, %v5983
      %v5985 = vrcp.pop %v5665
      %v5986 = vmul.f32 1.0, %v5985
      %v5987 = vrcp.pop %v5666
      %v5988 = vmul.f32 1.0, %v5987
      %v5989 = vrcp.pop %v5667
      %v5990 = vmul.f32 1.0, %v5989
      %v5991 = vrcp.pop %v5668
      %v5992 = vmul.f32 1.0, %v5991
      %v5993 = vrcp.pop %v5669
      %v5994 = vmul.f32 1.0, %v5993
      %v5995 = vrcp.pop %v5670
      %v5996 = vmul.f32 1.0, %v5995
      %v5997 = vrcp.pop %v5671
      %v5998 = vmul.f32 1.0, %v5997
      %v5999 = vrcp.pop %v5672
      %v6000 = vmul.f32 1.0, %v5999
      %v6001 = vrcp.pop %v5673
      %v6002 = vmul.f32 1.0, %v6001
      %v6003 = vrcp.pop %v5674
      %v6004 = vmul.f32 1.0, %v6003
      %v6005 = vrcp.pop %v5675
      %v6006 = vmul.f32 1.0, %v6005
      %v6007 = vrcp.pop %v5676
      %v6008 = vmul.f32 1.0, %v6007
      %v6009 = vrcp.pop %v5677
      %v6010 = vmul.f32 1.0, %v6009
      %v6011 = vrcp.pop %v5678
      %v6012 = vmul.f32 1.0, %v6011
      %v6013 = vrcp.pop %v5679
      %v6014 = vmul.f32 1.0, %v6013
      %v6015 = vrcp.pop %v5680
      %v6016 = vmul.f32 1.0, %v6015
      %v6017 = vrcp.pop %v5681
      %v6018 = vmul.f32 1.0, %v6017
      %v6019 = vrcp.pop %v5682
      %v6020 = vmul.f32 1.0, %v6019
      %v6021 = vrcp.pop %v5683
      %v6022 = vmul.f32 1.0, %v6021
      %v6023 = vrcp.pop %v5684
      %v6024 = vmul.f32 1.0, %v6023
      %v6025 = vrcp.pop %v5685
      %v6026 = vmul.f32 1.0, %v6025
      %v6027 = vrcp.pop %v5686
      %v6028 = vmul.f32 1.0, %v6027
      %v6029 = vrcp.pop %v5687
      %v6030 = vmul.f32 1.0, %v6029
      %v6031 = vrcp.pop %v5688
      %v6032 = vmul.f32 1.0, %v6031
      %v6033 = vrcp.pop %v5689
      %v6034 = vmul.f32 1.0, %v6033
      %v6035 = vrcp.pop %v5690
      %v6036 = vmul.f32 1.0, %v6035
      %v6037 = vrcp.pop %v5691
      %v6038 = vmul.f32 1.0, %v6037
      %v6039 = vrcp.pop %v5692
      %v6040 = vmul.f32 1.0, %v6039
      %v6041 = vrcp.pop %v5693
      %v6042 = vmul.f32 1.0, %v6041
      %v6043 = vrcp.pop %v5694
      %v6044 = vmul.f32 1.0, %v6043
      %v6045 = vrcp.pop %v5695
      %v6046 = vmul.f32 1.0, %v6045
      %v6047 = vrcp.pop %v5696
      %v6048 = vmul.f32 1.0, %v6047
      %v6049 = vrcp.pop %v5697
      %v6050 = vmul.f32 1.0, %v6049
      %v6051 = vrcp.pop %v5698
      %v6052 = vmul.f32 1.0, %v6051
      %v6053 = vrcp.pop %v5699
      %v6054 = vmul.f32 1.0, %v6053
      %v6055 = vrcp.pop %v5700
      %v6056 = vmul.f32 1.0, %v6055
      %v6057 = vrcp.pop %v5701
      %v6058 = vmul.f32 1.0, %v6057
      %v6059 = vrcp.pop %v5702
      %v6060 = vmul.f32 1.0, %v6059
      %v6061 = vrcp.pop %v5703
      %v6062 = vmul.f32 1.0, %v6061
      %v6063 = vrcp.pop %v5704
      %v6064 = vmul.f32 1.0, %v6063
      %v6065 = vrcp.pop %v5705
      %v6066 = vmul.f32 1.0, %v6065
      %v6067 = vrcp.pop %v5706
      %v6068 = vmul.f32 1.0, %v6067
      %v6069 = vrcp.pop %v5707
      %v6070 = vmul.f32 1.0, %v6069
      %v6071 = vrcp.pop %v5708
      %v6072 = vmul.f32 1.0, %v6071
      %v6073 = vrcp.pop %v5709
      %v6074 = vmul.f32 1.0, %v6073
      %v6075 = vrcp.pop %v5710
      %v6076 = vmul.f32 1.0, %v6075
      %v6077 = vrcp.pop %v5711
      %v6078 = vmul.f32 1.0, %v6077
      %v6079 = vrcp.pop %v5712
      %v6080 = vmul.f32 1.0, %v6079
      %v6081 = vrcp.pop %v5713
      %v6082 = vmul.f32 1.0, %v6081
      %v6083 = vrcp.pop %v5714
      %v6084 = vmul.f32 1.0, %v6083
      %v6085 = vrcp.pop %v5715
      %v6086 = vmul.f32 1.0, %v6085
      %v6087 = vrcp.pop %v5716
      %v6088 = vmul.f32 1.0, %v6087
      %v6089 = vrcp.pop %v5717
      %v6090 = vmul.f32 1.0, %v6089
      %v6091 = vrcp.pop %v5718
      %v6092 = vmul.f32 1.0, %v6091
      %v6093 = vrcp.pop %v5719
      %v6094 = vmul.f32 1.0, %v6093
      %v6095 = vrcp.pop %v5720
      %v6096 = vmul.f32 1.0, %v6095
      %v6097 = vrcp.pop %v5721
      %v6098 = vmul.f32 1.0, %v6097
      %v6099 = vrcp.pop %v5722
      %v6100 = vmul.f32 1.0, %v6099
      %v6101 = vrcp.pop %v5723
      %v6102 = vmul.f32 1.0, %v6101
      %v6103 = vrcp.pop %v5724
      %v6104 = vmul.f32 1.0, %v6103
      %v6105 = vrcp.pop %v5725
      %v6106 = vmul.f32 1.0, %v6105
      %v6107 = vrcp.pop %v5726
      %v6108 = vmul.f32 1.0, %v6107
      %v6109 = vrcp.pop %v5727
      %v6110 = vmul.f32 1.0, %v6109
      %v6111 = vrcp.pop %v5728
      %v6112 = vmul.f32 1.0, %v6111
      %v6113 = vrcp.pop %v5729
      %v6114 = vmul.f32 1.0, %v6113
      %v6115 = vrcp.pop %v5730
      %v6116 = vmul.f32 1.0, %v6115
      %v6117 = vrcp.pop %v5731
      %v6118 = vmul.f32 1.0, %v6117
      %v6119 = vrcp.pop %v5732
      %v6120 = vmul.f32 1.0, %v6119
      %v6121 = vrcp.pop %v5733
      %v6122 = vmul.f32 1.0, %v6121
      %v6123 = vrcp.pop %v5734
      %v6124 = vmul.f32 1.0, %v6123
      %v6125 = vrcp.pop %v5735
      %v6126 = vmul.f32 1.0, %v6125
      %v6127 = vrcp.pop %v5736
      %v6128 = vmul.f32 1.0, %v6127
      %v6129 = vrcp.pop %v5737
      %v6130 = vmul.f32 1.0, %v6129
      %v6131 = vrcp.pop %v5738
      %v6132 = vmul.f32 1.0, %v6131
      %v6133 = vrcp.pop %v5739
      %v6134 = vmul.f32 1.0, %v6133
      %v6135 = vrcp.pop %v5740
      %v6136 = vmul.f32 1.0, %v6135
      %v6137 = vrcp.pop %v5741
      %v6138 = vmul.f32 1.0, %v6137
      %v6139 = vrcp.pop %v5742
      %v6140 = vmul.f32 1.0, %v6139
      %v6141 = vrcp.pop %v5743
      %v6142 = vmul.f32 1.0, %v6141
      %v6143 = vrcp.pop %v5744
      %v6144 = vmul.f32 1.0, %v6143
      %v6145 = vrcp.pop %v5745
      %v6146 = vmul.f32 1.0, %v6145
      %v6147 = vrcp.pop %v5746
      %v6148 = vmul.f32 1.0, %v6147
      %v6149 = vrcp.pop %v5747
      %v6150 = vmul.f32 1.0, %v6149
      %v6151 = vrcp.pop %v5748
      %v6152 = vmul.f32 1.0, %v6151
      %v6153 = vrcp.pop %v5749
      %v6154 = vmul.f32 1.0, %v6153
      %v6155 = vrcp.pop %v5750
      %v6156 = vmul.f32 1.0, %v6155
      %v6157 = vrcp.pop %v5751
      %v6158 = vmul.f32 1.0, %v6157
      %v6159 = vrcp.pop %v5752
      %v6160 = vmul.f32 1.0, %v6159
      %v6161 = vrcp.pop %v5753
      %v6162 = vmul.f32 1.0, %v6161
      %v6163 = vrcp.pop %v5754
      %v6164 = vmul.f32 1.0, %v6163
      %v6165 = vrcp.pop %v5755
      %v6166 = vmul.f32 1.0, %v6165
      %v6167 = vrcp.pop %v5756
      %v6168 = vmul.f32 1.0, %v6167
      %v6169 = vrcp.pop %v5757
      %v6170 = vmul.f32 1.0, %v6169
      %v6171 = vrcp.pop %v5758
      %v6172 = vmul.f32 1.0, %v6171
      %v6173 = vrcp.pop %v5759
      %v6174 = vmul.f32 1.0, %v6173
      %v6175 = vrcp.pop %v5760
      %v6176 = vmul.f32 1.0, %v6175
      %v6177 = vrcp.pop %v5761
      %v6178 = vmul.f32 1.0, %v6177
      %v6179 = vrcp.pop %v5762
      %v6180 = vmul.f32 1.0, %v6179
      %v6181 = vrcp.pop %v5763
      %v6182 = vmul.f32 1.0, %v6181
      %v6183 = vrcp.pop %v5764
      %v6184 = vmul.f32 1.0, %v6183
      %v6185 = vrcp.pop %v5765
      %v6186 = vmul.f32 1.0, %v6185
      %v6187 = vrcp.pop %v5766
      %v6188 = vmul.f32 1.0, %v6187
      %v6189 = vrcp.pop %v5767
      %v6190 = vmul.f32 1.0, %v6189
      %v6191 = vrcp.pop %v5768
      %v6192 = vmul.f32 1.0, %v6191
      %v6193 = vrcp.pop %v5769
      %v6194 = vmul.f32 1.0, %v6193
      %v6195 = vrcp.pop %v5770
      %v6196 = vmul.f32 1.0, %v6195
      %v6197 = vrcp.pop %v5771
      %v6198 = vmul.f32 1.0, %v6197
      %v6199 = vrcp.pop %v5772
      %v6200 = vmul.f32 1.0, %v6199
      %v6201 = vrcp.pop %v5773
      %v6202 = vmul.f32 1.0, %v6201
      %v6203 = vrcp.pop %v5774
      %v6204 = vmul.f32 1.0, %v6203
      %v6205 = vrcp.pop %v5775
      %v6206 = vmul.f32 1.0, %v6205
      %v6207 = vrcp.pop %v5776
      %v6208 = vmul.f32 1.0, %v6207
      %v6209 = vrcp.pop %v5777
      %v6210 = vmul.f32 1.0, %v6209
      %v6211 = vrcp.pop %v5778
      %v6212 = vmul.f32 1.0, %v6211
      %v6213 = vrcp.pop %v5779
      %v6214 = vmul.f32 1.0, %v6213
      %v6215 = vrcp.pop %v5780
      %v6216 = vmul.f32 1.0, %v6215
      %v6217 = vrcp.pop %v5781
      %v6218 = vmul.f32 1.0, %v6217
      %v6219 = vrcp.pop %v5782
      %v6220 = vmul.f32 1.0, %v6219
      %v6221 = vrcp.pop %v5783
      %v6222 = vmul.f32 1.0, %v6221
      %v6223 = vrcp.pop %v5784
      %v6224 = vmul.f32 1.0, %v6223
      %v6225 = vrcp.pop %v5785
      %v6226 = vmul.f32 1.0, %v6225
      %v6227 = vrcp.pop %v5786
      %v6228 = vmul.f32 1.0, %v6227
      %v6229 = vrcp.pop %v5787
      %v6230 = vmul.f32 1.0, %v6229
      %v6231 = vrcp.pop %v5788
      %v6232 = vmul.f32 1.0, %v6231
      %v6233 = vrcp.pop %v5789
      %v6234 = vmul.f32 1.0, %v6233
      %v6235 = vrcp.pop %v5790
      %v6236 = vmul.f32 1.0, %v6235
      %v6237 = vrcp.pop %v5791
      %v6238 = vmul.f32 1.0, %v6237
      %v6239 = vrcp.pop %v5792
      %v6240 = vmul.f32 1.0, %v6239
      %6241 = vst [vmem:[%s596] sm:$0xff] %v5794
      %6242 = vst [vmem:[%s596 + $0x8] sm:$0xff] %v5796
      %6243 = vst [vmem:[%s596 + $0x10] sm:$0xff] %v5798
      %6244 = vst [vmem:[%s596 + $0x18] sm:$0xff] %v5800
      %6245 = vst [vmem:[%s596 + $0x20] sm:$0xff] %v5802
      %6246 = vst [vmem:[%s596 + $0x28] sm:$0xff] %v5804
      %6247 = vst.msk [vmem:[%s596 + $0x30] sm:$0xff] %vm1334, %v5806
      %6248 = vst [vmem:[%s596 + $0x38] sm:$0xff] %v5808
      %6249 = vst [vmem:[%s596 + $0x40] sm:$0xff] %v5810
      %6250 = vst [vmem:[%s596 + $0x48] sm:$0xff] %v5812
      %6251 = vst [vmem:[%s596 + $0x50] sm:$0xff] %v5814
      %6252 = vst [vmem:[%s596 + $0x58] sm:$0xff] %v5816
      %6253 = vst [vmem:[%s596 + $0x60] sm:$0xff] %v5818
      %6254 = vst.msk [vmem:[%s596 + $0x68] sm:$0xff] %vm1334, %v5820
      %6255 = vst [vmem:[%s596 + $0x70] sm:$0xff] %v5822
      %6256 = vst [vmem:[%s596 + $0x78] sm:$0xff] %v5824
      %6257 = vst [vmem:[%s596 + $0x80] sm:$0xff] %v5826
      %6258 = vst [vmem:[%s596 + $0x88] sm:$0xff] %v5828
      %6259 = vst [vmem:[%s596 + $0x90] sm:$0xff] %v5830
      %6260 = vst [vmem:[%s596 + $0x98] sm:$0xff] %v5832
      %6261 = vst.msk [vmem:[%s596 + $0xa0] sm:$0xff] %vm1334, %v5834
      %6262 = vst [vmem:[%s596 + $0xa8] sm:$0xff] %v5836
      %6263 = vst [vmem:[%s596 + $0xb0] sm:$0xff] %v5838
      %6264 = vst [vmem:[%s596 + $0xb8] sm:$0xff] %v5840
      %6265 = vst [vmem:[%s596 + $0xc0] sm:$0xff] %v5842
      %6266 = vst [vmem:[%s596 + $0xc8] sm:$0xff] %v5844
      %6267 = vst [vmem:[%s596 + $0xd0] sm:$0xff] %v5846
      %6268 = vst.msk [vmem:[%s596 + $0xd8] sm:$0xff] %vm1334, %v5848
      %6269 = vst [vmem:[%s596 + $0xe0] sm:$0xff] %v5850
      %6270 = vst [vmem:[%s596 + $0xe8] sm:$0xff] %v5852
      %6271 = vst [vmem:[%s596 + $0xf0] sm:$0xff] %v5854
      %6272 = vst [vmem:[%s596 + $0xf8] sm:$0xff] %v5856
      %6273 = vst [vmem:[%s596 + $0x100] sm:$0xff] %v5858
      %6274 = vst [vmem:[%s596 + $0x108] sm:$0xff] %v5860
      %6275 = vst.msk [vmem:[%s596 + $0x110] sm:$0xff] %vm1334, %v5862
      %6276 = vst [vmem:[%s596 + $0x118] sm:$0xff] %v5864
      %6277 = vst [vmem:[%s596 + $0x120] sm:$0xff] %v5866
      %6278 = vst [vmem:[%s596 + $0x128] sm:$0xff] %v5868
      %6279 = vst [vmem:[%s596 + $0x130] sm:$0xff] %v5870
      %6280 = vst [vmem:[%s596 + $0x138] sm:$0xff] %v5872
      %6281 = vst [vmem:[%s596 + $0x140] sm:$0xff] %v5874
      %6282 = vst.msk [vmem:[%s596 + $0x148] sm:$0xff] %vm1334, %v5876
      %6283 = vst [vmem:[%s596 + $0x150] sm:$0xff] %v5878
      %6284 = vst [vmem:[%s596 + $0x158] sm:$0xff] %v5880
      %6285 = vst [vmem:[%s596 + $0x160] sm:$0xff] %v5882
      %6286 = vst [vmem:[%s596 + $0x168] sm:$0xff] %v5884
      %6287 = vst [vmem:[%s596 + $0x170] sm:$0xff] %v5886
      %6288 = vst [vmem:[%s596 + $0x178] sm:$0xff] %v5888
      %6289 = vst.msk [vmem:[%s596 + $0x180] sm:$0xff] %vm1334, %v5890
      %6290 = vst [vmem:[%s596 + $0x188] sm:$0xff] %v5892
      %6291 = vst [vmem:[%s596 + $0x190] sm:$0xff] %v5894
      %6292 = vst [vmem:[%s596 + $0x198] sm:$0xff] %v5896
      %6293 = vst [vmem:[%s596 + $0x1a0] sm:$0xff] %v5898
      %6294 = vst [vmem:[%s596 + $0x1a8] sm:$0xff] %v5900
      %6295 = vst [vmem:[%s596 + $0x1b0] sm:$0xff] %v5902
      %6296 = vst.msk [vmem:[%s596 + $0x1b8] sm:$0xff] %vm1334, %v5904
      %6297 = vst [vmem:[%s596 + $0x1c0] sm:$0xff] %v5906
      %6298 = vst [vmem:[%s596 + $0x1c8] sm:$0xff] %v5908
      %6299 = vst [vmem:[%s596 + $0x1d0] sm:$0xff] %v5910
      %6300 = vst [vmem:[%s596 + $0x1d8] sm:$0xff] %v5912
      %6301 = vst [vmem:[%s596 + $0x1e0] sm:$0xff] %v5914
      %6302 = vst [vmem:[%s596 + $0x1e8] sm:$0xff] %v5916
      %6303 = vst.msk [vmem:[%s596 + $0x1f0] sm:$0xff] %vm1334, %v5918
      %6304 = vst [vmem:[%s596 + $0x1f8] sm:$0xff] %v5920
      %6305 = vst [vmem:[%s596 + $0x200] sm:$0xff] %v5922
      %6306 = vst [vmem:[%s596 + $0x208] sm:$0xff] %v5924
      %6307 = vst [vmem:[%s596 + $0x210] sm:$0xff] %v5926
      %6308 = vst [vmem:[%s596 + $0x218] sm:$0xff] %v5928
      %6309 = vst [vmem:[%s596 + $0x220] sm:$0xff] %v5930
      %6310 = vst.msk [vmem:[%s596 + $0x228] sm:$0xff] %vm1334, %v5932
      %6311 = vst [vmem:[%s596 + $0x230] sm:$0xff] %v5934
      %6312 = vst [vmem:[%s596 + $0x238] sm:$0xff] %v5936
      %6313 = vst [vmem:[%s596 + $0x240] sm:$0xff] %v5938
      %6314 = vst [vmem:[%s596 + $0x248] sm:$0xff] %v5940
      %6315 = vst [vmem:[%s596 + $0x250] sm:$0xff] %v5942
      %6316 = vst [vmem:[%s596 + $0x258] sm:$0xff] %v5944
      %6317 = vst.msk [vmem:[%s596 + $0x260] sm:$0xff] %vm1334, %v5946
      %6318 = vst [vmem:[%s596 + $0x268] sm:$0xff] %v5948
      %6319 = vst [vmem:[%s596 + $0x270] sm:$0xff] %v5950
      %6320 = vst [vmem:[%s596 + $0x278] sm:$0xff] %v5952
      %6321 = vst [vmem:[%s596 + $0x280] sm:$0xff] %v5954
      %6322 = vst [vmem:[%s596 + $0x288] sm:$0xff] %v5956
      %6323 = vst [vmem:[%s596 + $0x290] sm:$0xff] %v5958
      %6324 = vst.msk [vmem:[%s596 + $0x298] sm:$0xff] %vm1334, %v5960
      %6325 = vst [vmem:[%s596 + $0x2a0] sm:$0xff] %v5962
      %6326 = vst [vmem:[%s596 + $0x2a8] sm:$0xff] %v5964
      %6327 = vst [vmem:[%s596 + $0x2b0] sm:$0xff] %v5966
      %6328 = vst [vmem:[%s596 + $0x2b8] sm:$0xff] %v5968
      %6329 = vst [vmem:[%s596 + $0x2c0] sm:$0xff] %v5970
      %6330 = vst [vmem:[%s596 + $0x2c8] sm:$0xff] %v5972
      %6331 = vst.msk [vmem:[%s596 + $0x2d0] sm:$0xff] %vm1334, %v5974
      %6332 = vst [vmem:[%s596 + $0x2d8] sm:$0xff] %v5976
      %6333 = vst [vmem:[%s596 + $0x2e0] sm:$0xff] %v5978
      %6334 = vst [vmem:[%s596 + $0x2e8] sm:$0xff] %v5980
      %6335 = vst [vmem:[%s596 + $0x2f0] sm:$0xff] %v5982
      %6336 = vst [vmem:[%s596 + $0x2f8] sm:$0xff] %v5984
      %6337 = vst [vmem:[%s596 + $0x300] sm:$0xff] %v5986
      %6338 = vst.msk [vmem:[%s596 + $0x308] sm:$0xff] %vm1334, %v5988
      %6339 = vst [vmem:[%s596 + $0x310] sm:$0xff] %v5990
      %6340 = vst [vmem:[%s596 + $0x318] sm:$0xff] %v5992
      %6341 = vst [vmem:[%s596 + $0x320] sm:$0xff] %v5994
      %6342 = vst [vmem:[%s596 + $0x328] sm:$0xff] %v5996
      %6343 = vst [vmem:[%s596 + $0x330] sm:$0xff] %v5998
      %6344 = vst [vmem:[%s596 + $0x338] sm:$0xff] %v6000
      %6345 = vst.msk [vmem:[%s596 + $0x340] sm:$0xff] %vm1334, %v6002
      %6346 = vst [vmem:[%s596 + $0x348] sm:$0xff] %v6004
      %6347 = vst [vmem:[%s596 + $0x350] sm:$0xff] %v6006
      %6348 = vst [vmem:[%s596 + $0x358] sm:$0xff] %v6008
      %6349 = vst [vmem:[%s596 + $0x360] sm:$0xff] %v6010
      %6350 = vst [vmem:[%s596 + $0x368] sm:$0xff] %v6012
      %6351 = vst [vmem:[%s596 + $0x370] sm:$0xff] %v6014
      %6352 = vst.msk [vmem:[%s596 + $0x378] sm:$0xff] %vm1334, %v6016
      %6353 = vst [vmem:[%s596 + $0x380] sm:$0xff] %v6018
      %6354 = vst [vmem:[%s596 + $0x388] sm:$0xff] %v6020
      %6355 = vst [vmem:[%s596 + $0x390] sm:$0xff] %v6022
      %6356 = vst [vmem:[%s596 + $0x398] sm:$0xff] %v6024
      %6357 = vst [vmem:[%s596 + $0x3a0] sm:$0xff] %v6026
      %6358 = vst [vmem:[%s596 + $0x3a8] sm:$0xff] %v6028
      %6359 = vst.msk [vmem:[%s596 + $0x3b0] sm:$0xff] %vm1334, %v6030
      %6360 = vst [vmem:[%s596 + $0x3b8] sm:$0xff] %v6032
      %6361 = vst [vmem:[%s596 + $0x3c0] sm:$0xff] %v6034
      %6362 = vst [vmem:[%s596 + $0x3c8] sm:$0xff] %v6036
      %6363 = vst [vmem:[%s596 + $0x3d0] sm:$0xff] %v6038
      %6364 = vst [vmem:[%s596 + $0x3d8] sm:$0xff] %v6040
      %6365 = vst [vmem:[%s596 + $0x3e0] sm:$0xff] %v6042
      %6366 = vst.msk [vmem:[%s596 + $0x3e8] sm:$0xff] %vm1334, %v6044
      %6367 = vst [vmem:[%s596 + $0x3f0] sm:$0xff] %v6046
      %6368 = vst [vmem:[%s596 + $0x3f8] sm:$0xff] %v6048
      %6369 = vst [vmem:[%s596 + $0x400] sm:$0xff] %v6050
      %6370 = vst [vmem:[%s596 + $0x408] sm:$0xff] %v6052
      %6371 = vst [vmem:[%s596 + $0x410] sm:$0xff] %v6054
      %6372 = vst [vmem:[%s596 + $0x418] sm:$0xff] %v6056
      %6373 = vst.msk [vmem:[%s596 + $0x420] sm:$0xff] %vm1334, %v6058
      %6374 = vst [vmem:[%s596 + $0x428] sm:$0xff] %v6060
      %6375 = vst [vmem:[%s596 + $0x430] sm:$0xff] %v6062
      %6376 = vst [vmem:[%s596 + $0x438] sm:$0xff] %v6064
      %6377 = vst [vmem:[%s596 + $0x440] sm:$0xff] %v6066
      %6378 = vst [vmem:[%s596 + $0x448] sm:$0xff] %v6068
      %6379 = vst [vmem:[%s596 + $0x450] sm:$0xff] %v6070
      %6380 = vst.msk [vmem:[%s596 + $0x458] sm:$0xff] %vm1334, %v6072
      %6381 = vst [vmem:[%s596 + $0x460] sm:$0xff] %v6074
      %6382 = vst [vmem:[%s596 + $0x468] sm:$0xff] %v6076
      %6383 = vst [vmem:[%s596 + $0x470] sm:$0xff] %v6078
      %6384 = vst [vmem:[%s596 + $0x478] sm:$0xff] %v6080
      %6385 = vst [vmem:[%s596 + $0x480] sm:$0xff] %v6082
      %6386 = vst [vmem:[%s596 + $0x488] sm:$0xff] %v6084
      %6387 = vst.msk [vmem:[%s596 + $0x490] sm:$0xff] %vm1334, %v6086
      %6388 = vst [vmem:[%s596 + $0x498] sm:$0xff] %v6088
      %6389 = vst [vmem:[%s596 + $0x4a0] sm:$0xff] %v6090
      %6390 = vst [vmem:[%s596 + $0x4a8] sm:$0xff] %v6092
      %6391 = vst [vmem:[%s596 + $0x4b0] sm:$0xff] %v6094
      %6392 = vst [vmem:[%s596 + $0x4b8] sm:$0xff] %v6096
      %6393 = vst [vmem:[%s596 + $0x4c0] sm:$0xff] %v6098
      %6394 = vst.msk [vmem:[%s596 + $0x4c8] sm:$0xff] %vm1334, %v6100
      %6395 = vst [vmem:[%s596 + $0x4d0] sm:$0xff] %v6102
      %6396 = vst [vmem:[%s596 + $0x4d8] sm:$0xff] %v6104
      %6397 = vst [vmem:[%s596 + $0x4e0] sm:$0xff] %v6106
      %6398 = vst [vmem:[%s596 + $0x4e8] sm:$0xff] %v6108
      %6399 = vst [vmem:[%s596 + $0x4f0] sm:$0xff] %v6110
      %6400 = vst [vmem:[%s596 + $0x4f8] sm:$0xff] %v6112
      %6401 = vst.msk [vmem:[%s596 + $0x500] sm:$0xff] %vm1334, %v6114
      %6402 = vst [vmem:[%s596 + $0x508] sm:$0xff] %v6116
      %6403 = vst [vmem:[%s596 + $0x510] sm:$0xff] %v6118
      %6404 = vst [vmem:[%s596 + $0x518] sm:$0xff] %v6120
      %6405 = vst [vmem:[%s596 + $0x520] sm:$0xff] %v6122
      %6406 = vst [vmem:[%s596 + $0x528] sm:$0xff] %v6124
      %6407 = vst [vmem:[%s596 + $0x530] sm:$0xff] %v6126
      %6408 = vst.msk [vmem:[%s596 + $0x538] sm:$0xff] %vm1334, %v6128
      %6409 = vst [vmem:[%s596 + $0x540] sm:$0xff] %v6130
      %6410 = vst [vmem:[%s596 + $0x548] sm:$0xff] %v6132
      %6411 = vst [vmem:[%s596 + $0x550] sm:$0xff] %v6134
      %6412 = vst [vmem:[%s596 + $0x558] sm:$0xff] %v6136
      %6413 = vst [vmem:[%s596 + $0x560] sm:$0xff] %v6138
      %6414 = vst [vmem:[%s596 + $0x568] sm:$0xff] %v6140
      %6415 = vst.msk [vmem:[%s596 + $0x570] sm:$0xff] %vm1334, %v6142
      %6416 = vst [vmem:[%s596 + $0x578] sm:$0xff] %v6144
      %6417 = vst [vmem:[%s596 + $0x580] sm:$0xff] %v6146
      %6418 = vst [vmem:[%s596 + $0x588] sm:$0xff] %v6148
      %6419 = vst [vmem:[%s596 + $0x590] sm:$0xff] %v6150
      %6420 = vst [vmem:[%s596 + $0x598] sm:$0xff] %v6152
      %6421 = vst [vmem:[%s596 + $0x5a0] sm:$0xff] %v6154
      %6422 = vst.msk [vmem:[%s596 + $0x5a8] sm:$0xff] %vm1334, %v6156
      %6423 = vst [vmem:[%s596 + $0x5b0] sm:$0xff] %v6158
      %6424 = vst [vmem:[%s596 + $0x5b8] sm:$0xff] %v6160
      %6425 = vst [vmem:[%s596 + $0x5c0] sm:$0xff] %v6162
      %6426 = vst [vmem:[%s596 + $0x5c8] sm:$0xff] %v6164
      %6427 = vst [vmem:[%s596 + $0x5d0] sm:$0xff] %v6166
      %6428 = vst [vmem:[%s596 + $0x5d8] sm:$0xff] %v6168
      %6429 = vst.msk [vmem:[%s596 + $0x5e0] sm:$0xff] %vm1334, %v6170
      %6430 = vst [vmem:[%s596 + $0x5e8] sm:$0xff] %v6172
      %6431 = vst [vmem:[%s596 + $0x5f0] sm:$0xff] %v6174
      %6432 = vst [vmem:[%s596 + $0x5f8] sm:$0xff] %v6176
      %6433 = vst [vmem:[%s596 + $0x600] sm:$0xff] %v6178
      %6434 = vst [vmem:[%s596 + $0x608] sm:$0xff] %v6180
      %6435 = vst [vmem:[%s596 + $0x610] sm:$0xff] %v6182
      %6436 = vst.msk [vmem:[%s596 + $0x618] sm:$0xff] %vm1334, %v6184
      %6437 = vst [vmem:[%s596 + $0x620] sm:$0xff] %v6186
      %6438 = vst [vmem:[%s596 + $0x628] sm:$0xff] %v6188
      %6439 = vst [vmem:[%s596 + $0x630] sm:$0xff] %v6190
      %6440 = vst [vmem:[%s596 + $0x638] sm:$0xff] %v6192
      %6441 = vst [vmem:[%s596 + $0x640] sm:$0xff] %v6194
      %6442 = vst [vmem:[%s596 + $0x648] sm:$0xff] %v6196
      %6443 = vst.msk [vmem:[%s596 + $0x650] sm:$0xff] %vm1334, %v6198
      %6444 = vst [vmem:[%s596 + $0x658] sm:$0xff] %v6200
      %6445 = vst [vmem:[%s596 + $0x660] sm:$0xff] %v6202
      %6446 = vst [vmem:[%s596 + $0x668] sm:$0xff] %v6204
      %6447 = vst [vmem:[%s596 + $0x670] sm:$0xff] %v6206
      %6448 = vst [vmem:[%s596 + $0x678] sm:$0xff] %v6208
      %6449 = vst [vmem:[%s596 + $0x680] sm:$0xff] %v6210
      %6450 = vst.msk [vmem:[%s596 + $0x688] sm:$0xff] %vm1334, %v6212
      %6451 = vst [vmem:[%s596 + $0x690] sm:$0xff] %v6214
      %6452 = vst [vmem:[%s596 + $0x698] sm:$0xff] %v6216
      %6453 = vst [vmem:[%s596 + $0x6a0] sm:$0xff] %v6218
      %6454 = vst [vmem:[%s596 + $0x6a8] sm:$0xff] %v6220
      %6455 = vst [vmem:[%s596 + $0x6b0] sm:$0xff] %v6222
      %6456 = vst [vmem:[%s596 + $0x6b8] sm:$0xff] %v6224
      %6457 = vst.msk [vmem:[%s596 + $0x6c0] sm:$0xff] %vm1334, %v6226
      %6458 = vst [vmem:[%s596 + $0x6c8] sm:$0xff] %v6228
      %6459 = vst [vmem:[%s596 + $0x6d0] sm:$0xff] %v6230
      %6460 = vst [vmem:[%s596 + $0x6d8] sm:$0xff] %v6232
      %6461 = vst [vmem:[%s596 + $0x6e0] sm:$0xff] %v6234
      %6462 = vst [vmem:[%s596 + $0x6e8] sm:$0xff] %v6236
      %6463 = vst [vmem:[%s596 + $0x6f0] sm:$0xff] %v6238
      %6464 = vst.msk [vmem:[%s596 + $0x6f8] sm:$0xff] %vm1334, %v6240
      %s6465 = smul.u32 32, %s30
      %p6466 = scmp.lt.s32.totalorder %s6465, 63
      %s6467 = scalar_select %p6466, %s6465, 63
      %s6468 = smul.addr %s6467, 8
      %s6469 = scalar_lea.vmem %s17, %s6468
      %s6470 = smul.u32 32, %s30
      %p6471 = scmp.lt.s32.totalorder %s6470, 63
      %s6472 = scalar_select %p6471, %s6470, 63
      %s6473 = smul.addr %s6472, 7
      %s6474 = smul.addr %s6473, 8
      %s6475 = scalar_lea.vmem %s18, %s6474
      // Predicated region
      $region89: #{autoencoder_forward.1} parent=87 // pred_check
        %p6476 = pneg %p410
      $region90: #{autoencoder_forward.1} parent=87 // pred_check_branch
        %6478 = sbr.rel (%p6476) target = $region92
      $region91: #{autoencoder_forward.1} parent=87 // pred_region
        %s6479 = smul.u32 32, %s30
      $region92: #{autoencoder_forward.1} parent=87 // pred_fallthru
        _
      // Predicated region
      $region93: #{autoencoder_forward.1} parent=87 // pred_check
        %p6480 = pneg %p436
      $region94: #{autoencoder_forward.1} parent=87 // pred_check_branch
        %6482 = sbr.rel (%p6480) target = $region96
      $region95: #{autoencoder_forward.1} parent=87 // pred_region
        %s6483 = smul.u32 32, %s30
      $region96: #{autoencoder_forward.1} parent=87 // pred_fallthru
        _
    $region88: #{autoencoder_forward.1} parent=5 // pred_fallthru
      _
    %p6484 = scmp.le.s32.totalorder 2, %s25
    // Predicated region
    $region97: #{autoencoder_forward.1} parent=5 // pred_check
      %p6485 = pneg %p6484
    $region98: #{autoencoder_forward.1} parent=5 // pred_check_branch
      %6487 = sbr.rel (%p6485) target = $region100
    $region99: #{autoencoder_forward.1} parent=5 // pred_region
      %s6488 = ssub.s32 %s25, 2
      // Predicated region
      $region101: #{autoencoder_forward.1} parent=99 // pred_check
        %p6489 = pneg %p416
      $region102: #{autoencoder_forward.1} parent=99 // pred_check_branch
        %6491 = sbr.rel (%p6489) target = $region104
      $region103: #{autoencoder_forward.1} parent=99 // pred_region
        %s6492 = smul.u32 32, %s31
        %p6493 = scmp.lt.s32.totalorder %s6492, 63
        %s6494 = scalar_select %p6493, %s6492, 63
        %s6495 = smul.addr %s6494, 8
        %s6496 = scalar_lea.vmem %s17, %s6495
      $region104: #{autoencoder_forward.1} parent=99 // pred_fallthru
        _
      // Predicated region
      $region105: #{autoencoder_forward.1} parent=99 // pred_check
        %p6497 = pneg %p442
      $region106: #{autoencoder_forward.1} parent=99 // pred_check_branch
        %6499 = sbr.rel (%p6497) target = $region108
      $region107: #{autoencoder_forward.1} parent=99 // pred_region
        %s6500 = smul.u32 32, %s31
        %p6501 = scmp.lt.s32.totalorder %s6500, 63
        %s6502 = scalar_select %p6501, %s6500, 63
        %s6503 = smul.addr %s6502, 7
        %s6504 = smul.addr %s6503, 8
        %s6505 = scalar_lea.vmem %s18, %s6504
      $region108: #{autoencoder_forward.1} parent=99 // pred_fallthru
        _
    $region100: #{autoencoder_forward.1} parent=5 // pred_fallthru
      _
  $region6: #{autoencoder_forward.1} parent=0 // loop_footer
    %s29 = sadd.s32 1, %s25
  $region7: #{autoencoder_forward.1} parent=0 // loop_footer_branch
    %24 = sbr.rel target = $region3
  $region8: #{autoencoder_forward.1} parent=0 // loop_exit
    _

</llo_original>
